<compile_context>
chip_gen: v6e
topology: v6e:2x2x1
jax: 0.10.0
libtpu: 0.0.40
codegen_flags: <defaults>
</compile_context>

<pallas_src>
import functools

import jax
import jax.numpy as jnp
from jax import lax
from jax.experimental import pallas as pl
from jax.experimental.pallas import tpu as pltpu

_BN_EPS = 1e-5
_LANE = 128


def _mosaic_params(*dim_semantics):
    return pltpu.CompilerParams(dimension_semantics=dim_semantics)


# ---------------------------------------------------------------------------
# Kernels
# ---------------------------------------------------------------------------
def _write_stats2(st_ref, y):
    """Per-channel (sum, sum-of-squares). Only rows 0:2 are read downstream."""
    st_ref[0:1, :] = jnp.sum(y, axis=0, keepdims=True)
    st_ref[1:2, :] = jnp.sum(y * y, axis=0, keepdims=True)


def _conv1_kernel(x_ref, w_ref, ypre_ref, st_ref):
    """1x1 conv as a matmul over one M tile; emits pre-BN output + stats."""
    y = jnp.dot(x_ref[...], w_ref[...], preferred_element_type=jnp.float32)
    ypre_ref[...] = y.astype(ypre_ref.dtype)
    _write_stats2(st_ref, y)


def _conv2_kernel(stride, padding, ho, wo,
                  y1_ref, ss1_ref, w2_ref, y2pre_ref, st_ref, img_ref, col_ref):
    """Fused BN1+ReLU + 3x3/stride conv for one batch image.

    y1_ref : (H, W, C) bf16 pre-BN conv1 output for this image.
    img_ref: (H+2p, W+2p, C) f32 scratch = zero-padded relu(bn1(y1)).
    col_ref: (Ho*Wo, 9*C) f32 scratch = im2col matrix built in VMEM.
    """
    h, w, c = y1_ref.shape

    # Zero-padded border: padded positions must stay exactly 0 after BN+ReLU.
    if padding > 0:
        img_ref[...] = jnp.zeros_like(img_ref)

    y1 = y1_ref[...].astype(jnp.float32)
    y1 = jnp.maximum(y1 * ss1_ref[0:1, :] + ss1_ref[1:2, :], 0.0)
    img_ref[padding:padding + h, padding:padding + w, :] = y1

    def _gather_row(oh, carry):
        for kh in range(3):
            for kw in range(3):
                t = kh * 3 + kw
                if stride == 1:
                    win = img_ref[kh + oh, pl.ds(kw, wo), :]
                else:
                    win = img_ref[kh + oh * stride,
                                  pl.ds(kw, wo, stride=stride), :]
                col_ref[pl.ds(oh * wo, wo), t * c:(t + 1) * c] = win
        return carry

    lax.fori_loop(0, ho, _gather_row, 0)

    y2 = jnp.dot(col_ref[...].astype(jnp.bfloat16), w2_ref[...],
                 preferred_element_type=jnp.float32)
    y2pre_ref[...] = y2.astype(y2pre_ref.dtype)
    _write_stats2(st_ref, y2)


def _tail_stats_kernel(y2pre_ref, ss2_ref, xs_ref, w3_ref, wid_ref,
                       st3_ref, stid_ref):
    """Per batch image: BN2+ReLU in-register, conv3 + identity 1x1 matmuls,
    emit only their batch-norm statistics (no activation writeback)."""
    y2 = jnp.maximum(y2pre_ref[...].astype(jnp.float32) * ss2_ref[0:1, :]
                     + ss2_ref[1:2, :], 0.0)
    a3 = jnp.dot(y2.astype(jnp.bfloat16), w3_ref[...],
                 preferred_element_type=jnp.float32)
    aid = jnp.dot(xs_ref[...], wid_ref[...], preferred_element_type=jnp.float32)
    _write_stats2(st3_ref, a3)
    _write_stats2(stid_ref, aid)


def _tail_final_kernel(y2pre_ref, ss2_ref, xs_ref, w3_ref, wid_ref,
                       ss3_ref, ssid_ref, o_ref):
    """Recompute the cheap 1x1 matmuls, apply BN3/BNid + ReLU, residual add."""
    y2 = jnp.maximum(y2pre_ref[...].astype(jnp.float32) * ss2_ref[0:1, :]
                     + ss2_ref[1:2, :], 0.0)
    a3 = jnp.dot(y2.astype(jnp.bfloat16), w3_ref[...],
                 preferred_element_type=jnp.float32)
    aid = jnp.dot(xs_ref[...], wid_ref[...], preferred_element_type=jnp.float32)
    o = (jnp.maximum(a3 * ss3_ref[0:1, :] + ss3_ref[1:2, :], 0.0)
         + jnp.maximum(aid * ssid_ref[0:1, :] + ssid_ref[1:2, :], 0.0))
    o_ref[...] = o.astype(o_ref.dtype)


# ---------------------------------------------------------------------------
# pallas_call wrappers (tiling / grids)
# ---------------------------------------------------------------------------
def _conv1(x2d, w, tm):
    m, k = x2d.shape
    c = w.shape[1]
    nmt = m // tm
    return pl.pallas_call(
        _conv1_kernel,
        out_shape=(jax.ShapeDtypeStruct((m, c), jnp.bfloat16),
                   jax.ShapeDtypeStruct((nmt, 8, c), jnp.float32)),
        grid_spec=pltpu.PrefetchScalarGridSpec(
            num_scalar_prefetch=0,
            grid=(nmt,),
            in_specs=[pl.BlockSpec((tm, k), lambda i: (i, 0)),
                      pl.BlockSpec((k, c), lambda i: (0, 0))],     # resident
            out_specs=(pl.BlockSpec((tm, c), lambda i: (i, 0)),
                       pl.BlockSpec((None, 8, c), lambda i: (i, 0, 0))),
        ),
        compiler_params=_mosaic_params("parallel"),
    )(x2d, w)


def _conv2(y1img, ss1, w2, stride, padding, ho, wo):
    n, h, w, c = y1img.shape
    hp, wp = h + 2 * padding, w + 2 * padding
    kernel = functools.partial(_conv2_kernel, stride, padding, ho, wo)
    return pl.pallas_call(
        kernel,
        out_shape=(jax.ShapeDtypeStruct((n, ho * wo, c), jnp.bfloat16),
                   jax.ShapeDtypeStruct((n, 8, c), jnp.float32)),
        grid_spec=pltpu.PrefetchScalarGridSpec(
            num_scalar_prefetch=0,
            grid=(n,),
            in_specs=[pl.BlockSpec((None, h, w, c), lambda i: (i, 0, 0, 0)),
                      pl.BlockSpec((2, c), lambda i: (0, 0)),
                      pl.BlockSpec(w2.shape, lambda i: (0, 0))],   # resident
            out_specs=(pl.BlockSpec((None, ho * wo, c), lambda i: (i, 0, 0)),
                       pl.BlockSpec((None, 8, c), lambda i: (i, 0, 0))),
            scratch_shapes=[pltpu.VMEM((hp, wp, c), jnp.float32),
                            pltpu.VMEM((ho * wo, 9 * c), jnp.float32)],
        ),
        compiler_params=_mosaic_params("parallel"),
    )(y1img, ss1, w2)


def _tail_stats(y2pre, ss2, xs, w3, wid):
    n, m2b, c2 = y2pre.shape
    cin = xs.shape[-1]
    c3 = w3.shape[1]
    return pl.pallas_call(
        _tail_stats_kernel,
        out_shape=(jax.ShapeDtypeStruct((n, 8, c3), jnp.float32),
                   jax.ShapeDtypeStruct((n, 8, c3), jnp.float32)),
        grid_spec=pltpu.PrefetchScalarGridSpec(
            num_scalar_prefetch=0,
            grid=(n,),
            in_specs=[pl.BlockSpec((None, m2b, c2), lambda i: (i, 0, 0)),
                      pl.BlockSpec((2, c2), lambda i: (0, 0)),
                      pl.BlockSpec((None, m2b, cin), lambda i: (i, 0, 0)),
                      pl.BlockSpec((c2, c3), lambda i: (0, 0)),
                      pl.BlockSpec((cin, c3), lambda i: (0, 0))],
            out_specs=(pl.BlockSpec((None, 8, c3), lambda i: (i, 0, 0)),
                       pl.BlockSpec((None, 8, c3), lambda i: (i, 0, 0))),
        ),
        compiler_params=_mosaic_params("parallel"),
    )(y2pre, ss2, xs, w3, wid)


def _tail_final(y2pre, ss2, xs, w3, wid, ss3, ssid):
    n, m2b, c2 = y2pre.shape
    cin = xs.shape[-1]
    c3 = w3.shape[1]
    return pl.pallas_call(
        _tail_final_kernel,
        out_shape=jax.ShapeDtypeStruct((n, m2b, c3), jnp.float32),
        grid_spec=pltpu.PrefetchScalarGridSpec(
            num_scalar_prefetch=0,
            grid=(n,),
            in_specs=[pl.BlockSpec((None, m2b, c2), lambda i: (i, 0, 0)),
                      pl.BlockSpec((2, c2), lambda i: (0, 0)),
                      pl.BlockSpec((None, m2b, cin), lambda i: (i, 0, 0)),
                      pl.BlockSpec((c2, c3), lambda i: (0, 0)),
                      pl.BlockSpec((cin, c3), lambda i: (0, 0)),
                      pl.BlockSpec((2, c3), lambda i: (0, 0)),
                      pl.BlockSpec((2, c3), lambda i: (0, 0))],
            out_specs=pl.BlockSpec((None, m2b, c3), lambda i: (i, 0, 0)),
        ),
        compiler_params=_mosaic_params("parallel"),
    )(y2pre, ss2, xs, w3, wid, ss3, ssid)


# ---------------------------------------------------------------------------
# JAX glue: lane padding, weight reshaping, BN scale/shift folding
# ---------------------------------------------------------------------------
def _pad_lanes(a, axis):
    pad = (-a.shape[axis]) % _LANE
    if pad == 0:
        return a
    widths = [(0, 0)] * a.ndim
    widths[axis] = (0, pad)
    return jnp.pad(a, widths)


def _pad128(n):
    return n + (-n) % _LANE


def _conv1x1_w(w_oihw):
    """(Cout, Cin, 1, 1) -> (Cin_p, Cout_p) bf16."""
    w = jnp.transpose(w_oihw[:, :, 0, 0], (1, 0))
    return _pad_lanes(_pad_lanes(w, 0), 1).astype(jnp.bfloat16)


def _conv3x3_w_im2col(w_oihw):
    """(Cout, Cin, 3, 3) -> (9*Cin_p, Cout_p) bf16, (kh, kw, cin)-major rows."""
    cout, cin = w_oihw.shape[:2]
    w = jnp.transpose(w_oihw, (2, 3, 1, 0))          # (3, 3, Cin, Cout)
    w = _pad_lanes(_pad_lanes(w, 2), 3)              # (3, 3, Cin_p, Cout_p)
    return w.reshape(9 * _pad128(cin), _pad128(cout)).astype(jnp.bfloat16)


def _bn_scale_shift(stats, m_rows, gamma, beta):
    """(T, 8, C) partial sums -> (2, C) per-channel [scale; shift]."""
    s = stats[:, :2, :].sum(axis=0)                   # (2, Cpad)
    mean = s[0] / m_rows
    var = jnp.maximum(s[1] / m_rows - mean * mean, 0.0)
    scale = _pad_lanes(gamma.astype(jnp.float32), 0) * lax.rsqrt(var + _BN_EPS)
    shift = _pad_lanes(beta.astype(jnp.float32), 0) - mean * scale
    return jnp.stack([scale, shift], axis=0).astype(jnp.float32)


def _tile_rows(m, cap=512):
    """Fixed tile of `cap` rows (pad M up); single padded tile if M < cap."""
    if m >= cap:
        return cap, ((m + cap - 1) // cap) * cap
    mp = ((m + 7) // 8) * 8
    return mp, mp


@functools.partial(jax.jit, static_argnames=("stride", "padding"))
def bottleneck_block_forward(x_nchw, params, stride, padding):
    """Pallas implementation of BottleneckBlock.forward. Input/output NCHW."""
    x = jnp.transpose(x_nchw, (0, 2, 3, 1)).astype(jnp.float32)   # NHWC
    n, h, w, cin = x.shape
    p1, p2, p3, pid = (params["conv1"], params["conv2"],
                       params["conv3"], params["conv_id"])
    cmid = p1["w"].shape[0]
    cout = p3["w"].shape[0]
    cmid_p = _pad128(cmid)

    # NOTE: conv biases (p*["b"]) are intentionally unused: a per-channel bias
    # cancels exactly under training-mode (batch-statistics) BatchNorm.

    # Pad/cast x once; reused by conv1 and the identity branch.
    xp = _pad_lanes(x, 3).astype(jnp.bfloat16)                    # (N,H,W,Cin_p)

    # ---- CnnBlock 1: 1x1 conv (tiled matmul) + batch stats ------------------
    m1 = n * h * w
    tm1, m1p = _tile_rows(m1)
    x1 = xp.reshape(m1, -1)
    if m1p != m1:
        x1 = jnp.pad(x1, ((0, m1p - m1), (0, 0)))   # zero rows: stats stay exact
    y1pre, st1 = _conv1(x1, _conv1x1_w(p1["w"]), tm1)
    ss1 = _bn_scale_shift(st1, m1, p1["gamma"], p1["beta"])

    # ---- CnnBlock 2: fused BN1+ReLU + 3x3/stride conv, per batch image ------
    ho = (h + 2 * padding - 3) // stride + 1
    wo = (w + 2 * padding - 3) // stride + 1
    y1img = y1pre[:m1].reshape(n, h, w, cmid_p)
    y2pre, st2 = _conv2(y1img, ss1, _conv3x3_w_im2col(p2["w"]),
                        stride, padding, ho, wo)
    m2 = n * ho * wo
    ss2 = _bn_scale_shift(st2, m2, p2["gamma"], p2["beta"])

    # ---- CnnBlock 3 + identity branch: two passes, 1x1 matmuls recomputed ---
    # TODO(synk): the identity-branch stride subsample is still an XLA slice;
    #             it could be folded into the kernel's index_map instead.
    xs = xp[:, ::stride, ::stride, :]
    assert xs.shape[1] == ho and xs.shape[2] == wo
    xs = xs.reshape(n, ho * wo, -1)
    w3 = _conv1x1_w(p3["w"])
    wid = _conv1x1_w(pid["w"])
    st3, stid = _tail_stats(y2pre, ss2, xs, w3, wid)
    ss3 = _bn_scale_shift(st3, m2, p3["gamma"], p3["beta"])
    ssid = _bn_scale_shift(stid, m2, pid["gamma"], pid["beta"])
    out3 = _tail_final(y2pre, ss2, xs, w3, wid, ss3, ssid)        # (N,Ho*Wo,Cout_p)

    out = out3[:, :, :cout].reshape(n, ho, wo, cout)
    return jnp.transpose(out, (0, 3, 1, 2))                       # NCHW


# ---------------------------------------------------------------------------
# Pure-JAX reference (lax.conv + training-mode BN + ReLU), for validation
# ---------------------------------------------------------------------------
def _ref_cnn_block(x_nchw, p, stride, padding):
    y = lax.conv_general_dilated(
        x_nchw, p["w"], window_strides=(stride, stride),
        padding=[(padding, padding), (padding, padding)],
        dimension_numbers=("NCHW", "OIHW", "NCHW"),
        precision=jax.lax.Precision.HIGHEST)
    y = y + p["b"][None, :, None, None]
    mean = y.mean(axis=(0, 2, 3), keepdims=True)
    var = ((y - mean) ** 2).mean(axis=(0, 2, 3), keepdims=True)
    yn = (y - mean) * jax.lax.rsqrt(var + _BN_EPS)
    return jnp.maximum(yn * p["gamma"][None, :, None, None]
                       + p["beta"][None, :, None, None], 0.0)


def _ref_forward(x_nchw, params, stride, padding):
    y = _ref_cnn_block(x_nchw, params["conv1"], 1, 0)
    y = _ref_cnn_block(y, params["conv2"], stride, padding)
    y = _ref_cnn_block(y, params["conv3"], 1, 0)
    ident = _ref_cnn_block(x_nchw, params["conv_id"], stride, 0)
    return y + ident


# ---------------------------------------------------------------------------
# Deterministic parameter construction (shapes follow the PyTorch __init__)
# ---------------------------------------------------------------------------
def _make_params(key, in_channels, out_channels, reduction_factor, expansion_factor):
    c_mid = int(in_channels * expansion_factor / reduction_factor)

    def cnn_block_params(k, cin, cout, ksize):
        kw1, kw2, kw3, kw4 = jax.random.split(k, 4)
        fan_in = cin * ksize * ksize
        return {
            "w": jax.random.normal(kw1, (cout, cin, ksize, ksize), jnp.float32)
                 * (1.0 / jnp.sqrt(fan_in)),
            "b": jax.random.normal(kw2, (cout,), jnp.float32) * 0.1,
            "gamma": 1.0 + 0.1 * jax.random.normal(kw3, (cout,), jnp.float32),
            "beta": 0.1 * jax.random.normal(kw4, (cout,), jnp.float32),
        }

    k1, k2, k3, k4 = jax.random.split(key, 4)
    return {
        "conv1": cnn_block_params(k1, in_channels, c_mid, 1),
        "conv2": cnn_block_params(k2, c_mid, c_mid, 3),
        "conv3": cnn_block_params(k3, c_mid, out_channels, 1),
        "conv_id": cnn_block_params(k4, in_channels, out_channels, 1),
    }


if __name__ == "__main__":
    # BottleneckBlock(in_channels=4, out_channels=8, stride=2, padding=1,
    #                 reduction_factor=1, expansion_factor=2)
    batch, in_ch, out_ch, hw = 2, 4, 8, 16
    stride, padding, red, exp = 2, 1, 1, 2

    key = jax.random.PRNGKey(0)
    k_x, k_p = jax.random.split(key)
    x = jax.random.normal(k_x, (batch, in_ch, hw, hw), jnp.float32)  # NCHW
    params = _make_params(k_p, in_ch, out_ch, red, exp)

    out = jax.block_until_ready(bottleneck_block_forward(x, params, stride, padding))
    ref = jax.block_until_ready(_ref_forward(x, params, stride, padding))

    assert out.shape == ref.shape == (batch, out_ch, hw // stride, hw // stride)
    max_diff = float(jnp.max(jnp.abs(out - ref)))
    # bf16 activations/weights with f32 accumulation -> relaxed tolerance.
    assert jnp.allclose(out, ref, atol=5e-2, rtol=5e-2), f"max diff {max_diff}"
    print("KERNEL_OK")
</pallas_src>

<mosaic_0001>
module attributes {stable_mosaic.version = 11 : i64} {
  func.func @_conv1_kernel(%arg0: i32, %arg1: memref<512x128xbf16, #tpu.memory_space<vmem>>, %arg2: memref<128x128xbf16, #tpu.memory_space<vmem>>, %arg3: memref<512x128xbf16, #tpu.memory_space<vmem>>, %arg4: memref<1x8x128xf32, #tpu.memory_space<vmem>>) attributes {dimension_semantics = [#tpu.dimension_semantics<parallel>], iteration_bounds = array<i64: 1>, scalar_prefetch = 0 : i64, scratch_operands = 0 : i64, tpu.core_type = #tpu.core_type<tc>, window_params = [{transform_indices = @transform_0, window_bounds = array<i64: 512, 128>}, {pipeline_mode = #tpu.pipeline_mode<synchronous>, transform_indices = @transform_1, window_bounds = array<i64: 128, 128>}, {transform_indices = @transform_2, window_bounds = array<i64: 512, 128>}, {transform_indices = @transform_3, window_bounds = array<i64: 1, 8, 128>}]} {
    %c0 = arith.constant 0 : index
    %c0_0 = arith.constant 0 : index
    %0 = vector.load %arg1[%c0, %c0_0] : memref<512x128xbf16, #tpu.memory_space<vmem>>, vector<512x128xbf16>
    %c0_1 = arith.constant 0 : index
    %c0_2 = arith.constant 0 : index
    %1 = vector.load %arg2[%c0_1, %c0_2] : memref<128x128xbf16, #tpu.memory_space<vmem>>, vector<128x128xbf16>
    %cst = arith.constant dense<0.000000e+00> : vector<512x128xf32>
    %2 = tpu.matmul %0, %1, %cst {dimension_numbers = #tpu.dot_dimension_numbers<[1], [0], [0], [1], [0, 0, 1, 1], [], []>} : vector<512x128xbf16>, vector<128x128xbf16>, vector<512x128xf32> -> vector<512x128xf32>
    %3 = arith.truncf %2 : vector<512x128xf32> to vector<512x128xbf16>
    %c0_3 = arith.constant 0 : index
    %c0_4 = arith.constant 0 : index
    %4 = vector.load %arg3[%c0_3, %c0_4] : memref<512x128xbf16, #tpu.memory_space<vmem>>, vector<512x128xbf16>
    tpu.vector_store %arg3[%c0_3, %c0_4], %3 {strides = array<i32>} : memref<512x128xbf16, #tpu.memory_space<vmem>>, vector<512x128xbf16>,
    %cst_5 = arith.constant dense<0.000000e+00> : vector<128xf32>
    %5 = vector.multi_reduction <add>, %2, %cst_5 [0] : vector<512x128xf32> to vector<128xf32>
    %6 = vector.shape_cast %5 : vector<128xf32> to vector<1x128xf32>
    %c0_6 = arith.constant 0 : index
    %c0_7 = arith.constant 0 : index
    %c0_8 = arith.constant 0 : index
    %7 = vector.load %arg4[%c0_6, %c0_7, %c0_8] : memref<1x8x128xf32, #tpu.memory_space<vmem>>, vector<1x1x128xf32>
    %8 = vector.shape_cast %7 : vector<1x1x128xf32> to vector<1x128xf32>
    %9 = vector.shape_cast %6 : vector<1x128xf32> to vector<1x1x128xf32>
    tpu.vector_store %arg4[%c0_6, %c0_7, %c0_8], %9 {strides = array<i32>} : memref<1x8x128xf32, #tpu.memory_space<vmem>>, vector<1x1x128xf32>,
    %10 = arith.mulf %2, %2 : vector<512x128xf32>
    %cst_9 = arith.constant dense<0.000000e+00> : vector<128xf32>
    %11 = vector.multi_reduction <add>, %10, %cst_9 [0] : vector<512x128xf32> to vector<128xf32>
    %12 = vector.shape_cast %11 : vector<128xf32> to vector<1x128xf32>
    %c0_10 = arith.constant 0 : index
    %c1 = arith.constant 1 : index
    %c0_11 = arith.constant 0 : index
    %13 = vector.load %arg4[%c0_10, %c1, %c0_11] : memref<1x8x128xf32, #tpu.memory_space<vmem>>, vector<1x1x128xf32>
    %14 = vector.shape_cast %13 : vector<1x1x128xf32> to vector<1x128xf32>
    %15 = vector.shape_cast %12 : vector<1x128xf32> to vector<1x1x128xf32>
    tpu.vector_store %arg4[%c0_10, %c1, %c0_11], %15 {strides = array<i32>} : memref<1x8x128xf32, #tpu.memory_space<vmem>>, vector<1x1x128xf32>,
    return
  }
  func.func @transform_0(%arg0: i32) -> (i32, i32) {
    %c0_i32 = arith.constant 0 : i32
    %c0_i32_0 = arith.constant 0 : i32
    return %arg0, %c0_i32 : i32, i32
  }
  func.func @transform_1(%arg0: i32) -> (i32, i32) {
    %c0_i32 = arith.constant 0 : i32
    %c0_i32_0 = arith.constant 0 : i32
    %c0_i32_1 = arith.constant 0 : i32
    return %c0_i32, %c0_i32_0 : i32, i32
  }
  func.func @transform_2(%arg0: i32) -> (i32, i32) {
    %c0_i32 = arith.constant 0 : i32
    %c0_i32_0 = arith.constant 0 : i32
    return %arg0, %c0_i32 : i32, i32
  }
  func.func @transform_3(%arg0: i32) -> (i32, i32, i32) {
    %c0_i32 = arith.constant 0 : i32
    %c0_i32_0 = arith.constant 0 : i32
    %c0_i32_1 = arith.constant 0 : i32
    return %arg0, %c0_i32, %c0_i32_0 : i32, i32, i32
  }
}

module attributes {stable_mosaic.version = 11 : i64} {
  func.func @_conv2_kernel(%arg0: i32, %arg1: memref<1x16x16x128xbf16, #tpu.memory_space<vmem>>, %arg2: memref<2x128xf32, #tpu.memory_space<vmem>>, %arg3: memref<1152x128xbf16, #tpu.memory_space<vmem>>, %arg4: memref<1x64x128xbf16, #tpu.memory_space<vmem>>, %arg5: memref<1x8x128xf32, #tpu.memory_space<vmem>>, %arg6: memref<18x18x128xf32, #tpu.memory_space<vmem>>, %arg7: memref<64x1152xf32, #tpu.memory_space<vmem>>) attributes {dimension_semantics = [#tpu.dimension_semantics<parallel>], iteration_bounds = array<i64: 2>, scalar_prefetch = 0 : i64, scratch_operands = 2 : i64, tpu.core_type = #tpu.core_type<tc>, window_params = [{transform_indices = @transform_0, window_bounds = array<i64: 1, 16, 16, 128>}, {pipeline_mode = #tpu.pipeline_mode<synchronous>, transform_indices = @transform_1, window_bounds = array<i64: 2, 128>}, {pipeline_mode = #tpu.pipeline_mode<synchronous>, transform_indices = @transform_2, window_bounds = array<i64: 1152, 128>}, {transform_indices = @transform_3, window_bounds = array<i64: 1, 64, 128>}, {transform_indices = @transform_4, window_bounds = array<i64: 1, 8, 128>}]} {
    %cst = arith.constant 0.000000e+00 : f32
    %0 = vector.broadcast %cst : f32 to vector<18x18x128xf32>
    %c0 = arith.constant 0 : index
    %c0_0 = arith.constant 0 : index
    %c0_1 = arith.constant 0 : index
    %1 = vector.load %arg6[%c0, %c0_0, %c0_1] : memref<18x18x128xf32, #tpu.memory_space<vmem>>, vector<18x18x128xf32>
    tpu.vector_store %arg6[%c0, %c0_0, %c0_1], %0 {strides = array<i32>} : memref<18x18x128xf32, #tpu.memory_space<vmem>>, vector<18x18x128xf32>,
    %c0_2 = arith.constant 0 : index
    %c0_3 = arith.constant 0 : index
    %c0_4 = arith.constant 0 : index
    %c0_5 = arith.constant 0 : index
    %2 = vector.load %arg1[%c0_2, %c0_3, %c0_4, %c0_5] : memref<1x16x16x128xbf16, #tpu.memory_space<vmem>>, vector<1x16x16x128xbf16>
    %3 = vector.shape_cast %2 : vector<1x16x16x128xbf16> to vector<16x16x128xbf16>
    %4 = arith.extf %3 : vector<16x16x128xbf16> to vector<16x16x128xf32>
    %c0_6 = arith.constant 0 : index
    %c0_7 = arith.constant 0 : index
    %5 = vector.load %arg2[%c0_6, %c0_7] : memref<2x128xf32, #tpu.memory_space<vmem>>, vector<1x128xf32>
    %6 = vector.shape_cast %5 : vector<1x128xf32> to vector<1x1x128xf32>
    %7 = vector.broadcast %6 : vector<1x1x128xf32> to vector<16x16x128xf32>
    %8 = arith.mulf %4, %7 : vector<16x16x128xf32>
    %c1 = arith.constant 1 : index
    %c0_8 = arith.constant 0 : index
    %9 = vector.load %arg2[%c1, %c0_8] : memref<2x128xf32, #tpu.memory_space<vmem>>, vector<1x128xf32>
    %10 = vector.shape_cast %9 : vector<1x128xf32> to vector<1x1x128xf32>
    %11 = vector.broadcast %10 : vector<1x1x128xf32> to vector<16x16x128xf32>
    %12 = arith.addf %8, %11 : vector<16x16x128xf32>
    %cst_9 = arith.constant 0.000000e+00 : f32
    %13 = vector.broadcast %cst_9 : f32 to vector<16x16x128xf32>
    %14 = arith.maximumf %12, %13 : vector<16x16x128xf32>
    %c1_10 = arith.constant 1 : index
    %c1_11 = arith.constant 1 : index
    %c0_12 = arith.constant 0 : index
    %15 = vector.load %arg6[%c1_10, %c1_11, %c0_12] : memref<18x18x128xf32, #tpu.memory_space<vmem>>, vector<16x16x128xf32>
    tpu.vector_store %arg6[%c1_10, %c1_11, %c0_12], %14 {strides = array<i32>} : memref<18x18x128xf32, #tpu.memory_space<vmem>>, vector<16x16x128xf32>,
    %c0_i32 = arith.constant 0 : i32
    %c8_i32 = arith.constant 8 : i32
    %16 = arith.addi %c0_i32, %c8_i32 : i32
    %c1_i32 = arith.constant 1 : i32
    scf.for %arg8 = %c0_i32 to %16 step %c1_i32  : i32 {
      %c2_i32 = arith.constant 2 : i32
      %36 = arith.muli %arg8, %c2_i32 : i32
      %c0_i32_30 = arith.constant 0 : i32
      %37 = arith.addi %c0_i32_30, %36 : i32
      %38 = arith.index_cast %37 : i32 to index
      %c0_31 = arith.constant 0 : index
      %c0_32 = arith.constant 0 : index
      %39 = tpu.strided_load %arg6[%38, %c0_31, %c0_32] {strides = array<i32: 1, 2, 1>} : memref<18x18x128xf32, #tpu.memory_space<vmem>>, vector<1x8x128xf32>
      %40 = vector.shape_cast %39 : vector<1x8x128xf32> to vector<8x128xf32>
      %c8_i32_33 = arith.constant 8 : i32
      %41 = arith.muli %arg8, %c8_i32_33 : i32
      %42 = arith.index_cast %41 : i32 to index
      %c0_34 = arith.constant 0 : index
      %43 = vector.load %arg7[%42, %c0_34] : memref<64x1152xf32, #tpu.memory_space<vmem>>, vector<8x128xf32>
      tpu.vector_store %arg7[%42, %c0_34], %40 {strides = array<i32>} : memref<64x1152xf32, #tpu.memory_space<vmem>>, vector<8x128xf32>,
      %c2_i32_35 = arith.constant 2 : i32
      %44 = arith.muli %arg8, %c2_i32_35 : i32
      %c0_i32_36 = arith.constant 0 : i32
      %45 = arith.addi %c0_i32_36, %44 : i32
      %46 = arith.index_cast %45 : i32 to index
      %c1_37 = arith.constant 1 : index
      %c0_38 = arith.constant 0 : index
      %47 = tpu.strided_load %arg6[%46, %c1_37, %c0_38] {strides = array<i32: 1, 2, 1>} : memref<18x18x128xf32, #tpu.memory_space<vmem>>, vector<1x8x128xf32>
      %48 = vector.shape_cast %47 : vector<1x8x128xf32> to vector<8x128xf32>
      %c8_i32_39 = arith.constant 8 : i32
      %49 = arith.muli %arg8, %c8_i32_39 : i32
      %50 = arith.index_cast %49 : i32 to index
      %c128 = arith.constant 128 : index
      %51 = vector.load %arg7[%50, %c128] : memref<64x1152xf32, #tpu.memory_space<vmem>>, vector<8x128xf32>
      tpu.vector_store %arg7[%50, %c128], %48 {strides = array<i32>} : memref<64x1152xf32, #tpu.memory_space<vmem>>, vector<8x128xf32>,
      %c2_i32_40 = arith.constant 2 : i32
      %52 = arith.muli %arg8, %c2_i32_40 : i32
      %c0_i32_41 = arith.constant 0 : i32
      %53 = arith.addi %c0_i32_41, %52 : i32
      %54 = arith.index_cast %53 : i32 to index
      %c2 = arith.constant 2 : index
      %c0_42 = arith.constant 0 : index
      %55 = tpu.strided_load %arg6[%54, %c2, %c0_42] {strides = array<i32: 1, 2, 1>} : memref<18x18x128xf32, #tpu.memory_space<vmem>>, vector<1x8x128xf32>
      %56 = vector.shape_cast %55 : vector<1x8x128xf32> to vector<8x128xf32>
      %c8_i32_43 = arith.constant 8 : i32
      %57 = arith.muli %arg8, %c8_i32_43 : i32
      %58 = arith.index_cast %57 : i32 to index
      %c256 = arith.constant 256 : index
      %59 = vector.load %arg7[%58, %c256] : memref<64x1152xf32, #tpu.memory_space<vmem>>, vector<8x128xf32>
      tpu.vector_store %arg7[%58, %c256], %56 {strides = array<i32>} : memref<64x1152xf32, #tpu.memory_space<vmem>>, vector<8x128xf32>,
      %c2_i32_44 = arith.constant 2 : i32
      %60 = arith.muli %arg8, %c2_i32_44 : i32
      %c1_i32_45 = arith.constant 1 : i32
      %61 = arith.addi %c1_i32_45, %60 : i32
      %62 = arith.index_cast %61 : i32 to index
      %c0_46 = arith.constant 0 : index
      %c0_47 = arith.constant 0 : index
      %63 = tpu.strided_load %arg6[%62, %c0_46, %c0_47] {strides = array<i32: 1, 2, 1>} : memref<18x18x128xf32, #tpu.memory_space<vmem>>, vector<1x8x128xf32>
      %64 = vector.shape_cast %63 : vector<1x8x128xf32> to vector<8x128xf32>
      %c8_i32_48 = arith.constant 8 : i32
      %65 = arith.muli %arg8, %c8_i32_48 : i32
      %66 = arith.index_cast %65 : i32 to index
      %c384 = arith.constant 384 : index
      %67 = vector.load %arg7[%66, %c384] : memref<64x1152xf32, #tpu.memory_space<vmem>>, vector<8x128xf32>
      tpu.vector_store %arg7[%66, %c384], %64 {strides = array<i32>} : memref<64x1152xf32, #tpu.memory_space<vmem>>, vector<8x128xf32>,
      %c2_i32_49 = arith.constant 2 : i32
      %68 = arith.muli %arg8, %c2_i32_49 : i32
      %c1_i32_50 = arith.constant 1 : i32
      %69 = arith.addi %c1_i32_50, %68 : i32
      %70 = arith.index_cast %69 : i32 to index
      %c1_51 = arith.constant 1 : index
      %c0_52 = arith.constant 0 : index
      %71 = tpu.strided_load %arg6[%70, %c1_51, %c0_52] {strides = array<i32: 1, 2, 1>} : memref<18x18x128xf32, #tpu.memory_space<vmem>>, vector<1x8x128xf32>
      %72 = vector.shape_cast %71 : vector<1x8x128xf32> to vector<8x128xf32>
      %c8_i32_53 = arith.constant 8 : i32
      %73 = arith.muli %arg8, %c8_i32_53 : i32
      %74 = arith.index_cast %73 : i32 to index
      %c512 = arith.constant 512 : index
      %75 = vector.load %arg7[%74, %c512] : memref<64x1152xf32, #tpu.memory_space<vmem>>, vector<8x128xf32>
      tpu.vector_store %arg7[%74, %c512], %72 {strides = array<i32>} : memref<64x1152xf32, #tpu.memory_space<vmem>>, vector<8x128xf32>,
      %c2_i32_54 = arith.constant 2 : i32
      %76 = arith.muli %arg8, %c2_i32_54 : i32
      %c1_i32_55 = arith.constant 1 : i32
      %77 = arith.addi %c1_i32_55, %76 : i32
      %78 = arith.index_cast %77 : i32 to index
      %c2_56 = arith.constant 2 : index
      %c0_57 = arith.constant 0 : index
      %79 = tpu.strided_load %arg6[%78, %c2_56, %c0_57] {strides = array<i32: 1, 2, 1>} : memref<18x18x128xf32, #tpu.memory_space<vmem>>, vector<1x8x128xf32>
      %80 = vector.shape_cast %79 : vector<1x8x128xf32> to vector<8x128xf32>
      %c8_i32_58 = arith.constant 8 : i32
      %81 = arith.muli %arg8, %c8_i32_58 : i32
      %82 = arith.index_cast %81 : i32 to index
      %c640 = arith.constant 640 : index
      %83 = vector.load %arg7[%82, %c640] : memref<64x1152xf32, #tpu.memory_space<vmem>>, vector<8x128xf32>
      tpu.vector_store %arg7[%82, %c640], %80 {strides = array<i32>} : memref<64x1152xf32, #tpu.memory_space<vmem>>, vector<8x128xf32>,
      %c2_i32_59 = arith.constant 2 : i32
      %84 = arith.muli %arg8, %c2_i32_59 : i32
      %c2_i32_60 = arith.constant 2 : i32
      %85 = arith.addi %c2_i32_60, %84 : i32
      %86 = arith.index_cast %85 : i32 to index
      %c0_61 = arith.constant 0 : index
      %c0_62 = arith.constant 0 : index
      %87 = tpu.strided_load %arg6[%86, %c0_61, %c0_62] {strides = array<i32: 1, 2, 1>} : memref<18x18x128xf32, #tpu.memory_space<vmem>>, vector<1x8x128xf32>
      %88 = vector.shape_cast %87 : vector<1x8x128xf32> to vector<8x128xf32>
      %c8_i32_63 = arith.constant 8 : i32
      %89 = arith.muli %arg8, %c8_i32_63 : i32
      %90 = arith.index_cast %89 : i32 to index
      %c768 = arith.constant 768 : index
      %91 = vector.load %arg7[%90, %c768] : memref<64x1152xf32, #tpu.memory_space<vmem>>, vector<8x128xf32>
      tpu.vector_store %arg7[%90, %c768], %88 {strides = array<i32>} : memref<64x1152xf32, #tpu.memory_space<vmem>>, vector<8x128xf32>,
      %c2_i32_64 = arith.constant 2 : i32
      %92 = arith.muli %arg8, %c2_i32_64 : i32
      %c2_i32_65 = arith.constant 2 : i32
      %93 = arith.addi %c2_i32_65, %92 : i32
      %94 = arith.index_cast %93 : i32 to index
      %c1_66 = arith.constant 1 : index
      %c0_67 = arith.constant 0 : index
      %95 = tpu.strided_load %arg6[%94, %c1_66, %c0_67] {strides = array<i32: 1, 2, 1>} : memref<18x18x128xf32, #tpu.memory_space<vmem>>, vector<1x8x128xf32>
      %96 = vector.shape_cast %95 : vector<1x8x128xf32> to vector<8x128xf32>
      %c8_i32_68 = arith.constant 8 : i32
      %97 = arith.muli %arg8, %c8_i32_68 : i32
      %98 = arith.index_cast %97 : i32 to index
      %c896 = arith.constant 896 : index
      %99 = vector.load %arg7[%98, %c896] : memref<64x1152xf32, #tpu.memory_space<vmem>>, vector<8x128xf32>
      tpu.vector_store %arg7[%98, %c896], %96 {strides = array<i32>} : memref<64x1152xf32, #tpu.memory_space<vmem>>, vector<8x128xf32>,
      %c2_i32_69 = arith.constant 2 : i32
      %100 = arith.muli %arg8, %c2_i32_69 : i32
      %c2_i32_70 = arith.constant 2 : i32
      %101 = arith.addi %c2_i32_70, %100 : i32
      %102 = arith.index_cast %101 : i32 to index
      %c2_71 = arith.constant 2 : index
      %c0_72 = arith.constant 0 : index
      %103 = tpu.strided_load %arg6[%102, %c2_71, %c0_72] {strides = array<i32: 1, 2, 1>} : memref<18x18x128xf32, #tpu.memory_space<vmem>>, vector<1x8x128xf32>
      %104 = vector.shape_cast %103 : vector<1x8x128xf32> to vector<8x128xf32>
      %c8_i32_73 = arith.constant 8 : i32
      %105 = arith.muli %arg8, %c8_i32_73 : i32
      %106 = arith.index_cast %105 : i32 to index
      %c1024 = arith.constant 1024 : index
      %107 = vector.load %arg7[%106, %c1024] : memref<64x1152xf32, #tpu.memory_space<vmem>>, vector<8x128xf32>
      tpu.vector_store %arg7[%106, %c1024], %104 {strides = array<i32>} : memref<64x1152xf32, #tpu.memory_space<vmem>>, vector<8x128xf32>,
    }
    %c8_i32_13 = arith.constant 8 : i32
    %c0_14 = arith.constant 0 : index
    %c0_15 = arith.constant 0 : index
    %17 = vector.load %arg7[%c0_14, %c0_15] : memref<64x1152xf32, #tpu.memory_space<vmem>>, vector<64x1152xf32>
    %18 = arith.truncf %17 : vector<64x1152xf32> to vector<64x1152xbf16>
    %c0_16 = arith.constant 0 : index
    %c0_17 = arith.constant 0 : index
    %19 = vector.load %arg3[%c0_16, %c0_17] : memref<1152x128xbf16, #tpu.memory_space<vmem>>, vector<1152x128xbf16>
    %cst_18 = arith.constant dense<0.000000e+00> : vector<64x128xf32>
    %20 = tpu.matmul %18, %19, %cst_18 {dimension_numbers = #tpu.dot_dimension_numbers<[1], [0], [0], [1], [0, 0, 1, 1], [], []>} : vector<64x1152xbf16>, vector<1152x128xbf16>, vector<64x128xf32> -> vector<64x128xf32>
    %21 = arith.truncf %20 : vector<64x128xf32> to vector<64x128xbf16>
    %c0_19 = arith.constant 0 : index
    %c0_20 = arith.constant 0 : index
    %c0_21 = arith.constant 0 : index
    %22 = vector.load %arg4[%c0_19, %c0_20, %c0_21] : memref<1x64x128xbf16, #tpu.memory_space<vmem>>, vector<1x64x128xbf16>
    %23 = vector.shape_cast %22 : vector<1x64x128xbf16> to vector<64x128xbf16>
    %24 = vector.shape_cast %21 : vector<64x128xbf16> to vector<1x64x128xbf16>
    tpu.vector_store %arg4[%c0_19, %c0_20, %c0_21], %24 {strides = array<i32>} : memref<1x64x128xbf16, #tpu.memory_space<vmem>>, vector<1x64x128xbf16>,
    %cst_22 = arith.constant dense<0.000000e+00> : vector<128xf32>
    %25 = vector.multi_reduction <add>, %20, %cst_22 [0] : vector<64x128xf32> to vector<128xf32>
    %26 = vector.shape_cast %25 : vector<128xf32> to vector<1x128xf32>
    %c0_23 = arith.constant 0 : index
    %c0_24 = arith.constant 0 : index
    %c0_25 = arith.constant 0 : index
    %27 = vector.load %arg5[%c0_23, %c0_24, %c0_25] : memref<1x8x128xf32, #tpu.memory_space<vmem>>, vector<1x1x128xf32>
    %28 = vector.shape_cast %27 : vector<1x1x128xf32> to vector<1x128xf32>
    %29 = vector.shape_cast %26 : vector<1x128xf32> to vector<1x1x128xf32>
    tpu.vector_store %arg5[%c0_23, %c0_24, %c0_25], %29 {strides = array<i32>} : memref<1x8x128xf32, #tpu.memory_space<vmem>>, vector<1x1x128xf32>,
    %30 = arith.mulf %20, %20 : vector<64x128xf32>
    %cst_26 = arith.constant dense<0.000000e+00> : vector<128xf32>
    %31 = vector.multi_reduction <add>, %30, %cst_26 [0] : vector<64x128xf32> to vector<128xf32>
    %32 = vector.shape_cast %31 : vector<128xf32> to vector<1x128xf32>
    %c0_27 = arith.constant 0 : index
    %c1_28 = arith.constant 1 : index
    %c0_29 = arith.constant 0 : index
    %33 = vector.load %arg5[%c0_27, %c1_28, %c0_29] : memref<1x8x128xf32, #tpu.memory_space<vmem>>, vector<1x1x128xf32>
    %34 = vector.shape_cast %33 : vector<1x1x128xf32> to vector<1x128xf32>
    %35 = vector.shape_cast %32 : vector<1x128xf32> to vector<1x1x128xf32>
    tpu.vector_store %arg5[%c0_27, %c1_28, %c0_29], %35 {strides = array<i32>} : memref<1x8x128xf32, #tpu.memory_space<vmem>>, vector<1x1x128xf32>,
    return
  }
  func.func @transform_0(%arg0: i32) -> (i32, i32, i32, i32) {
    %c0_i32 = arith.constant 0 : i32
    %c0_i32_0 = arith.constant 0 : i32
    %c0_i32_1 = arith.constant 0 : i32
    %c0_i32_2 = arith.constant 0 : i32
    return %arg0, %c0_i32, %c0_i32_0, %c0_i32_1 : i32, i32, i32, i32
  }
  func.func @transform_1(%arg0: i32) -> (i32, i32) {
    %c0_i32 = arith.constant 0 : i32
    %c0_i32_0 = arith.constant 0 : i32
    %c0_i32_1 = arith.constant 0 : i32
    return %c0_i32, %c0_i32_0 : i32, i32
  }
  func.func @transform_2(%arg0: i32) -> (i32, i32) {
    %c0_i32 = arith.constant 0 : i32
    %c0_i32_0 = arith.constant 0 : i32
    %c0_i32_1 = arith.constant 0 : i32
    return %c0_i32, %c0_i32_0 : i32, i32
  }
  func.func @transform_3(%arg0: i32) -> (i32, i32, i32) {
    %c0_i32 = arith.constant 0 : i32
    %c0_i32_0 = arith.constant 0 : i32
    %c0_i32_1 = arith.constant 0 : i32
    return %arg0, %c0_i32, %c0_i32_0 : i32, i32, i32
  }
  func.func @transform_4(%arg0: i32) -> (i32, i32, i32) {
    %c0_i32 = arith.constant 0 : i32
    %c0_i32_0 = arith.constant 0 : i32
    %c0_i32_1 = arith.constant 0 : i32
    return %arg0, %c0_i32, %c0_i32_0 : i32, i32, i32
  }
}

module attributes {stable_mosaic.version = 11 : i64} {
  func.func @_tail_stats_kernel(%arg0: i32, %arg1: memref<1x64x128xbf16, #tpu.memory_space<vmem>>, %arg2: memref<2x128xf32, #tpu.memory_space<vmem>>, %arg3: memref<1x64x128xbf16, #tpu.memory_space<vmem>>, %arg4: memref<128x128xbf16, #tpu.memory_space<vmem>>, %arg5: memref<128x128xbf16, #tpu.memory_space<vmem>>, %arg6: memref<1x8x128xf32, #tpu.memory_space<vmem>>, %arg7: memref<1x8x128xf32, #tpu.memory_space<vmem>>) attributes {dimension_semantics = [#tpu.dimension_semantics<parallel>], iteration_bounds = array<i64: 2>, scalar_prefetch = 0 : i64, scratch_operands = 0 : i64, tpu.core_type = #tpu.core_type<tc>, window_params = [{transform_indices = @transform_0, window_bounds = array<i64: 1, 64, 128>}, {pipeline_mode = #tpu.pipeline_mode<synchronous>, transform_indices = @transform_1, window_bounds = array<i64: 2, 128>}, {transform_indices = @transform_2, window_bounds = array<i64: 1, 64, 128>}, {pipeline_mode = #tpu.pipeline_mode<synchronous>, transform_indices = @transform_3, window_bounds = array<i64: 128, 128>}, {pipeline_mode = #tpu.pipeline_mode<synchronous>, transform_indices = @transform_4, window_bounds = array<i64: 128, 128>}, {transform_indices = @transform_5, window_bounds = array<i64: 1, 8, 128>}, {transform_indices = @transform_6, window_bounds = array<i64: 1, 8, 128>}]} {
    %c0 = arith.constant 0 : index
    %c0_0 = arith.constant 0 : index
    %c0_1 = arith.constant 0 : index
    %0 = vector.load %arg1[%c0, %c0_0, %c0_1] : memref<1x64x128xbf16, #tpu.memory_space<vmem>>, vector<1x64x128xbf16>
    %1 = vector.shape_cast %0 : vector<1x64x128xbf16> to vector<64x128xbf16>
    %2 = arith.extf %1 : vector<64x128xbf16> to vector<64x128xf32>
    %c0_2 = arith.constant 0 : index
    %c0_3 = arith.constant 0 : index
    %3 = vector.load %arg2[%c0_2, %c0_3] : memref<2x128xf32, #tpu.memory_space<vmem>>, vector<1x128xf32>
    %4 = vector.broadcast %3 : vector<1x128xf32> to vector<64x128xf32>
    %5 = arith.mulf %2, %4 : vector<64x128xf32>
    %c1 = arith.constant 1 : index
    %c0_4 = arith.constant 0 : index
    %6 = vector.load %arg2[%c1, %c0_4] : memref<2x128xf32, #tpu.memory_space<vmem>>, vector<1x128xf32>
    %7 = vector.broadcast %6 : vector<1x128xf32> to vector<64x128xf32>
    %8 = arith.addf %5, %7 : vector<64x128xf32>
    %cst = arith.constant 0.000000e+00 : f32
    %9 = vector.broadcast %cst : f32 to vector<64x128xf32>
    %10 = arith.maximumf %8, %9 : vector<64x128xf32>
    %11 = arith.truncf %10 : vector<64x128xf32> to vector<64x128xbf16>
    %c0_5 = arith.constant 0 : index
    %c0_6 = arith.constant 0 : index
    %12 = vector.load %arg4[%c0_5, %c0_6] : memref<128x128xbf16, #tpu.memory_space<vmem>>, vector<128x128xbf16>
    %cst_7 = arith.constant dense<0.000000e+00> : vector<64x128xf32>
    %13 = tpu.matmul %11, %12, %cst_7 {dimension_numbers = #tpu.dot_dimension_numbers<[1], [0], [0], [1], [0, 0, 1, 1], [], []>} : vector<64x128xbf16>, vector<128x128xbf16>, vector<64x128xf32> -> vector<64x128xf32>
    %c0_8 = arith.constant 0 : index
    %c0_9 = arith.constant 0 : index
    %c0_10 = arith.constant 0 : index
    %14 = vector.load %arg3[%c0_8, %c0_9, %c0_10] : memref<1x64x128xbf16, #tpu.memory_space<vmem>>, vector<1x64x128xbf16>
    %15 = vector.shape_cast %14 : vector<1x64x128xbf16> to vector<64x128xbf16>
    %c0_11 = arith.constant 0 : index
    %c0_12 = arith.constant 0 : index
    %16 = vector.load %arg5[%c0_11, %c0_12] : memref<128x128xbf16, #tpu.memory_space<vmem>>, vector<128x128xbf16>
    %cst_13 = arith.constant dense<0.000000e+00> : vector<64x128xf32>
    %17 = tpu.matmul %15, %16, %cst_13 {dimension_numbers = #tpu.dot_dimension_numbers<[1], [0], [0], [1], [0, 0, 1, 1], [], []>} : vector<64x128xbf16>, vector<128x128xbf16>, vector<64x128xf32> -> vector<64x128xf32>
    %cst_14 = arith.constant dense<0.000000e+00> : vector<128xf32>
    %18 = vector.multi_reduction <add>, %13, %cst_14 [0] : vector<64x128xf32> to vector<128xf32>
    %19 = vector.shape_cast %18 : vector<128xf32> to vector<1x128xf32>
    %c0_15 = arith.constant 0 : index
    %c0_16 = arith.constant 0 : index
    %c0_17 = arith.constant 0 : index
    %20 = vector.load %arg6[%c0_15, %c0_16, %c0_17] : memref<1x8x128xf32, #tpu.memory_space<vmem>>, vector<1x1x128xf32>
    %21 = vector.shape_cast %20 : vector<1x1x128xf32> to vector<1x128xf32>
    %22 = vector.shape_cast %19 : vector<1x128xf32> to vector<1x1x128xf32>
    tpu.vector_store %arg6[%c0_15, %c0_16, %c0_17], %22 {strides = array<i32>} : memref<1x8x128xf32, #tpu.memory_space<vmem>>, vector<1x1x128xf32>,
    %23 = arith.mulf %13, %13 : vector<64x128xf32>
    %cst_18 = arith.constant dense<0.000000e+00> : vector<128xf32>
    %24 = vector.multi_reduction <add>, %23, %cst_18 [0] : vector<64x128xf32> to vector<128xf32>
    %25 = vector.shape_cast %24 : vector<128xf32> to vector<1x128xf32>
    %c0_19 = arith.constant 0 : index
    %c1_20 = arith.constant 1 : index
    %c0_21 = arith.constant 0 : index
    %26 = vector.load %arg6[%c0_19, %c1_20, %c0_21] : memref<1x8x128xf32, #tpu.memory_space<vmem>>, vector<1x1x128xf32>
    %27 = vector.shape_cast %26 : vector<1x1x128xf32> to vector<1x128xf32>
    %28 = vector.shape_cast %25 : vector<1x128xf32> to vector<1x1x128xf32>
    tpu.vector_store %arg6[%c0_19, %c1_20, %c0_21], %28 {strides = array<i32>} : memref<1x8x128xf32, #tpu.memory_space<vmem>>, vector<1x1x128xf32>,
    %cst_22 = arith.constant dense<0.000000e+00> : vector<128xf32>
    %29 = vector.multi_reduction <add>, %17, %cst_22 [0] : vector<64x128xf32> to vector<128xf32>
    %30 = vector.shape_cast %29 : vector<128xf32> to vector<1x128xf32>
    %c0_23 = arith.constant 0 : index
    %c0_24 = arith.constant 0 : index
    %c0_25 = arith.constant 0 : index
    %31 = vector.load %arg7[%c0_23, %c0_24, %c0_25] : memref<1x8x128xf32, #tpu.memory_space<vmem>>, vector<1x1x128xf32>
    %32 = vector.shape_cast %31 : vector<1x1x128xf32> to vector<1x128xf32>
    %33 = vector.shape_cast %30 : vector<1x128xf32> to vector<1x1x128xf32>
    tpu.vector_store %arg7[%c0_23, %c0_24, %c0_25], %33 {strides = array<i32>} : memref<1x8x128xf32, #tpu.memory_space<vmem>>, vector<1x1x128xf32>,
    %34 = arith.mulf %17, %17 : vector<64x128xf32>
    %cst_26 = arith.constant dense<0.000000e+00> : vector<128xf32>
    %35 = vector.multi_reduction <add>, %34, %cst_26 [0] : vector<64x128xf32> to vector<128xf32>
    %36 = vector.shape_cast %35 : vector<128xf32> to vector<1x128xf32>
    %c0_27 = arith.constant 0 : index
    %c1_28 = arith.constant 1 : index
    %c0_29 = arith.constant 0 : index
    %37 = vector.load %arg7[%c0_27, %c1_28, %c0_29] : memref<1x8x128xf32, #tpu.memory_space<vmem>>, vector<1x1x128xf32>
    %38 = vector.shape_cast %37 : vector<1x1x128xf32> to vector<1x128xf32>
    %39 = vector.shape_cast %36 : vector<1x128xf32> to vector<1x1x128xf32>
    tpu.vector_store %arg7[%c0_27, %c1_28, %c0_29], %39 {strides = array<i32>} : memref<1x8x128xf32, #tpu.memory_space<vmem>>, vector<1x1x128xf32>,
    return
  }
  func.func @transform_0(%arg0: i32) -> (i32, i32, i32) {
    %c0_i32 = arith.constant 0 : i32
    %c0_i32_0 = arith.constant 0 : i32
    %c0_i32_1 = arith.constant 0 : i32
    return %arg0, %c0_i32, %c0_i32_0 : i32, i32, i32
  }
  func.func @transform_1(%arg0: i32) -> (i32, i32) {
    %c0_i32 = arith.constant 0 : i32
    %c0_i32_0 = arith.constant 0 : i32
    %c0_i32_1 = arith.constant 0 : i32
    return %c0_i32, %c0_i32_0 : i32, i32
  }
  func.func @transform_2(%arg0: i32) -> (i32, i32, i32) {
    %c0_i32 = arith.constant 0 : i32
    %c0_i32_0 = arith.constant 0 : i32
    %c0_i32_1 = arith.constant 0 : i32
    return %arg0, %c0_i32, %c0_i32_0 : i32, i32, i32
  }
  func.func @transform_3(%arg0: i32) -> (i32, i32) {
    %c0_i32 = arith.constant 0 : i32
    %c0_i32_0 = arith.constant 0 : i32
    %c0_i32_1 = arith.constant 0 : i32
    return %c0_i32, %c0_i32_0 : i32, i32
  }
  func.func @transform_4(%arg0: i32) -> (i32, i32) {
    %c0_i32 = arith.constant 0 : i32
    %c0_i32_0 = arith.constant 0 : i32
    %c0_i32_1 = arith.constant 0 : i32
    return %c0_i32, %c0_i32_0 : i32, i32
  }
  func.func @transform_5(%arg0: i32) -> (i32, i32, i32) {
    %c0_i32 = arith.constant 0 : i32
    %c0_i32_0 = arith.constant 0 : i32
    %c0_i32_1 = arith.constant 0 : i32
    return %arg0, %c0_i32, %c0_i32_0 : i32, i32, i32
  }
  func.func @transform_6(%arg0: i32) -> (i32, i32, i32) {
    %c0_i32 = arith.constant 0 : i32
    %c0_i32_0 = arith.constant 0 : i32
    %c0_i32_1 = arith.constant 0 : i32
    return %arg0, %c0_i32, %c0_i32_0 : i32, i32, i32
  }
}

module attributes {stable_mosaic.version = 11 : i64} {
  func.func @_tail_final_kernel(%arg0: i32, %arg1: memref<1x64x128xbf16, #tpu.memory_space<vmem>>, %arg2: memref<2x128xf32, #tpu.memory_space<vmem>>, %arg3: memref<1x64x128xbf16, #tpu.memory_space<vmem>>, %arg4: memref<128x128xbf16, #tpu.memory_space<vmem>>, %arg5: memref<128x128xbf16, #tpu.memory_space<vmem>>, %arg6: memref<2x128xf32, #tpu.memory_space<vmem>>, %arg7: memref<2x128xf32, #tpu.memory_space<vmem>>, %arg8: memref<1x64x128xf32, #tpu.memory_space<vmem>>) attributes {dimension_semantics = [#tpu.dimension_semantics<parallel>], iteration_bounds = array<i64: 2>, scalar_prefetch = 0 : i64, scratch_operands = 0 : i64, tpu.core_type = #tpu.core_type<tc>, window_params = [{transform_indices = @transform_0, window_bounds = array<i64: 1, 64, 128>}, {pipeline_mode = #tpu.pipeline_mode<synchronous>, transform_indices = @transform_1, window_bounds = array<i64: 2, 128>}, {transform_indices = @transform_2, window_bounds = array<i64: 1, 64, 128>}, {pipeline_mode = #tpu.pipeline_mode<synchronous>, transform_indices = @transform_3, window_bounds = array<i64: 128, 128>}, {pipeline_mode = #tpu.pipeline_mode<synchronous>, transform_indices = @transform_4, window_bounds = array<i64: 128, 128>}, {pipeline_mode = #tpu.pipeline_mode<synchronous>, transform_indices = @transform_5, window_bounds = array<i64: 2, 128>}, {pipeline_mode = #tpu.pipeline_mode<synchronous>, transform_indices = @transform_6, window_bounds = array<i64: 2, 128>}, {transform_indices = @transform_7, window_bounds = array<i64: 1, 64, 128>}]} {
    %c0 = arith.constant 0 : index
    %c0_0 = arith.constant 0 : index
    %c0_1 = arith.constant 0 : index
    %0 = vector.load %arg1[%c0, %c0_0, %c0_1] : memref<1x64x128xbf16, #tpu.memory_space<vmem>>, vector<1x64x128xbf16>
    %1 = vector.shape_cast %0 : vector<1x64x128xbf16> to vector<64x128xbf16>
    %2 = arith.extf %1 : vector<64x128xbf16> to vector<64x128xf32>
    %c0_2 = arith.constant 0 : index
    %c0_3 = arith.constant 0 : index
    %3 = vector.load %arg2[%c0_2, %c0_3] : memref<2x128xf32, #tpu.memory_space<vmem>>, vector<1x128xf32>
    %4 = vector.broadcast %3 : vector<1x128xf32> to vector<64x128xf32>
    %5 = arith.mulf %2, %4 : vector<64x128xf32>
    %c1 = arith.constant 1 : index
    %c0_4 = arith.constant 0 : index
    %6 = vector.load %arg2[%c1, %c0_4] : memref<2x128xf32, #tpu.memory_space<vmem>>, vector<1x128xf32>
    %7 = vector.broadcast %6 : vector<1x128xf32> to vector<64x128xf32>
    %8 = arith.addf %5, %7 : vector<64x128xf32>
    %cst = arith.constant 0.000000e+00 : f32
    %9 = vector.broadcast %cst : f32 to vector<64x128xf32>
    %10 = arith.maximumf %8, %9 : vector<64x128xf32>
    %11 = arith.truncf %10 : vector<64x128xf32> to vector<64x128xbf16>
    %c0_5 = arith.constant 0 : index
    %c0_6 = arith.constant 0 : index
    %12 = vector.load %arg4[%c0_5, %c0_6] : memref<128x128xbf16, #tpu.memory_space<vmem>>, vector<128x128xbf16>
    %cst_7 = arith.constant dense<0.000000e+00> : vector<64x128xf32>
    %13 = tpu.matmul %11, %12, %cst_7 {dimension_numbers = #tpu.dot_dimension_numbers<[1], [0], [0], [1], [0, 0, 1, 1], [], []>} : vector<64x128xbf16>, vector<128x128xbf16>, vector<64x128xf32> -> vector<64x128xf32>
    %c0_8 = arith.constant 0 : index
    %c0_9 = arith.constant 0 : index
    %c0_10 = arith.constant 0 : index
    %14 = vector.load %arg3[%c0_8, %c0_9, %c0_10] : memref<1x64x128xbf16, #tpu.memory_space<vmem>>, vector<1x64x128xbf16>
    %15 = vector.shape_cast %14 : vector<1x64x128xbf16> to vector<64x128xbf16>
    %c0_11 = arith.constant 0 : index
    %c0_12 = arith.constant 0 : index
    %16 = vector.load %arg5[%c0_11, %c0_12] : memref<128x128xbf16, #tpu.memory_space<vmem>>, vector<128x128xbf16>
    %cst_13 = arith.constant dense<0.000000e+00> : vector<64x128xf32>
    %17 = tpu.matmul %15, %16, %cst_13 {dimension_numbers = #tpu.dot_dimension_numbers<[1], [0], [0], [1], [0, 0, 1, 1], [], []>} : vector<64x128xbf16>, vector<128x128xbf16>, vector<64x128xf32> -> vector<64x128xf32>
    %c0_14 = arith.constant 0 : index
    %c0_15 = arith.constant 0 : index
    %18 = vector.load %arg6[%c0_14, %c0_15] : memref<2x128xf32, #tpu.memory_space<vmem>>, vector<1x128xf32>
    %19 = vector.broadcast %18 : vector<1x128xf32> to vector<64x128xf32>
    %20 = arith.mulf %13, %19 : vector<64x128xf32>
    %c1_16 = arith.constant 1 : index
    %c0_17 = arith.constant 0 : index
    %21 = vector.load %arg6[%c1_16, %c0_17] : memref<2x128xf32, #tpu.memory_space<vmem>>, vector<1x128xf32>
    %22 = vector.broadcast %21 : vector<1x128xf32> to vector<64x128xf32>
    %23 = arith.addf %20, %22 : vector<64x128xf32>
    %cst_18 = arith.constant 0.000000e+00 : f32
    %24 = vector.broadcast %cst_18 : f32 to vector<64x128xf32>
    %25 = arith.maximumf %23, %24 : vector<64x128xf32>
    %c0_19 = arith.constant 0 : index
    %c0_20 = arith.constant 0 : index
    %26 = vector.load %arg7[%c0_19, %c0_20] : memref<2x128xf32, #tpu.memory_space<vmem>>, vector<1x128xf32>
    %27 = vector.broadcast %26 : vector<1x128xf32> to vector<64x128xf32>
    %28 = arith.mulf %17, %27 : vector<64x128xf32>
    %c1_21 = arith.constant 1 : index
    %c0_22 = arith.constant 0 : index
    %29 = vector.load %arg7[%c1_21, %c0_22] : memref<2x128xf32, #tpu.memory_space<vmem>>, vector<1x128xf32>
    %30 = vector.broadcast %29 : vector<1x128xf32> to vector<64x128xf32>
    %31 = arith.addf %28, %30 : vector<64x128xf32>
    %cst_23 = arith.constant 0.000000e+00 : f32
    %32 = vector.broadcast %cst_23 : f32 to vector<64x128xf32>
    %33 = arith.maximumf %31, %32 : vector<64x128xf32>
    %34 = arith.addf %25, %33 : vector<64x128xf32>
    %c0_24 = arith.constant 0 : index
    %c0_25 = arith.constant 0 : index
    %c0_26 = arith.constant 0 : index
    %35 = vector.load %arg8[%c0_24, %c0_25, %c0_26] : memref<1x64x128xf32, #tpu.memory_space<vmem>>, vector<1x64x128xf32>
    %36 = vector.shape_cast %35 : vector<1x64x128xf32> to vector<64x128xf32>
    %37 = vector.shape_cast %34 : vector<64x128xf32> to vector<1x64x128xf32>
    tpu.vector_store %arg8[%c0_24, %c0_25, %c0_26], %37 {strides = array<i32>} : memref<1x64x128xf32, #tpu.memory_space<vmem>>, vector<1x64x128xf32>,
    return
  }
  func.func @transform_0(%arg0: i32) -> (i32, i32, i32) {
    %c0_i32 = arith.constant 0 : i32
    %c0_i32_0 = arith.constant 0 : i32
    %c0_i32_1 = arith.constant 0 : i32
    return %arg0, %c0_i32, %c0_i32_0 : i32, i32, i32
  }
  func.func @transform_1(%arg0: i32) -> (i32, i32) {
    %c0_i32 = arith.constant 0 : i32
    %c0_i32_0 = arith.constant 0 : i32
    %c0_i32_1 = arith.constant 0 : i32
    return %c0_i32, %c0_i32_0 : i32, i32
  }
  func.func @transform_2(%arg0: i32) -> (i32, i32, i32) {
    %c0_i32 = arith.constant 0 : i32
    %c0_i32_0 = arith.constant 0 : i32
    %c0_i32_1 = arith.constant 0 : i32
    return %arg0, %c0_i32, %c0_i32_0 : i32, i32, i32
  }
  func.func @transform_3(%arg0: i32) -> (i32, i32) {
    %c0_i32 = arith.constant 0 : i32
    %c0_i32_0 = arith.constant 0 : i32
    %c0_i32_1 = arith.constant 0 : i32
    return %c0_i32, %c0_i32_0 : i32, i32
  }
  func.func @transform_4(%arg0: i32) -> (i32, i32) {
    %c0_i32 = arith.constant 0 : i32
    %c0_i32_0 = arith.constant 0 : i32
    %c0_i32_1 = arith.constant 0 : i32
    return %c0_i32, %c0_i32_0 : i32, i32
  }
  func.func @transform_5(%arg0: i32) -> (i32, i32) {
    %c0_i32 = arith.constant 0 : i32
    %c0_i32_0 = arith.constant 0 : i32
    %c0_i32_1 = arith.constant 0 : i32
    return %c0_i32, %c0_i32_0 : i32, i32
  }
  func.func @transform_6(%arg0: i32) -> (i32, i32) {
    %c0_i32 = arith.constant 0 : i32
    %c0_i32_0 = arith.constant 0 : i32
    %c0_i32_1 = arith.constant 0 : i32
    return %c0_i32, %c0_i32_0 : i32, i32
  }
  func.func @transform_7(%arg0: i32) -> (i32, i32, i32) {
    %c0_i32 = arith.constant 0 : i32
    %c0_i32_0 = arith.constant 0 : i32
    %c0_i32_1 = arith.constant 0 : i32
    return %arg0, %c0_i32, %c0_i32_0 : i32, i32, i32
  }
}

</mosaic_0001>

<llo_original>
// kernel: bottleneck_block_forward.4
$region0: #{bottleneck_block_forward.4}
  #allocation0 [shape = 'u32[]', space=smem, size = 0x4, offset = 0x4, fixed_abs, tag = 'smem constant byte address 0x4 - core index']
  #allocation1 [shape = 'u32[144,128]{1,0:T(1,128)}', space=vmem, size = 0x12000, scoped, tag = 'internal scratch']
  %s0 = inlined_call_operand.vmem [shape: bf16[512,128], index: 0, kind: input, shape index: {}]
  %s1 = inlined_call_operand.vmem [shape: bf16[128,128], index: 1, kind: input, shape index: {}]
  %s2 = inlined_call_operand.vmem [shape: bf16[512,128], index: 2, kind: output, shape index: {0}]
  %s3 = inlined_call_operand.vmem [shape: f32[1,8,128], index: 3, kind: output, shape index: {1}]
  %4 = xla_tuple %s2, %s3
  %s5 = sld [smem:[#allocation0]]
  $region26: #{bottleneck_block_forward.4} parent=0
    _
  %s7 = ssub.s32 1, %s5
  %s8 = scalar_select 0, %s7, %s5
  // Predicated region
  $region2: #{bottleneck_block_forward.4} parent=0 // pred_check
    _
  $region3: #{bottleneck_block_forward.4} parent=0 // pred_check_branch
    %10 = sbr.rel (0) target = $region5
  $region4: #{bottleneck_block_forward.4} parent=0 // pred_region
    _
  $region5: #{bottleneck_block_forward.4} parent=0 // pred_fallthru
    _
  // Predicated region
  $region6: #{bottleneck_block_forward.4} parent=0 // pred_check
    _
  $region7: #{bottleneck_block_forward.4} parent=0 // pred_check_branch
    %12 = sbr.rel (0) target = $region9
  $region8: #{bottleneck_block_forward.4} parent=0 // pred_region
    _
  $region9: #{bottleneck_block_forward.4} parent=0 // pred_fallthru
    _
  %v14 = vld [vmem:[%s0] sm:$0xf]
  %v15 = vld [vmem:[%s0 + $0x4] sm:$0xf]
  %v16 = vld [vmem:[%s0 + $0x8] sm:$0xf]
  %v17 = vld [vmem:[%s0 + $0xc] sm:$0xf]
  %v18 = vld [vmem:[%s0 + $0x10] sm:$0xf]
  %v19 = vld [vmem:[%s0 + $0x14] sm:$0xf]
  %v20 = vld [vmem:[%s0 + $0x18] sm:$0xf]
  %v21 = vld [vmem:[%s0 + $0x1c] sm:$0xf]
  %v22 = vld [vmem:[%s0 + $0x20] sm:$0xf]
  %v23 = vld [vmem:[%s0 + $0x24] sm:$0xf]
  %v24 = vld [vmem:[%s0 + $0x28] sm:$0xf]
  %v25 = vld [vmem:[%s0 + $0x2c] sm:$0xf]
  %v26 = vld [vmem:[%s0 + $0x30] sm:$0xf]
  %v27 = vld [vmem:[%s0 + $0x34] sm:$0xf]
  %v28 = vld [vmem:[%s0 + $0x38] sm:$0xf]
  %v29 = vld [vmem:[%s0 + $0x3c] sm:$0xf]
  %v30 = vld [vmem:[%s0 + $0x40] sm:$0xf]
  %v31 = vld [vmem:[%s0 + $0x44] sm:$0xf]
  %v32 = vld [vmem:[%s0 + $0x48] sm:$0xf]
  %v33 = vld [vmem:[%s0 + $0x4c] sm:$0xf]
  %v34 = vld [vmem:[%s0 + $0x50] sm:$0xf]
  %v35 = vld [vmem:[%s0 + $0x54] sm:$0xf]
  %v36 = vld [vmem:[%s0 + $0x58] sm:$0xf]
  %v37 = vld [vmem:[%s0 + $0x5c] sm:$0xf]
  %v38 = vld [vmem:[%s0 + $0x60] sm:$0xf]
  %v39 = vld [vmem:[%s0 + $0x64] sm:$0xf]
  %v40 = vld [vmem:[%s0 + $0x68] sm:$0xf]
  %v41 = vld [vmem:[%s0 + $0x6c] sm:$0xf]
  %v42 = vld [vmem:[%s0 + $0x70] sm:$0xf]
  %v43 = vld [vmem:[%s0 + $0x74] sm:$0xf]
  %v44 = vld [vmem:[%s0 + $0x78] sm:$0xf]
  %v45 = vld [vmem:[%s0 + $0x7c] sm:$0xf]
  %v46 = vld [vmem:[%s0 + $0x80] sm:$0xf]
  %v47 = vld [vmem:[%s0 + $0x84] sm:$0xf]
  %v48 = vld [vmem:[%s0 + $0x88] sm:$0xf]
  %v49 = vld [vmem:[%s0 + $0x8c] sm:$0xf]
  %v50 = vld [vmem:[%s0 + $0x90] sm:$0xf]
  %v51 = vld [vmem:[%s0 + $0x94] sm:$0xf]
  %v52 = vld [vmem:[%s0 + $0x98] sm:$0xf]
  %v53 = vld [vmem:[%s0 + $0x9c] sm:$0xf]
  %v54 = vld [vmem:[%s0 + $0xa0] sm:$0xf]
  %v55 = vld [vmem:[%s0 + $0xa4] sm:$0xf]
  %v56 = vld [vmem:[%s0 + $0xa8] sm:$0xf]
  %v57 = vld [vmem:[%s0 + $0xac] sm:$0xf]
  %v58 = vld [vmem:[%s0 + $0xb0] sm:$0xf]
  %v59 = vld [vmem:[%s0 + $0xb4] sm:$0xf]
  %v60 = vld [vmem:[%s0 + $0xb8] sm:$0xf]
  %v61 = vld [vmem:[%s0 + $0xbc] sm:$0xf]
  %v62 = vld [vmem:[%s0 + $0xc0] sm:$0xf]
  %v63 = vld [vmem:[%s0 + $0xc4] sm:$0xf]
  %v64 = vld [vmem:[%s0 + $0xc8] sm:$0xf]
  %v65 = vld [vmem:[%s0 + $0xcc] sm:$0xf]
  %v66 = vld [vmem:[%s0 + $0xd0] sm:$0xf]
  %v67 = vld [vmem:[%s0 + $0xd4] sm:$0xf]
  %v68 = vld [vmem:[%s0 + $0xd8] sm:$0xf]
  %v69 = vld [vmem:[%s0 + $0xdc] sm:$0xf]
  %v70 = vld [vmem:[%s0 + $0xe0] sm:$0xf]
  %v71 = vld [vmem:[%s0 + $0xe4] sm:$0xf]
  %v72 = vld [vmem:[%s0 + $0xe8] sm:$0xf]
  %v73 = vld [vmem:[%s0 + $0xec] sm:$0xf]
  %v74 = vld [vmem:[%s0 + $0xf0] sm:$0xf]
  %v75 = vld [vmem:[%s0 + $0xf4] sm:$0xf]
  %v76 = vld [vmem:[%s0 + $0xf8] sm:$0xf]
  %v77 = vld [vmem:[%s0 + $0xfc] sm:$0xf]
  %v78 = vld [vmem:[%s1] sm:$0xf]
  %v79 = vld [vmem:[%s1 + $0x4] sm:$0xf]
  %v80 = vld [vmem:[%s1 + $0x8] sm:$0xf]
  %v81 = vld [vmem:[%s1 + $0xc] sm:$0xf]
  %v82 = vld [vmem:[%s1 + $0x10] sm:$0xf]
  %v83 = vld [vmem:[%s1 + $0x14] sm:$0xf]
  %v84 = vld [vmem:[%s1 + $0x18] sm:$0xf]
  %v85 = vld [vmem:[%s1 + $0x1c] sm:$0xf]
  %v86 = vld [vmem:[%s1 + $0x20] sm:$0xf]
  %v87 = vld [vmem:[%s1 + $0x24] sm:$0xf]
  %v88 = vld [vmem:[%s1 + $0x28] sm:$0xf]
  %v89 = vld [vmem:[%s1 + $0x2c] sm:$0xf]
  %v90 = vld [vmem:[%s1 + $0x30] sm:$0xf]
  %v91 = vld [vmem:[%s1 + $0x34] sm:$0xf]
  %v92 = vld [vmem:[%s1 + $0x38] sm:$0xf]
  %v93 = vld [vmem:[%s1 + $0x3c] sm:$0xf]
  %v158 = vunpack.c.l.b16 %v14
  %v159 = vunpack.c.l.b16 %v15
  %v160 = vunpack.c.l.b16 %v16
  %v161 = vunpack.c.l.b16 %v17
  %v162 = vunpack.c.l.b16 %v18
  %v163 = vunpack.c.l.b16 %v19
  %v164 = vunpack.c.l.b16 %v20
  %v165 = vunpack.c.l.b16 %v21
  %v166 = vunpack.c.l.b16 %v22
  %v167 = vunpack.c.l.b16 %v23
  %v168 = vunpack.c.l.b16 %v24
  %v169 = vunpack.c.l.b16 %v25
  %v170 = vunpack.c.l.b16 %v26
  %v171 = vunpack.c.l.b16 %v27
  %v172 = vunpack.c.l.b16 %v28
  %v173 = vunpack.c.l.b16 %v29
  %v174 = vunpack.c.l.b16 %v30
  %v175 = vunpack.c.l.b16 %v31
  %v176 = vunpack.c.l.b16 %v32
  %v177 = vunpack.c.l.b16 %v33
  %v178 = vunpack.c.l.b16 %v34
  %v179 = vunpack.c.l.b16 %v35
  %v180 = vunpack.c.l.b16 %v36
  %v181 = vunpack.c.l.b16 %v37
  %v182 = vunpack.c.l.b16 %v38
  %v183 = vunpack.c.l.b16 %v39
  %v184 = vunpack.c.l.b16 %v40
  %v185 = vunpack.c.l.b16 %v41
  %v186 = vunpack.c.l.b16 %v42
  %v187 = vunpack.c.l.b16 %v43
  %v188 = vunpack.c.l.b16 %v44
  %v189 = vunpack.c.l.b16 %v45
  %v190 = vunpack.c.l.b16 %v46
  %v191 = vunpack.c.l.b16 %v47
  %v192 = vunpack.c.l.b16 %v48
  %v193 = vunpack.c.l.b16 %v49
  %v194 = vunpack.c.l.b16 %v50
  %v195 = vunpack.c.l.b16 %v51
  %v196 = vunpack.c.l.b16 %v52
  %v197 = vunpack.c.l.b16 %v53
  %v198 = vunpack.c.l.b16 %v54
  %v199 = vunpack.c.l.b16 %v55
  %v200 = vunpack.c.l.b16 %v56
  %v201 = vunpack.c.l.b16 %v57
  %v202 = vunpack.c.l.b16 %v58
  %v203 = vunpack.c.l.b16 %v59
  %v204 = vunpack.c.l.b16 %v60
  %v205 = vunpack.c.l.b16 %v61
  %v206 = vunpack.c.l.b16 %v62
  %v207 = vunpack.c.l.b16 %v63
  %v208 = vunpack.c.l.b16 %v64
  %v209 = vunpack.c.l.b16 %v65
  %v210 = vunpack.c.l.b16 %v66
  %v211 = vunpack.c.l.b16 %v67
  %v212 = vunpack.c.l.b16 %v68
  %v213 = vunpack.c.l.b16 %v69
  %v214 = vunpack.c.l.b16 %v70
  %v215 = vunpack.c.l.b16 %v71
  %v216 = vunpack.c.l.b16 %v72
  %v217 = vunpack.c.l.b16 %v73
  %v218 = vunpack.c.l.b16 %v74
  %v219 = vunpack.c.l.b16 %v75
  %v220 = vunpack.c.l.b16 %v76
  %v221 = vunpack.c.l.b16 %v77
  %v222 = vpack.c.b16 %v159, %v158
  %v223 = vpack.c.b16 %v161, %v160
  %v224 = vpack.c.b16 %v163, %v162
  %v225 = vpack.c.b16 %v165, %v164
  %v226 = vpack.c.b16 %v167, %v166
  %v227 = vpack.c.b16 %v169, %v168
  %v228 = vpack.c.b16 %v171, %v170
  %v229 = vpack.c.b16 %v173, %v172
  %v230 = vpack.c.b16 %v175, %v174
  %v231 = vpack.c.b16 %v177, %v176
  %v232 = vpack.c.b16 %v179, %v178
  %v233 = vpack.c.b16 %v181, %v180
  %v234 = vpack.c.b16 %v183, %v182
  %v235 = vpack.c.b16 %v185, %v184
  %v236 = vpack.c.b16 %v187, %v186
  %v237 = vpack.c.b16 %v189, %v188
  %v238 = vpack.c.b16 %v191, %v190
  %v239 = vpack.c.b16 %v193, %v192
  %v240 = vpack.c.b16 %v195, %v194
  %v241 = vpack.c.b16 %v197, %v196
  %v242 = vpack.c.b16 %v199, %v198
  %v243 = vpack.c.b16 %v201, %v200
  %v244 = vpack.c.b16 %v203, %v202
  %v245 = vpack.c.b16 %v205, %v204
  %v246 = vpack.c.b16 %v207, %v206
  %v247 = vpack.c.b16 %v209, %v208
  %v248 = vpack.c.b16 %v211, %v210
  %v249 = vpack.c.b16 %v213, %v212
  %v250 = vpack.c.b16 %v215, %v214
  %v251 = vpack.c.b16 %v217, %v216
  %v252 = vpack.c.b16 %v219, %v218
  %v253 = vpack.c.b16 %v221, %v220
  %v302 = vunpack.c.l.b16 %v78
  %v303 = vunpack.c.l.b16 %v79
  %v304 = vunpack.c.l.b16 %v80
  %v305 = vunpack.c.l.b16 %v81
  %v306 = vunpack.c.l.b16 %v82
  %v307 = vunpack.c.l.b16 %v83
  %v308 = vunpack.c.l.b16 %v84
  %v309 = vunpack.c.l.b16 %v85
  %v310 = vunpack.c.l.b16 %v86
  %v311 = vunpack.c.l.b16 %v87
  %v312 = vunpack.c.l.b16 %v88
  %v313 = vunpack.c.l.b16 %v89
  %v314 = vunpack.c.l.b16 %v90
  %v315 = vunpack.c.l.b16 %v91
  %v316 = vunpack.c.l.b16 %v92
  %v317 = vunpack.c.l.b16 %v93
  %v318 = vpack.c.b16 %v303, %v302
  %v319 = vpack.c.b16 %v305, %v304
  %v320 = vpack.c.b16 %v307, %v306
  %v321 = vpack.c.b16 %v309, %v308
  %v322 = vpack.c.b16 %v311, %v310
  %v323 = vpack.c.b16 %v313, %v312
  %v324 = vpack.c.b16 %v315, %v314
  %v325 = vpack.c.b16 %v317, %v316
  %334 = vmatprep.subr.bf16.mxu0 0
  %335 = vmatpush1.bf16.msra.mxu0 %v325
  %336 = vmatprep.subr.bf16.mxu0 0
  %337 = vmatpush1.bf16.msra.mxu0 %v324
  %338 = vmatprep.subr.bf16.mxu0 0
  %339 = vmatpush1.bf16.msra.mxu0 %v323
  %340 = vmatprep.subr.bf16.mxu0 0
  %341 = vmatpush1.bf16.msra.mxu0 %v322
  %342 = vmatprep.subr.bf16.mxu0 0
  %343 = vmatpush1.bf16.msra.mxu0 %v321
  %344 = vmatprep.subr.bf16.mxu0 0
  %345 = vmatpush1.bf16.msra.mxu0 %v320
  %346 = vmatprep.subr.bf16.mxu0 0
  %347 = vmatpush1.bf16.msra.mxu0 %v319
  %348 = vmatprep.subr.bf16.mxu0 0
  %349 = vmatpush1.bf16.msra.mxu0 %v318
  %350 = vmatprep.subr.bf16.mxu0 0
  %351 = vmatpush2.bf16.msra.mxu0 0
  %352 = vmatprep.subr.bf16.mxu0 0
  %353 = vmatpush2.bf16.msra.mxu0 0
  %354 = vmatprep.subr.bf16.mxu0 0
  %355 = vmatpush2.bf16.msra.mxu0 0
  %356 = vmatprep.subr.bf16.mxu0 0
  %357 = vmatpush2.bf16.msra.mxu0 0
  %358 = vmatprep.subr.bf16.mxu0 0
  %359 = vmatpush2.bf16.msra.mxu0 0
  %360 = vmatprep.subr.bf16.mxu0 0
  %361 = vmatpush2.bf16.msra.mxu0 0
  %362 = vmatprep.subr.bf16.mxu0 0
  %363 = vmatpush2.bf16.msra.mxu0 0
  %364 = vmatprep.subr.bf16.mxu0 0
  %365 = vmatpush2.bf16.msra.mxu0 0
  %366 = vmatprep.mubr.bf16.mxu0 0
  %367 = vmatmul.mubr.bf16.gmra.mxu0 %v222
  %v368 = vpop.f32.mrf.mxu0
  %v369 = vadd.f32 0.0, %v368
  %v370 = vpop.f32.mrf.mxu0
  %v371 = vpop.f32.mrf.mxu0
  %v372 = vadd.f32 0.0, %v371
  %v373 = vpop.f32.mrf.mxu0
  %374 = vmatprep.mubr.bf16.mxu0 0
  %375 = vmatmul.mubr.bf16.gmra.mxu0 %v223
  %v376 = vpop.f32.mrf.mxu0
  %v377 = vadd.f32 0.0, %v376
  %v378 = vpop.f32.mrf.mxu0
  %v379 = vpop.f32.mrf.mxu0
  %v380 = vadd.f32 0.0, %v379
  %v381 = vpop.f32.mrf.mxu0
  %382 = vmatprep.mubr.bf16.mxu0 0
  %383 = vmatmul.mubr.bf16.gmra.mxu0 %v224
  %v384 = vpop.f32.mrf.mxu0
  %v385 = vadd.f32 0.0, %v384
  %v386 = vpop.f32.mrf.mxu0
  %v387 = vpop.f32.mrf.mxu0
  %v388 = vadd.f32 0.0, %v387
  %v389 = vpop.f32.mrf.mxu0
  %390 = vmatprep.mubr.bf16.mxu0 0
  %391 = vmatmul.mubr.bf16.gmra.mxu0 %v225
  %v392 = vpop.f32.mrf.mxu0
  %v393 = vadd.f32 0.0, %v392
  %v394 = vpop.f32.mrf.mxu0
  %v395 = vpop.f32.mrf.mxu0
  %v396 = vadd.f32 0.0, %v395
  %v397 = vpop.f32.mrf.mxu0
  %398 = vmatprep.mubr.bf16.mxu0 0
  %399 = vmatmul.mubr.bf16.gmra.mxu0 %v226
  %v400 = vpop.f32.mrf.mxu0
  %v401 = vadd.f32 0.0, %v400
  %v402 = vpop.f32.mrf.mxu0
  %v403 = vpop.f32.mrf.mxu0
  %v404 = vadd.f32 0.0, %v403
  %v405 = vpop.f32.mrf.mxu0
  %406 = vmatprep.mubr.bf16.mxu0 0
  %407 = vmatmul.mubr.bf16.gmra.mxu0 %v227
  %v408 = vpop.f32.mrf.mxu0
  %v409 = vadd.f32 0.0, %v408
  %v410 = vpop.f32.mrf.mxu0
  %v411 = vpop.f32.mrf.mxu0
  %v412 = vadd.f32 0.0, %v411
  %v413 = vpop.f32.mrf.mxu0
  %414 = vmatprep.mubr.bf16.mxu0 0
  %415 = vmatmul.mubr.bf16.gmra.mxu0 %v228
  %v416 = vpop.f32.mrf.mxu0
  %v417 = vadd.f32 0.0, %v416
  %v418 = vpop.f32.mrf.mxu0
  %v419 = vpop.f32.mrf.mxu0
  %v420 = vadd.f32 0.0, %v419
  %v421 = vpop.f32.mrf.mxu0
  %422 = vmatprep.mubr.bf16.mxu0 0
  %423 = vmatmul.mubr.bf16.gmra.mxu0 %v229
  %v424 = vpop.f32.mrf.mxu0
  %v425 = vadd.f32 0.0, %v424
  %v426 = vpop.f32.mrf.mxu0
  %v427 = vpop.f32.mrf.mxu0
  %v428 = vadd.f32 0.0, %v427
  %v429 = vpop.f32.mrf.mxu0
  %430 = vmatprep.mubr.bf16.mxu0 0
  %431 = vmatmul.mubr.bf16.gmra.mxu0 %v230
  %v432 = vpop.f32.mrf.mxu0
  %v433 = vadd.f32 0.0, %v432
  %v434 = vpop.f32.mrf.mxu0
  %v435 = vpop.f32.mrf.mxu0
  %v436 = vadd.f32 0.0, %v435
  %v437 = vpop.f32.mrf.mxu0
  %438 = vmatprep.mubr.bf16.mxu0 0
  %439 = vmatmul.mubr.bf16.gmra.mxu0 %v231
  %v440 = vpop.f32.mrf.mxu0
  %v441 = vadd.f32 0.0, %v440
  %v442 = vpop.f32.mrf.mxu0
  %v443 = vpop.f32.mrf.mxu0
  %v444 = vadd.f32 0.0, %v443
  %v445 = vpop.f32.mrf.mxu0
  %446 = vmatprep.mubr.bf16.mxu0 0
  %447 = vmatmul.mubr.bf16.gmra.mxu0 %v232
  %v448 = vpop.f32.mrf.mxu0
  %v449 = vadd.f32 0.0, %v448
  %v450 = vpop.f32.mrf.mxu0
  %v451 = vpop.f32.mrf.mxu0
  %v452 = vadd.f32 0.0, %v451
  %v453 = vpop.f32.mrf.mxu0
  %454 = vmatprep.mubr.bf16.mxu0 0
  %455 = vmatmul.mubr.bf16.gmra.mxu0 %v233
  %v456 = vpop.f32.mrf.mxu0
  %v457 = vadd.f32 0.0, %v456
  %v458 = vpop.f32.mrf.mxu0
  %v459 = vpop.f32.mrf.mxu0
  %v460 = vadd.f32 0.0, %v459
  %v461 = vpop.f32.mrf.mxu0
  %462 = vmatprep.mubr.bf16.mxu0 0
  %463 = vmatmul.mubr.bf16.gmra.mxu0 %v234
  %v464 = vpop.f32.mrf.mxu0
  %v465 = vadd.f32 0.0, %v464
  %v466 = vpop.f32.mrf.mxu0
  %v467 = vpop.f32.mrf.mxu0
  %v468 = vadd.f32 0.0, %v467
  %v469 = vpop.f32.mrf.mxu0
  %470 = vmatprep.mubr.bf16.mxu0 0
  %471 = vmatmul.mubr.bf16.gmra.mxu0 %v235
  %v472 = vpop.f32.mrf.mxu0
  %v473 = vadd.f32 0.0, %v472
  %v474 = vpop.f32.mrf.mxu0
  %v475 = vpop.f32.mrf.mxu0
  %v476 = vadd.f32 0.0, %v475
  %v477 = vpop.f32.mrf.mxu0
  %478 = vmatprep.mubr.bf16.mxu0 0
  %479 = vmatmul.mubr.bf16.gmra.mxu0 %v236
  %v480 = vpop.f32.mrf.mxu0
  %v481 = vadd.f32 0.0, %v480
  %v482 = vpop.f32.mrf.mxu0
  %v483 = vpop.f32.mrf.mxu0
  %v484 = vadd.f32 0.0, %v483
  %v485 = vpop.f32.mrf.mxu0
  %486 = vmatprep.mubr.bf16.mxu0 0
  %487 = vmatmul.mubr.bf16.gmra.mxu0 %v237
  %v488 = vpop.f32.mrf.mxu0
  %v489 = vadd.f32 0.0, %v488
  %v490 = vpop.f32.mrf.mxu0
  %v491 = vpop.f32.mrf.mxu0
  %v492 = vadd.f32 0.0, %v491
  %v493 = vpop.f32.mrf.mxu0
  %494 = vmatprep.mubr.bf16.mxu0 0
  %495 = vmatmul.mubr.bf16.gmra.mxu0 %v238
  %v496 = vpop.f32.mrf.mxu0
  %v497 = vadd.f32 0.0, %v496
  %v498 = vpop.f32.mrf.mxu0
  %v499 = vpop.f32.mrf.mxu0
  %v500 = vadd.f32 0.0, %v499
  %v501 = vpop.f32.mrf.mxu0
  %502 = vmatprep.mubr.bf16.mxu0 0
  %503 = vmatmul.mubr.bf16.gmra.mxu0 %v239
  %v504 = vpop.f32.mrf.mxu0
  %v505 = vadd.f32 0.0, %v504
  %v506 = vpop.f32.mrf.mxu0
  %v507 = vpop.f32.mrf.mxu0
  %v508 = vadd.f32 0.0, %v507
  %v509 = vpop.f32.mrf.mxu0
  %510 = vmatprep.mubr.bf16.mxu0 0
  %511 = vmatmul.mubr.bf16.gmra.mxu0 %v240
  %v512 = vpop.f32.mrf.mxu0
  %v513 = vadd.f32 0.0, %v512
  %v514 = vpop.f32.mrf.mxu0
  %v515 = vpop.f32.mrf.mxu0
  %v516 = vadd.f32 0.0, %v515
  %v517 = vpop.f32.mrf.mxu0
  %518 = vmatprep.mubr.bf16.mxu0 0
  %519 = vmatmul.mubr.bf16.gmra.mxu0 %v241
  %v520 = vpop.f32.mrf.mxu0
  %v521 = vadd.f32 0.0, %v520
  %v522 = vpop.f32.mrf.mxu0
  %v523 = vpop.f32.mrf.mxu0
  %v524 = vadd.f32 0.0, %v523
  %v525 = vpop.f32.mrf.mxu0
  %526 = vmatprep.mubr.bf16.mxu0 0
  %527 = vmatmul.mubr.bf16.gmra.mxu0 %v242
  %v528 = vpop.f32.mrf.mxu0
  %v529 = vadd.f32 0.0, %v528
  %v530 = vpop.f32.mrf.mxu0
  %v531 = vpop.f32.mrf.mxu0
  %v532 = vadd.f32 0.0, %v531
  %v533 = vpop.f32.mrf.mxu0
  %534 = vmatprep.mubr.bf16.mxu0 0
  %535 = vmatmul.mubr.bf16.gmra.mxu0 %v243
  %v536 = vpop.f32.mrf.mxu0
  %v537 = vadd.f32 0.0, %v536
  %v538 = vpop.f32.mrf.mxu0
  %v539 = vpop.f32.mrf.mxu0
  %v540 = vadd.f32 0.0, %v539
  %v541 = vpop.f32.mrf.mxu0
  %542 = vmatprep.mubr.bf16.mxu0 0
  %543 = vmatmul.mubr.bf16.gmra.mxu0 %v244
  %v544 = vpop.f32.mrf.mxu0
  %v545 = vadd.f32 0.0, %v544
  %v546 = vpop.f32.mrf.mxu0
  %v547 = vpop.f32.mrf.mxu0
  %v548 = vadd.f32 0.0, %v547
  %v549 = vpop.f32.mrf.mxu0
  %550 = vmatprep.mubr.bf16.mxu0 0
  %551 = vmatmul.mubr.bf16.gmra.mxu0 %v245
  %v552 = vpop.f32.mrf.mxu0
  %v553 = vadd.f32 0.0, %v552
  %v554 = vpop.f32.mrf.mxu0
  %v555 = vpop.f32.mrf.mxu0
  %v556 = vadd.f32 0.0, %v555
  %v557 = vpop.f32.mrf.mxu0
  %558 = vmatprep.mubr.bf16.mxu0 0
  %559 = vmatmul.mubr.bf16.gmra.mxu0 %v246
  %v560 = vpop.f32.mrf.mxu0
  %v561 = vadd.f32 0.0, %v560
  %v562 = vpop.f32.mrf.mxu0
  %v563 = vpop.f32.mrf.mxu0
  %v564 = vadd.f32 0.0, %v563
  %v565 = vpop.f32.mrf.mxu0
  %566 = vmatprep.mubr.bf16.mxu0 0
  %567 = vmatmul.mubr.bf16.gmra.mxu0 %v247
  %v568 = vpop.f32.mrf.mxu0
  %v569 = vadd.f32 0.0, %v568
  %v570 = vpop.f32.mrf.mxu0
  %v571 = vpop.f32.mrf.mxu0
  %v572 = vadd.f32 0.0, %v571
  %v573 = vpop.f32.mrf.mxu0
  %574 = vmatprep.mubr.bf16.mxu0 0
  %575 = vmatmul.mubr.bf16.gmra.mxu0 %v248
  %v576 = vpop.f32.mrf.mxu0
  %v577 = vadd.f32 0.0, %v576
  %v578 = vpop.f32.mrf.mxu0
  %v579 = vpop.f32.mrf.mxu0
  %v580 = vadd.f32 0.0, %v579
  %v581 = vpop.f32.mrf.mxu0
  %582 = vmatprep.mubr.bf16.mxu0 0
  %583 = vmatmul.mubr.bf16.gmra.mxu0 %v249
  %v584 = vpop.f32.mrf.mxu0
  %v585 = vadd.f32 0.0, %v584
  %v586 = vpop.f32.mrf.mxu0
  %v587 = vpop.f32.mrf.mxu0
  %v588 = vadd.f32 0.0, %v587
  %v589 = vpop.f32.mrf.mxu0
  %590 = vmatprep.mubr.bf16.mxu0 0
  %591 = vmatmul.mubr.bf16.gmra.mxu0 %v250
  %v592 = vpop.f32.mrf.mxu0
  %v593 = vadd.f32 0.0, %v592
  %v594 = vpop.f32.mrf.mxu0
  %v595 = vpop.f32.mrf.mxu0
  %v596 = vadd.f32 0.0, %v595
  %v597 = vpop.f32.mrf.mxu0
  %598 = vmatprep.mubr.bf16.mxu0 0
  %599 = vmatmul.mubr.bf16.gmra.mxu0 %v251
  %v600 = vpop.f32.mrf.mxu0
  %v601 = vadd.f32 0.0, %v600
  %v602 = vpop.f32.mrf.mxu0
  %v603 = vpop.f32.mrf.mxu0
  %v604 = vadd.f32 0.0, %v603
  %v605 = vpop.f32.mrf.mxu0
  %606 = vmatprep.mubr.bf16.mxu0 0
  %607 = vmatmul.mubr.bf16.gmra.mxu0 %v252
  %v608 = vpop.f32.mrf.mxu0
  %v609 = vadd.f32 0.0, %v608
  %v610 = vpop.f32.mrf.mxu0
  %v611 = vpop.f32.mrf.mxu0
  %v612 = vadd.f32 0.0, %v611
  %v613 = vpop.f32.mrf.mxu0
  %614 = vmatprep.mubr.bf16.mxu0 0
  %615 = vmatmul.mubr.bf16.gmra.mxu0 %v253
  %v616 = vpop.f32.mrf.mxu0
  %v617 = vadd.f32 0.0, %v616
  %v618 = vpop.f32.mrf.mxu0
  %v619 = vpop.f32.mrf.mxu0
  %v620 = vadd.f32 0.0, %v619
  %v621 = vpop.f32.mrf.mxu0
  %622 = vdwg.mxu0
  %v623 = vpack.c.bf16 %v372, %v369
  %v624 = vpack.c.bf16 %v380, %v377
  %v625 = vpack.c.bf16 %v388, %v385
  %v626 = vpack.c.bf16 %v396, %v393
  %v627 = vpack.c.bf16 %v404, %v401
  %v628 = vpack.c.bf16 %v412, %v409
  %v629 = vpack.c.bf16 %v420, %v417
  %v630 = vpack.c.bf16 %v428, %v425
  %v631 = vpack.c.bf16 %v436, %v433
  %v632 = vpack.c.bf16 %v444, %v441
  %v633 = vpack.c.bf16 %v452, %v449
  %v634 = vpack.c.bf16 %v460, %v457
  %v635 = vpack.c.bf16 %v468, %v465
  %v636 = vpack.c.bf16 %v476, %v473
  %v637 = vpack.c.bf16 %v484, %v481
  %v638 = vpack.c.bf16 %v492, %v489
  %v639 = vpack.c.bf16 %v500, %v497
  %v640 = vpack.c.bf16 %v508, %v505
  %v641 = vpack.c.bf16 %v516, %v513
  %v642 = vpack.c.bf16 %v524, %v521
  %v643 = vpack.c.bf16 %v532, %v529
  %v644 = vpack.c.bf16 %v540, %v537
  %v645 = vpack.c.bf16 %v548, %v545
  %v646 = vpack.c.bf16 %v556, %v553
  %v647 = vpack.c.bf16 %v564, %v561
  %v648 = vpack.c.bf16 %v572, %v569
  %v649 = vpack.c.bf16 %v580, %v577
  %v650 = vpack.c.bf16 %v588, %v585
  %v651 = vpack.c.bf16 %v596, %v593
  %v652 = vpack.c.bf16 %v604, %v601
  %v653 = vpack.c.bf16 %v612, %v609
  %v654 = vpack.c.bf16 %v620, %v617
  %v687 = vunpack.c.l.b16 %v623
  %v688 = vunpack.c.h.b16 %v623
  %v689 = vunpack.c.l.b16 %v624
  %v690 = vunpack.c.h.b16 %v624
  %v691 = vunpack.c.l.b16 %v625
  %v692 = vunpack.c.h.b16 %v625
  %v693 = vunpack.c.l.b16 %v626
  %v694 = vunpack.c.h.b16 %v626
  %v695 = vunpack.c.l.b16 %v627
  %v696 = vunpack.c.h.b16 %v627
  %v697 = vunpack.c.l.b16 %v628
  %v698 = vunpack.c.h.b16 %v628
  %v699 = vunpack.c.l.b16 %v629
  %v700 = vunpack.c.h.b16 %v629
  %v701 = vunpack.c.l.b16 %v630
  %v702 = vunpack.c.h.b16 %v630
  %v703 = vunpack.c.l.b16 %v631
  %v704 = vunpack.c.h.b16 %v631
  %v705 = vunpack.c.l.b16 %v632
  %v706 = vunpack.c.h.b16 %v632
  %v707 = vunpack.c.l.b16 %v633
  %v708 = vunpack.c.h.b16 %v633
  %v709 = vunpack.c.l.b16 %v634
  %v710 = vunpack.c.h.b16 %v634
  %v711 = vunpack.c.l.b16 %v635
  %v712 = vunpack.c.h.b16 %v635
  %v713 = vunpack.c.l.b16 %v636
  %v714 = vunpack.c.h.b16 %v636
  %v715 = vunpack.c.l.b16 %v637
  %v716 = vunpack.c.h.b16 %v637
  %v717 = vunpack.c.l.b16 %v638
  %v718 = vunpack.c.h.b16 %v638
  %v719 = vunpack.c.l.b16 %v639
  %v720 = vunpack.c.h.b16 %v639
  %v721 = vunpack.c.l.b16 %v640
  %v722 = vunpack.c.h.b16 %v640
  %v723 = vunpack.c.l.b16 %v641
  %v724 = vunpack.c.h.b16 %v641
  %v725 = vunpack.c.l.b16 %v642
  %v726 = vunpack.c.h.b16 %v642
  %v727 = vunpack.c.l.b16 %v643
  %v728 = vunpack.c.h.b16 %v643
  %v729 = vunpack.c.l.b16 %v644
  %v730 = vunpack.c.h.b16 %v644
  %v731 = vunpack.c.l.b16 %v645
  %v732 = vunpack.c.h.b16 %v645
  %v733 = vunpack.c.l.b16 %v646
  %v734 = vunpack.c.h.b16 %v646
  %v735 = vunpack.c.l.b16 %v647
  %v736 = vunpack.c.h.b16 %v647
  %v737 = vunpack.c.l.b16 %v648
  %v738 = vunpack.c.h.b16 %v648
  %v739 = vunpack.c.l.b16 %v649
  %v740 = vunpack.c.h.b16 %v649
  %v741 = vunpack.c.l.b16 %v650
  %v742 = vunpack.c.h.b16 %v650
  %v743 = vunpack.c.l.b16 %v651
  %v744 = vunpack.c.h.b16 %v651
  %v745 = vunpack.c.l.b16 %v652
  %v746 = vunpack.c.h.b16 %v652
  %v747 = vunpack.c.l.b16 %v653
  %v748 = vunpack.c.h.b16 %v653
  %v749 = vunpack.c.l.b16 %v654
  %v750 = vunpack.c.h.b16 %v654
  %v751 = vpack.c.b16 %v687, %v687
  %v752 = vpack.c.b16 %v688, %v688
  %v753 = vpack.c.b16 %v689, %v689
  %v754 = vpack.c.b16 %v690, %v690
  %v755 = vpack.c.b16 %v691, %v691
  %v756 = vpack.c.b16 %v692, %v692
  %v757 = vpack.c.b16 %v693, %v693
  %v758 = vpack.c.b16 %v694, %v694
  %v759 = vpack.c.b16 %v695, %v695
  %v760 = vpack.c.b16 %v696, %v696
  %v761 = vpack.c.b16 %v697, %v697
  %v762 = vpack.c.b16 %v698, %v698
  %v763 = vpack.c.b16 %v699, %v699
  %v764 = vpack.c.b16 %v700, %v700
  %v765 = vpack.c.b16 %v701, %v701
  %v766 = vpack.c.b16 %v702, %v702
  %v767 = vpack.c.b16 %v703, %v703
  %v768 = vpack.c.b16 %v704, %v704
  %v769 = vpack.c.b16 %v705, %v705
  %v770 = vpack.c.b16 %v706, %v706
  %v771 = vpack.c.b16 %v707, %v707
  %v772 = vpack.c.b16 %v708, %v708
  %v773 = vpack.c.b16 %v709, %v709
  %v774 = vpack.c.b16 %v710, %v710
  %v775 = vpack.c.b16 %v711, %v711
  %v776 = vpack.c.b16 %v712, %v712
  %v777 = vpack.c.b16 %v713, %v713
  %v778 = vpack.c.b16 %v714, %v714
  %v779 = vpack.c.b16 %v715, %v715
  %v780 = vpack.c.b16 %v716, %v716
  %v781 = vpack.c.b16 %v717, %v717
  %v782 = vpack.c.b16 %v718, %v718
  %v783 = vpack.c.b16 %v719, %v719
  %v784 = vpack.c.b16 %v720, %v720
  %v785 = vpack.c.b16 %v721, %v721
  %v786 = vpack.c.b16 %v722, %v722
  %v787 = vpack.c.b16 %v723, %v723
  %v788 = vpack.c.b16 %v724, %v724
  %v789 = vpack.c.b16 %v725, %v725
  %v790 = vpack.c.b16 %v726, %v726
  %v791 = vpack.c.b16 %v727, %v727
  %v792 = vpack.c.b16 %v728, %v728
  %v793 = vpack.c.b16 %v729, %v729
  %v794 = vpack.c.b16 %v730, %v730
  %v795 = vpack.c.b16 %v731, %v731
  %v796 = vpack.c.b16 %v732, %v732
  %v797 = vpack.c.b16 %v733, %v733
  %v798 = vpack.c.b16 %v734, %v734
  %v799 = vpack.c.b16 %v735, %v735
  %v800 = vpack.c.b16 %v736, %v736
  %v801 = vpack.c.b16 %v737, %v737
  %v802 = vpack.c.b16 %v738, %v738
  %v803 = vpack.c.b16 %v739, %v739
  %v804 = vpack.c.b16 %v740, %v740
  %v805 = vpack.c.b16 %v741, %v741
  %v806 = vpack.c.b16 %v742, %v742
  %v807 = vpack.c.b16 %v743, %v743
  %v808 = vpack.c.b16 %v744, %v744
  %v809 = vpack.c.b16 %v745, %v745
  %v810 = vpack.c.b16 %v746, %v746
  %v811 = vpack.c.b16 %v747, %v747
  %v812 = vpack.c.b16 %v748, %v748
  %v813 = vpack.c.b16 %v749, %v749
  %v814 = vpack.c.b16 %v750, %v750
  %879 = vst [vmem:[%s2] sm:$0xf] %v751
  %880 = vst [vmem:[%s2 + $0x4] sm:$0xf] %v752
  %881 = vst [vmem:[%s2 + $0x8] sm:$0xf] %v753
  %882 = vst [vmem:[%s2 + $0xc] sm:$0xf] %v754
  %883 = vst [vmem:[%s2 + $0x10] sm:$0xf] %v755
  %884 = vst [vmem:[%s2 + $0x14] sm:$0xf] %v756
  %885 = vst [vmem:[%s2 + $0x18] sm:$0xf] %v757
  %886 = vst [vmem:[%s2 + $0x1c] sm:$0xf] %v758
  %887 = vst [vmem:[%s2 + $0x20] sm:$0xf] %v759
  %888 = vst [vmem:[%s2 + $0x24] sm:$0xf] %v760
  %889 = vst [vmem:[%s2 + $0x28] sm:$0xf] %v761
  %890 = vst [vmem:[%s2 + $0x2c] sm:$0xf] %v762
  %891 = vst [vmem:[%s2 + $0x30] sm:$0xf] %v763
  %892 = vst [vmem:[%s2 + $0x34] sm:$0xf] %v764
  %893 = vst [vmem:[%s2 + $0x38] sm:$0xf] %v765
  %894 = vst [vmem:[%s2 + $0x3c] sm:$0xf] %v766
  %895 = vst [vmem:[%s2 + $0x40] sm:$0xf] %v767
  %896 = vst [vmem:[%s2 + $0x44] sm:$0xf] %v768
  %897 = vst [vmem:[%s2 + $0x48] sm:$0xf] %v769
  %898 = vst [vmem:[%s2 + $0x4c] sm:$0xf] %v770
  %899 = vst [vmem:[%s2 + $0x50] sm:$0xf] %v771
  %900 = vst [vmem:[%s2 + $0x54] sm:$0xf] %v772
  %901 = vst [vmem:[%s2 + $0x58] sm:$0xf] %v773
  %902 = vst [vmem:[%s2 + $0x5c] sm:$0xf] %v774
  %903 = vst [vmem:[%s2 + $0x60] sm:$0xf] %v775
  %904 = vst [vmem:[%s2 + $0x64] sm:$0xf] %v776
  %905 = vst [vmem:[%s2 + $0x68] sm:$0xf] %v777
  %906 = vst [vmem:[%s2 + $0x6c] sm:$0xf] %v778
  %907 = vst [vmem:[%s2 + $0x70] sm:$0xf] %v779
  %908 = vst [vmem:[%s2 + $0x74] sm:$0xf] %v780
  %909 = vst [vmem:[%s2 + $0x78] sm:$0xf] %v781
  %910 = vst [vmem:[%s2 + $0x7c] sm:$0xf] %v782
  %911 = vst [vmem:[%s2 + $0x80] sm:$0xf] %v783
  %912 = vst [vmem:[%s2 + $0x84] sm:$0xf] %v784
  %913 = vst [vmem:[%s2 + $0x88] sm:$0xf] %v785
  %914 = vst [vmem:[%s2 + $0x8c] sm:$0xf] %v786
  %915 = vst [vmem:[%s2 + $0x90] sm:$0xf] %v787
  %916 = vst [vmem:[%s2 + $0x94] sm:$0xf] %v788
  %917 = vst [vmem:[%s2 + $0x98] sm:$0xf] %v789
  %918 = vst [vmem:[%s2 + $0x9c] sm:$0xf] %v790
  %919 = vst [vmem:[%s2 + $0xa0] sm:$0xf] %v791
  %920 = vst [vmem:[%s2 + $0xa4] sm:$0xf] %v792
  %921 = vst [vmem:[%s2 + $0xa8] sm:$0xf] %v793
  %922 = vst [vmem:[%s2 + $0xac] sm:$0xf] %v794
  %923 = vst [vmem:[%s2 + $0xb0] sm:$0xf] %v795
  %924 = vst [vmem:[%s2 + $0xb4] sm:$0xf] %v796
  %925 = vst [vmem:[%s2 + $0xb8] sm:$0xf] %v797
  %926 = vst [vmem:[%s2 + $0xbc] sm:$0xf] %v798
  %927 = vst [vmem:[%s2 + $0xc0] sm:$0xf] %v799
  %928 = vst [vmem:[%s2 + $0xc4] sm:$0xf] %v800
  %929 = vst [vmem:[%s2 + $0xc8] sm:$0xf] %v801
  %930 = vst [vmem:[%s2 + $0xcc] sm:$0xf] %v802
  %931 = vst [vmem:[%s2 + $0xd0] sm:$0xf] %v803
  %932 = vst [vmem:[%s2 + $0xd4] sm:$0xf] %v804
  %933 = vst [vmem:[%s2 + $0xd8] sm:$0xf] %v805
  %934 = vst [vmem:[%s2 + $0xdc] sm:$0xf] %v806
  %935 = vst [vmem:[%s2 + $0xe0] sm:$0xf] %v807
  %936 = vst [vmem:[%s2 + $0xe4] sm:$0xf] %v808
  %937 = vst [vmem:[%s2 + $0xe8] sm:$0xf] %v809
  %938 = vst [vmem:[%s2 + $0xec] sm:$0xf] %v810
  %939 = vst [vmem:[%s2 + $0xf0] sm:$0xf] %v811
  %940 = vst [vmem:[%s2 + $0xf4] sm:$0xf] %v812
  %941 = vst [vmem:[%s2 + $0xf8] sm:$0xf] %v813
  %942 = vst [vmem:[%s2 + $0xfc] sm:$0xf] %v814
  %v943 = vadd.f32 %v369, %v372
  %v944 = vadd.f32 %v943, %v377
  %v945 = vadd.f32 %v944, %v380
  %v946 = vadd.f32 %v945, %v385
  %v947 = vadd.f32 %v946, %v388
  %v948 = vadd.f32 %v947, %v393
  %v949 = vadd.f32 %v948, %v396
  %v950 = vadd.f32 %v949, %v401
  %v951 = vadd.f32 %v950, %v404
  %v952 = vadd.f32 %v951, %v409
  %v953 = vadd.f32 %v952, %v412
  %v954 = vadd.f32 %v953, %v417
  %v955 = vadd.f32 %v954, %v420
  %v956 = vadd.f32 %v955, %v425
  %v957 = vadd.f32 %v956, %v428
  %v958 = vadd.f32 %v957, %v433
  %v959 = vadd.f32 %v958, %v436
  %v960 = vadd.f32 %v959, %v441
  %v961 = vadd.f32 %v960, %v444
  %v962 = vadd.f32 %v961, %v449
  %v963 = vadd.f32 %v962, %v452
  %v964 = vadd.f32 %v963, %v457
  %v965 = vadd.f32 %v964, %v460
  %v966 = vadd.f32 %v965, %v465
  %v967 = vadd.f32 %v966, %v468
  %v968 = vadd.f32 %v967, %v473
  %v969 = vadd.f32 %v968, %v476
  %v970 = vadd.f32 %v969, %v481
  %v971 = vadd.f32 %v970, %v484
  %v972 = vadd.f32 %v971, %v489
  %v973 = vadd.f32 %v972, %v492
  %v974 = vadd.f32 %v973, %v497
  %v975 = vadd.f32 %v974, %v500
  %v976 = vadd.f32 %v975, %v505
  %v977 = vadd.f32 %v976, %v508
  %v978 = vadd.f32 %v977, %v513
  %v979 = vadd.f32 %v978, %v516
  %v980 = vadd.f32 %v979, %v521
  %v981 = vadd.f32 %v980, %v524
  %v982 = vadd.f32 %v981, %v529
  %v983 = vadd.f32 %v982, %v532
  %v984 = vadd.f32 %v983, %v537
  %v985 = vadd.f32 %v984, %v540
  %v986 = vadd.f32 %v985, %v545
  %v987 = vadd.f32 %v986, %v548
  %v988 = vadd.f32 %v987, %v553
  %v989 = vadd.f32 %v988, %v556
  %v990 = vadd.f32 %v989, %v561
  %v991 = vadd.f32 %v990, %v564
  %v992 = vadd.f32 %v991, %v569
  %v993 = vadd.f32 %v992, %v572
  %v994 = vadd.f32 %v993, %v577
  %v995 = vadd.f32 %v994, %v580
  %v996 = vadd.f32 %v995, %v585
  %v997 = vadd.f32 %v996, %v588
  %v998 = vadd.f32 %v997, %v593
  %v999 = vadd.f32 %v998, %v596
  %v1000 = vadd.f32 %v999, %v601
  %v1001 = vadd.f32 %v1000, %v604
  %v1002 = vadd.f32 %v1001, %v609
  %v1003 = vadd.f32 %v1002, %v612
  %v1004 = vadd.f32 %v1003, %v617
  %v1005 = vadd.f32 %v1004, %v620
  %v1006 = vrot.slane %v1005, 4
  %v1007 = vadd.f32 %v1005, %v1006
  %v1008 = vrot.slane %v1007, 2
  %v1009 = vadd.f32 %v1007, %v1008
  %v1010 = vrot.slane %v1009, 1
  %v1011 = vadd.f32 %v1009, %v1010
  %1012 = vst [vmem:[%s3] sm:$0x1] %v1011
  %v1013 = vmul.f32 %v369, %v369
  %v1014 = vmul.f32 %v372, %v372
  %v1015 = vmul.f32 %v377, %v377
  %v1016 = vmul.f32 %v380, %v380
  %v1017 = vmul.f32 %v385, %v385
  %v1018 = vmul.f32 %v388, %v388
  %v1019 = vmul.f32 %v393, %v393
  %v1020 = vmul.f32 %v396, %v396
  %v1021 = vmul.f32 %v401, %v401
  %v1022 = vmul.f32 %v404, %v404
  %v1023 = vmul.f32 %v409, %v409
  %v1024 = vmul.f32 %v412, %v412
  %v1025 = vmul.f32 %v417, %v417
  %v1026 = vmul.f32 %v420, %v420
  %v1027 = vmul.f32 %v425, %v425
  %v1028 = vmul.f32 %v428, %v428
  %v1029 = vmul.f32 %v433, %v433
  %v1030 = vmul.f32 %v436, %v436
  %v1031 = vmul.f32 %v441, %v441
  %v1032 = vmul.f32 %v444, %v444
  %v1033 = vmul.f32 %v449, %v449
  %v1034 = vmul.f32 %v452, %v452
  %v1035 = vmul.f32 %v457, %v457
  %v1036 = vmul.f32 %v460, %v460
  %v1037 = vmul.f32 %v465, %v465
  %v1038 = vmul.f32 %v468, %v468
  %v1039 = vmul.f32 %v473, %v473
  %v1040 = vmul.f32 %v476, %v476
  %v1041 = vmul.f32 %v481, %v481
  %v1042 = vmul.f32 %v484, %v484
  %v1043 = vmul.f32 %v489, %v489
  %v1044 = vmul.f32 %v492, %v492
  %v1045 = vmul.f32 %v497, %v497
  %v1046 = vmul.f32 %v500, %v500
  %v1047 = vmul.f32 %v505, %v505
  %v1048 = vmul.f32 %v508, %v508
  %v1049 = vmul.f32 %v513, %v513
  %v1050 = vmul.f32 %v516, %v516
  %v1051 = vmul.f32 %v521, %v521
  %v1052 = vmul.f32 %v524, %v524
  %v1053 = vmul.f32 %v529, %v529
  %v1054 = vmul.f32 %v532, %v532
  %v1055 = vmul.f32 %v537, %v537
  %v1056 = vmul.f32 %v540, %v540
  %v1057 = vmul.f32 %v545, %v545
  %v1058 = vmul.f32 %v548, %v548
  %v1059 = vmul.f32 %v553, %v553
  %v1060 = vmul.f32 %v556, %v556
  %v1061 = vmul.f32 %v561, %v561
  %v1062 = vmul.f32 %v564, %v564
  %v1063 = vmul.f32 %v569, %v569
  %v1064 = vmul.f32 %v572, %v572
  %v1065 = vmul.f32 %v577, %v577
  %v1066 = vmul.f32 %v580, %v580
  %v1067 = vmul.f32 %v585, %v585
  %v1068 = vmul.f32 %v588, %v588
  %v1069 = vmul.f32 %v593, %v593
  %v1070 = vmul.f32 %v596, %v596
  %v1071 = vmul.f32 %v601, %v601
  %v1072 = vmul.f32 %v604, %v604
  %v1073 = vmul.f32 %v609, %v609
  %v1074 = vmul.f32 %v612, %v612
  %v1075 = vmul.f32 %v617, %v617
  %v1076 = vmul.f32 %v620, %v620
  %v1077 = vadd.f32 %v1013, %v1014
  %v1078 = vadd.f32 %v1077, %v1015
  %v1079 = vadd.f32 %v1078, %v1016
  %v1080 = vadd.f32 %v1079, %v1017
  %v1081 = vadd.f32 %v1080, %v1018
  %v1082 = vadd.f32 %v1081, %v1019
  %v1083 = vadd.f32 %v1082, %v1020
  %v1084 = vadd.f32 %v1083, %v1021
  %v1085 = vadd.f32 %v1084, %v1022
  %v1086 = vadd.f32 %v1085, %v1023
  %v1087 = vadd.f32 %v1086, %v1024
  %v1088 = vadd.f32 %v1087, %v1025
  %v1089 = vadd.f32 %v1088, %v1026
  %v1090 = vadd.f32 %v1089, %v1027
  %v1091 = vadd.f32 %v1090, %v1028
  %v1092 = vadd.f32 %v1091, %v1029
  %v1093 = vadd.f32 %v1092, %v1030
  %v1094 = vadd.f32 %v1093, %v1031
  %v1095 = vadd.f32 %v1094, %v1032
  %v1096 = vadd.f32 %v1095, %v1033
  %v1097 = vadd.f32 %v1096, %v1034
  %v1098 = vadd.f32 %v1097, %v1035
  %v1099 = vadd.f32 %v1098, %v1036
  %v1100 = vadd.f32 %v1099, %v1037
  %v1101 = vadd.f32 %v1100, %v1038
  %v1102 = vadd.f32 %v1101, %v1039
  %v1103 = vadd.f32 %v1102, %v1040
  %v1104 = vadd.f32 %v1103, %v1041
  %v1105 = vadd.f32 %v1104, %v1042
  %v1106 = vadd.f32 %v1105, %v1043
  %v1107 = vadd.f32 %v1106, %v1044
  %v1108 = vadd.f32 %v1107, %v1045
  %v1109 = vadd.f32 %v1108, %v1046
  %v1110 = vadd.f32 %v1109, %v1047
  %v1111 = vadd.f32 %v1110, %v1048
  %v1112 = vadd.f32 %v1111, %v1049
  %v1113 = vadd.f32 %v1112, %v1050
  %v1114 = vadd.f32 %v1113, %v1051
  %v1115 = vadd.f32 %v1114, %v1052
  %v1116 = vadd.f32 %v1115, %v1053
  %v1117 = vadd.f32 %v1116, %v1054
  %v1118 = vadd.f32 %v1117, %v1055
  %v1119 = vadd.f32 %v1118, %v1056
  %v1120 = vadd.f32 %v1119, %v1057
  %v1121 = vadd.f32 %v1120, %v1058
  %v1122 = vadd.f32 %v1121, %v1059
  %v1123 = vadd.f32 %v1122, %v1060
  %v1124 = vadd.f32 %v1123, %v1061
  %v1125 = vadd.f32 %v1124, %v1062
  %v1126 = vadd.f32 %v1125, %v1063
  %v1127 = vadd.f32 %v1126, %v1064
  %v1128 = vadd.f32 %v1127, %v1065
  %v1129 = vadd.f32 %v1128, %v1066
  %v1130 = vadd.f32 %v1129, %v1067
  %v1131 = vadd.f32 %v1130, %v1068
  %v1132 = vadd.f32 %v1131, %v1069
  %v1133 = vadd.f32 %v1132, %v1070
  %v1134 = vadd.f32 %v1133, %v1071
  %v1135 = vadd.f32 %v1134, %v1072
  %v1136 = vadd.f32 %v1135, %v1073
  %v1137 = vadd.f32 %v1136, %v1074
  %v1138 = vadd.f32 %v1137, %v1075
  %v1139 = vadd.f32 %v1138, %v1076
  %v1140 = vrot.slane %v1139, 4
  %v1141 = vadd.f32 %v1139, %v1140
  %v1142 = vrot.slane %v1141, 2
  %v1143 = vadd.f32 %v1141, %v1142
  %v1144 = vrot.slane %v1143, 1
  %v1145 = vadd.f32 %v1143, %v1144
  %1146 = vst [vmem:[%s3 + $0x1] sm:$0x1] %v1145
  // Predicated region
  $region10: #{bottleneck_block_forward.4} parent=0 // pred_check
    _
  $region11: #{bottleneck_block_forward.4} parent=0 // pred_check_branch
    %1148 = sbr.rel (0) target = $region13
  $region12: #{bottleneck_block_forward.4} parent=0 // pred_region
    _
  $region13: #{bottleneck_block_forward.4} parent=0 // pred_fallthru
    _
  // Predicated region
  $region14: #{bottleneck_block_forward.4} parent=0 // pred_check
    _
  $region15: #{bottleneck_block_forward.4} parent=0 // pred_check_branch
    %1150 = sbr.rel (0) target = $region17
  $region16: #{bottleneck_block_forward.4} parent=0 // pred_region
    _
  $region17: #{bottleneck_block_forward.4} parent=0 // pred_fallthru
    _
  // Predicated region
  $region18: #{bottleneck_block_forward.4} parent=0 // pred_check
    _
  $region19: #{bottleneck_block_forward.4} parent=0 // pred_check_branch
    %1152 = sbr.rel (0) target = $region21
  $region20: #{bottleneck_block_forward.4} parent=0 // pred_region
    _
  $region21: #{bottleneck_block_forward.4} parent=0 // pred_fallthru
    _
  // Predicated region
  $region22: #{bottleneck_block_forward.4} parent=0 // pred_check
    _
  $region23: #{bottleneck_block_forward.4} parent=0 // pred_check_branch
    %1154 = sbr.rel (0) target = $region25
  $region24: #{bottleneck_block_forward.4} parent=0 // pred_region
    _
  $region25: #{bottleneck_block_forward.4} parent=0 // pred_fallthru
    _

// kernel: bottleneck_block_forward.5
$region0: #{bottleneck_block_forward.5}
  #allocation0 [shape = 'u32[]', space=smem, size = 0x4, offset = 0x4, fixed_abs, tag = 'smem constant byte address 0x4 - core index']
  #allocation1 [shape = 'u32[144,128]{1,0:T(1,128)}', space=vmem, size = 0x12000, scoped, tag = 'internal scratch']
  #allocation2 [shape = 'f32[18,18,128]{2,1,0:T(8,128)}', space=vmem, size = 0x36000, scoped, tag = 'scratch operand']
  #allocation3 [shape = 'f32[64,1152]{1,0:T(8,128)}', space=vmem, size = 0x48000, scoped, tag = 'scratch operand']
  %s0 = inlined_call_operand.vmem [shape: bf16[2,16,16,128], index: 0, kind: input, shape index: {}]
  %s1 = inlined_call_operand.vmem [shape: f32[2,128], index: 1, kind: input, shape index: {}]
  %s2 = inlined_call_operand.vmem [shape: bf16[1152,128], index: 2, kind: input, shape index: {}]
  %s3 = inlined_call_operand.vmem [shape: bf16[2,64,128], index: 3, kind: output, shape index: {0}]
  %s4 = inlined_call_operand.vmem [shape: f32[2,8,128], index: 4, kind: output, shape index: {1}]
  %5 = xla_tuple %s3, %s4
  %s6 = sld [smem:[#allocation0]]
  $region60: #{bottleneck_block_forward.5} parent=0
    _
  %s8 = ssub.s32 1, %s6
  %s9 = scalar_select 0, %s8, %s6
  loop: start=0, step=1, limit=4
  $region2: #{bottleneck_block_forward.5} parent=0 // loop_pre_header
    _
  $region3: #{bottleneck_block_forward.5} parent=0 // loop_header
    %s11 = sphi 0, %s15
    %p12 = scmp.ge.s32.totalorder %s11, 4
    %s21 = sphi 0, %s23
    %s24 = sphi 0, %s21
    %s25 = sphi 0, %s24
    %s41 = sphi 0, %s25
    %s45 = sphi 0, %s45
    %s47 = sphi 0, %s45
    %s48 = sphi 0, %s47
    %s62 = sphi 0, %s48
    %s66 = sphi 0, %s66
    %s68 = sphi 0, %s66
    %s69 = sphi 0, %s68
    %s83 = sphi 0, %s69
    %s89 = sphi 0, %s91
    %s92 = sphi 0, %s89
    %s93 = sphi 0, %s92
    %s109 = sphi 0, %s93
    %s115 = sphi 0, %s117
    %s118 = sphi 0, %s115
    %s119 = sphi 0, %s118
    %s135 = sphi 0, %s119
  $region4: #{bottleneck_block_forward.5} parent=0 // loop_header_branch
    %14 = sbr.rel (%p12) target = $region8
  $region5: #{bottleneck_block_forward.5} parent=0 // loop_body
    %s16 = ssub.s32 %s11, 1
    %s17 = ssub.s32 %s11, 2
    %s18 = sadd.s32 %s11, 1
    %s19 = ssub.s32 %s11, %s18
    %p20 = scmp.eq.s32.totalorder %s19, 0
    %s22 = sadd.s32 %s21, 1
    %s23 = scalar_select %p20, %s21, %s22
    %p26 = pneg %p20
    %p27 = scmp.eq.s32.totalorder %s11, 1
    %p28 = por %p26, %p27
    %p29 = scmp.ne.s32.totalorder %s21, %s24
    %p30 = scmp.eq.s32.totalorder %s11, 0
    %p31 = por %p29, %p30
    %p32 = scmp.ne.s32.totalorder %s21, %s24
    %p33 = scmp.eq.s32.totalorder %s16, 1
    %p34 = por %p32, %p33
    %p35 = scmp.ne.s32.totalorder %s24, %s25
    %p36 = scmp.eq.s32.totalorder %s16, 0
    %p37 = por %p35, %p36
    %p38 = scmp.ne.s32.totalorder %s24, %s25
    %p39 = scmp.eq.s32.totalorder %s17, 1
    %p40 = por %p38, %p39
    %p42 = scmp.ne.s32.totalorder %s25, %s41
    %p43 = scmp.eq.s32.totalorder %s17, 0
    %p44 = por %p42, %p43
    %s46 = sadd.s32 %s45, 1
    %p49 = scmp.eq.s32.totalorder %s11, 1
    %p50 = scmp.ne.s32.totalorder %s45, %s47
    %p51 = scmp.eq.s32.totalorder %s11, 0
    %p52 = por %p50, %p51
    %p53 = scmp.ne.s32.totalorder %s45, %s47
    %p54 = scmp.eq.s32.totalorder %s16, 1
    %p55 = por %p53, %p54
    %p56 = scmp.ne.s32.totalorder %s47, %s48
    %p57 = scmp.eq.s32.totalorder %s16, 0
    %p58 = por %p56, %p57
    %p59 = scmp.ne.s32.totalorder %s47, %s48
    %p60 = scmp.eq.s32.totalorder %s17, 1
    %p61 = por %p59, %p60
    %p63 = scmp.ne.s32.totalorder %s48, %s62
    %p64 = scmp.eq.s32.totalorder %s17, 0
    %p65 = por %p63, %p64
    %s67 = sadd.s32 %s66, 1
    %p70 = scmp.eq.s32.totalorder %s11, 1
    %p71 = scmp.ne.s32.totalorder %s66, %s68
    %p72 = scmp.eq.s32.totalorder %s11, 0
    %p73 = por %p71, %p72
    %p74 = scmp.ne.s32.totalorder %s66, %s68
    %p75 = scmp.eq.s32.totalorder %s16, 1
    %p76 = por %p74, %p75
    %p77 = scmp.ne.s32.totalorder %s68, %s69
    %p78 = scmp.eq.s32.totalorder %s16, 0
    %p79 = por %p77, %p78
    %p80 = scmp.ne.s32.totalorder %s68, %s69
    %p81 = scmp.eq.s32.totalorder %s17, 1
    %p82 = por %p80, %p81
    %p84 = scmp.ne.s32.totalorder %s69, %s83
    %p85 = scmp.eq.s32.totalorder %s17, 0
    %p86 = por %p84, %p85
    %s87 = ssub.s32 %s11, %s18
    %p88 = scmp.eq.s32.totalorder %s87, 0
    %s90 = sadd.s32 %s89, 1
    %s91 = scalar_select %p88, %s89, %s90
    %p94 = pneg %p88
    %p95 = scmp.eq.s32.totalorder %s11, 1
    %p96 = por %p94, %p95
    %p97 = scmp.ne.s32.totalorder %s89, %s92
    %p98 = scmp.eq.s32.totalorder %s11, 0
    %p99 = por %p97, %p98
    %p100 = scmp.ne.s32.totalorder %s89, %s92
    %p101 = scmp.eq.s32.totalorder %s16, 1
    %p102 = por %p100, %p101
    %p103 = scmp.ne.s32.totalorder %s92, %s93
    %p104 = scmp.eq.s32.totalorder %s16, 0
    %p105 = por %p103, %p104
    %p106 = scmp.ne.s32.totalorder %s92, %s93
    %p107 = scmp.eq.s32.totalorder %s17, 1
    %p108 = por %p106, %p107
    %p110 = scmp.ne.s32.totalorder %s93, %s109
    %p111 = scmp.eq.s32.totalorder %s17, 0
    %p112 = por %p110, %p111
    %s113 = ssub.s32 %s11, %s18
    %p114 = scmp.eq.s32.totalorder %s113, 0
    %s116 = sadd.s32 %s115, 1
    %s117 = scalar_select %p114, %s115, %s116
    %p120 = pneg %p114
    %p121 = scmp.eq.s32.totalorder %s11, 1
    %p122 = por %p120, %p121
    %p123 = scmp.ne.s32.totalorder %s115, %s118
    %p124 = scmp.eq.s32.totalorder %s11, 0
    %p125 = por %p123, %p124
    %p126 = scmp.ne.s32.totalorder %s115, %s118
    %p127 = scmp.eq.s32.totalorder %s16, 1
    %p128 = por %p126, %p127
    %p129 = scmp.ne.s32.totalorder %s118, %s119
    %p130 = scmp.eq.s32.totalorder %s16, 0
    %p131 = por %p129, %p130
    %p132 = scmp.ne.s32.totalorder %s118, %s119
    %p133 = scmp.eq.s32.totalorder %s17, 1
    %p134 = por %p132, %p133
    %p136 = scmp.ne.s32.totalorder %s119, %s135
    %p137 = scmp.eq.s32.totalorder %s17, 0
    %p138 = por %p136, %p137
    %p139 = scmp.le.s32.totalorder 1, %s11
    %p140 = scmp.lt.s32.totalorder %s11, 3
    %p141 = pnand %p139, %p140
    %p142 = pneg %p141
    // Predicated region
    $region9: #{bottleneck_block_forward.5} parent=5 // pred_check
      _
    $region10: #{bottleneck_block_forward.5} parent=5 // pred_check_branch
      %144 = sbr.rel (%p141) target = $region12
    $region11: #{bottleneck_block_forward.5} parent=5 // pred_region
      %s145 = ssub.s32 %s11, 1
      // Predicated region
      $region13: #{bottleneck_block_forward.5} parent=11 // pred_check
        %p146 = pneg %p58
      $region14: #{bottleneck_block_forward.5} parent=11 // pred_check_branch
        %148 = sbr.rel (%p146) target = $region16
      $region15: #{bottleneck_block_forward.5} parent=11 // pred_region
        _
      $region16: #{bottleneck_block_forward.5} parent=11 // pred_fallthru
        _
      // Predicated region
      $region17: #{bottleneck_block_forward.5} parent=11 // pred_check
        %p149 = pneg %p79
      $region18: #{bottleneck_block_forward.5} parent=11 // pred_check_branch
        %151 = sbr.rel (%p149) target = $region20
      $region19: #{bottleneck_block_forward.5} parent=11 // pred_region
        _
      $region20: #{bottleneck_block_forward.5} parent=11 // pred_fallthru
        _
    $region12: #{bottleneck_block_forward.5} parent=5 // pred_fallthru
      _
    %p152 = scmp.lt.s32.totalorder %s11, 2
    // Predicated region
    $region21: #{bottleneck_block_forward.5} parent=5 // pred_check
      %p153 = pneg %p152
    $region22: #{bottleneck_block_forward.5} parent=5 // pred_check_branch
      %155 = sbr.rel (%p153) target = $region24
    $region23: #{bottleneck_block_forward.5} parent=5 // pred_region
      // Predicated region
      $region25: #{bottleneck_block_forward.5} parent=23 // pred_check
        %p156 = pneg %p31
      $region26: #{bottleneck_block_forward.5} parent=23 // pred_check_branch
        %158 = sbr.rel (%p156) target = $region28
      $region27: #{bottleneck_block_forward.5} parent=23 // pred_region
        %p159 = scmp.lt.s32.totalorder %s11, 1
        %s160 = scalar_select %p159, %s11, 1
        %s161 = smul.addr %s160, 32
        %s162 = smul.addr %s161, 4
        %s163 = scalar_lea.vmem %s0, %s162
      $region28: #{bottleneck_block_forward.5} parent=23 // pred_fallthru
        _
    $region24: #{bottleneck_block_forward.5} parent=5 // pred_fallthru
      _
    %p164 = scmp.le.s32.totalorder 1, %s11
    %p165 = scmp.lt.s32.totalorder %s11, 3
    %p166 = pnand %p164, %p165
    %p167 = pneg %p166
    // Predicated region
    $region29: #{bottleneck_block_forward.5} parent=5 // pred_check
      _
    $region30: #{bottleneck_block_forward.5} parent=5 // pred_check_branch
      %169 = sbr.rel (%p166) target = $region32
    $region31: #{bottleneck_block_forward.5} parent=5 // pred_region
      %s170 = ssub.s32 %s11, 1
      %p171 = scmp.lt.s32.totalorder %s16, 1
      %s172 = scalar_select %p171, %s16, 1
      %s173 = smul.addr %s172, 32
      %s174 = smul.addr %s173, 4
      %s175 = scalar_lea.vmem %s0, %s174
      %p176 = pneg %p37
      %p177 = pneg %p34
      %p178 = pneg %p58
      %p179 = pneg %p55
      %p180 = pneg %p79
      %p181 = pneg %p76
      %p182 = pneg %p105
      %p183 = pneg %p102
      %p184 = scmp.lt.s32.totalorder %s16, 1
      %s185 = scalar_select %p184, %s16, 1
      %s186 = smul.addr %s185, 8
      %s187 = smul.addr %s186, 4
      %s188 = scalar_lea.vmem %s3, %s187
      %p189 = pneg %p131
      %p190 = pneg %p128
      %p191 = scmp.lt.s32.totalorder %s16, 1
      %s192 = scalar_select %p191, %s16, 1
      %s193 = smul.addr %s192, 8
      %s194 = scalar_lea.vmem %s4, %s193
      %p195 = scmp.lt.s32.totalorder %s16, 1
      %s196 = scalar_select %p195, %s16, 1
      %s197 = smul.addr %s196, 32
      %s198 = smul.addr %s197, 4
      %s199 = scalar_lea.vmem %s0, %s198
      %p200 = scmp.lt.s32.totalorder %s16, 1
      %s201 = scalar_select %p200, %s16, 1
      %s202 = smul.addr %s201, 8
      %s203 = smul.addr %s202, 4
      %s204 = scalar_lea.vmem %s3, %s203
      %p205 = scmp.lt.s32.totalorder %s16, 1
      %s206 = scalar_select %p205, %s16, 1
      %s207 = smul.addr %s206, 8
      %s208 = scalar_lea.vmem %s4, %s207
      %210 = vst [vmem:[#allocation2] sm:$0xff] 0.0
      %211 = vst [vmem:[#allocation2 + $0x8] sm:$0xff] 0.0
      %212 = vst [vmem:[#allocation2 + $0x10] sm:$0x3] 0.0
      %213 = vst [vmem:[#allocation2 + $0x18] sm:$0xff] 0.0
      %214 = vst [vmem:[#allocation2 + $0x20] sm:$0xff] 0.0
      %215 = vst [vmem:[#allocation2 + $0x28] sm:$0x3] 0.0
      %216 = vst [vmem:[#allocation2 + $0x30] sm:$0xff] 0.0
      %217 = vst [vmem:[#allocation2 + $0x38] sm:$0xff] 0.0
      %218 = vst [vmem:[#allocation2 + $0x40] sm:$0x3] 0.0
      %219 = vst [vmem:[#allocation2 + $0x48] sm:$0xff] 0.0
      %220 = vst [vmem:[#allocation2 + $0x50] sm:$0xff] 0.0
      %221 = vst [vmem:[#allocation2 + $0x58] sm:$0x3] 0.0
      %222 = vst [vmem:[#allocation2 + $0x60] sm:$0xff] 0.0
      %223 = vst [vmem:[#allocation2 + $0x68] sm:$0xff] 0.0
      %224 = vst [vmem:[#allocation2 + $0x70] sm:$0x3] 0.0
      %225 = vst [vmem:[#allocation2 + $0x78] sm:$0xff] 0.0
      %226 = vst [vmem:[#allocation2 + $0x80] sm:$0xff] 0.0
      %227 = vst [vmem:[#allocation2 + $0x88] sm:$0x3] 0.0
      %228 = vst [vmem:[#allocation2 + $0x90] sm:$0xff] 0.0
      %229 = vst [vmem:[#allocation2 + $0x98] sm:$0xff] 0.0
      %230 = vst [vmem:[#allocation2 + $0xa0] sm:$0x3] 0.0
      %231 = vst [vmem:[#allocation2 + $0xa8] sm:$0xff] 0.0
      %232 = vst [vmem:[#allocation2 + $0xb0] sm:$0xff] 0.0
      %233 = vst [vmem:[#allocation2 + $0xb8] sm:$0x3] 0.0
      %234 = vst [vmem:[#allocation2 + $0xc0] sm:$0xff] 0.0
      %235 = vst [vmem:[#allocation2 + $0xc8] sm:$0xff] 0.0
      %236 = vst [vmem:[#allocation2 + $0xd0] sm:$0x3] 0.0
      %237 = vst [vmem:[#allocation2 + $0xd8] sm:$0xff] 0.0
      %238 = vst [vmem:[#allocation2 + $0xe0] sm:$0xff] 0.0
      %239 = vst [vmem:[#allocation2 + $0xe8] sm:$0x3] 0.0
      %240 = vst [vmem:[#allocation2 + $0xf0] sm:$0xff] 0.0
      %241 = vst [vmem:[#allocation2 + $0xf8] sm:$0xff] 0.0
      %242 = vst [vmem:[#allocation2 + $0x100] sm:$0x3] 0.0
      %243 = vst [vmem:[#allocation2 + $0x108] sm:$0xff] 0.0
      %244 = vst [vmem:[#allocation2 + $0x110] sm:$0xff] 0.0
      %245 = vst [vmem:[#allocation2 + $0x118] sm:$0x3] 0.0
      %246 = vst [vmem:[#allocation2 + $0x120] sm:$0xff] 0.0
      %247 = vst [vmem:[#allocation2 + $0x128] sm:$0xff] 0.0
      %248 = vst [vmem:[#allocation2 + $0x130] sm:$0x3] 0.0
      %249 = vst [vmem:[#allocation2 + $0x138] sm:$0xff] 0.0
      %250 = vst [vmem:[#allocation2 + $0x140] sm:$0xff] 0.0
      %251 = vst [vmem:[#allocation2 + $0x148] sm:$0x3] 0.0
      %252 = vst [vmem:[#allocation2 + $0x150] sm:$0xff] 0.0
      %253 = vst [vmem:[#allocation2 + $0x158] sm:$0xff] 0.0
      %254 = vst [vmem:[#allocation2 + $0x160] sm:$0x3] 0.0
      %255 = vst [vmem:[#allocation2 + $0x168] sm:$0xff] 0.0
      %256 = vst [vmem:[#allocation2 + $0x170] sm:$0xff] 0.0
      %257 = vst [vmem:[#allocation2 + $0x178] sm:$0x3] 0.0
      %258 = vst [vmem:[#allocation2 + $0x180] sm:$0xff] 0.0
      %259 = vst [vmem:[#allocation2 + $0x188] sm:$0xff] 0.0
      %260 = vst [vmem:[#allocation2 + $0x190] sm:$0x3] 0.0
      %261 = vst [vmem:[#allocation2 + $0x198] sm:$0xff] 0.0
      %262 = vst [vmem:[#allocation2 + $0x1a0] sm:$0xff] 0.0
      %263 = vst [vmem:[#allocation2 + $0x1a8] sm:$0x3] 0.0
      %v264 = vld [vmem:[%s199] sm:$0xf]
      %v265 = vld [vmem:[%s199 + $0x4] sm:$0xf]
      %v266 = vld [vmem:[%s199 + $0x8] sm:$0xf]
      %v267 = vld [vmem:[%s199 + $0xc] sm:$0xf]
      %v268 = vld [vmem:[%s199 + $0x10] sm:$0xf]
      %v269 = vld [vmem:[%s199 + $0x14] sm:$0xf]
      %v270 = vld [vmem:[%s199 + $0x18] sm:$0xf]
      %v271 = vld [vmem:[%s199 + $0x1c] sm:$0xf]
      %v272 = vld [vmem:[%s199 + $0x20] sm:$0xf]
      %v273 = vld [vmem:[%s199 + $0x24] sm:$0xf]
      %v274 = vld [vmem:[%s199 + $0x28] sm:$0xf]
      %v275 = vld [vmem:[%s199 + $0x2c] sm:$0xf]
      %v276 = vld [vmem:[%s199 + $0x30] sm:$0xf]
      %v277 = vld [vmem:[%s199 + $0x34] sm:$0xf]
      %v278 = vld [vmem:[%s199 + $0x38] sm:$0xf]
      %v279 = vld [vmem:[%s199 + $0x3c] sm:$0xf]
      %v280 = vld [vmem:[%s199 + $0x40] sm:$0xf]
      %v281 = vld [vmem:[%s199 + $0x44] sm:$0xf]
      %v282 = vld [vmem:[%s199 + $0x48] sm:$0xf]
      %v283 = vld [vmem:[%s199 + $0x4c] sm:$0xf]
      %v284 = vld [vmem:[%s199 + $0x50] sm:$0xf]
      %v285 = vld [vmem:[%s199 + $0x54] sm:$0xf]
      %v286 = vld [vmem:[%s199 + $0x58] sm:$0xf]
      %v287 = vld [vmem:[%s199 + $0x5c] sm:$0xf]
      %v288 = vld [vmem:[%s199 + $0x60] sm:$0xf]
      %v289 = vld [vmem:[%s199 + $0x64] sm:$0xf]
      %v290 = vld [vmem:[%s199 + $0x68] sm:$0xf]
      %v291 = vld [vmem:[%s199 + $0x6c] sm:$0xf]
      %v292 = vld [vmem:[%s199 + $0x70] sm:$0xf]
      %v293 = vld [vmem:[%s199 + $0x74] sm:$0xf]
      %v294 = vld [vmem:[%s199 + $0x78] sm:$0xf]
      %v295 = vld [vmem:[%s199 + $0x7c] sm:$0xf]
      %v296 = vunpack.c.l.bf16 %v264
      %v297 = vunpack.c.l.bf16 %v265
      %v298 = vunpack.c.l.bf16 %v266
      %v299 = vunpack.c.l.bf16 %v267
      %v300 = vunpack.c.l.bf16 %v268
      %v301 = vunpack.c.l.bf16 %v269
      %v302 = vunpack.c.l.bf16 %v270
      %v303 = vunpack.c.l.bf16 %v271
      %v304 = vunpack.c.l.bf16 %v272
      %v305 = vunpack.c.l.bf16 %v273
      %v306 = vunpack.c.l.bf16 %v274
      %v307 = vunpack.c.l.bf16 %v275
      %v308 = vunpack.c.l.bf16 %v276
      %v309 = vunpack.c.l.bf16 %v277
      %v310 = vunpack.c.l.bf16 %v278
      %v311 = vunpack.c.l.bf16 %v279
      %v312 = vunpack.c.l.bf16 %v280
      %v313 = vunpack.c.l.bf16 %v281
      %v314 = vunpack.c.l.bf16 %v282
      %v315 = vunpack.c.l.bf16 %v283
      %v316 = vunpack.c.l.bf16 %v284
      %v317 = vunpack.c.l.bf16 %v285
      %v318 = vunpack.c.l.bf16 %v286
      %v319 = vunpack.c.l.bf16 %v287
      %v320 = vunpack.c.l.bf16 %v288
      %v321 = vunpack.c.l.bf16 %v289
      %v322 = vunpack.c.l.bf16 %v290
      %v323 = vunpack.c.l.bf16 %v291
      %v324 = vunpack.c.l.bf16 %v292
      %v325 = vunpack.c.l.bf16 %v293
      %v326 = vunpack.c.l.bf16 %v294
      %v327 = vunpack.c.l.bf16 %v295
      %v328 = vld [vmem:[%s1] sm:$0x1]
      %v329 = vlaneseq
      %v330 = vshrl.u32 %v329, 7
      %v331 = vsub.s32 0, %v330
      %v332 = vrot.slane %v328, %v331
      %v333 = vmul.f32 %v296, %v332
      %v334 = vmul.f32 %v297, %v332
      %v335 = vmul.f32 %v298, %v332
      %v336 = vmul.f32 %v299, %v332
      %v337 = vmul.f32 %v300, %v332
      %v338 = vmul.f32 %v301, %v332
      %v339 = vmul.f32 %v302, %v332
      %v340 = vmul.f32 %v303, %v332
      %v341 = vmul.f32 %v304, %v332
      %v342 = vmul.f32 %v305, %v332
      %v343 = vmul.f32 %v306, %v332
      %v344 = vmul.f32 %v307, %v332
      %v345 = vmul.f32 %v308, %v332
      %v346 = vmul.f32 %v309, %v332
      %v347 = vmul.f32 %v310, %v332
      %v348 = vmul.f32 %v311, %v332
      %v349 = vmul.f32 %v312, %v332
      %v350 = vmul.f32 %v313, %v332
      %v351 = vmul.f32 %v314, %v332
      %v352 = vmul.f32 %v315, %v332
      %v353 = vmul.f32 %v316, %v332
      %v354 = vmul.f32 %v317, %v332
      %v355 = vmul.f32 %v318, %v332
      %v356 = vmul.f32 %v319, %v332
      %v357 = vmul.f32 %v320, %v332
      %v358 = vmul.f32 %v321, %v332
      %v359 = vmul.f32 %v322, %v332
      %v360 = vmul.f32 %v323, %v332
      %v361 = vmul.f32 %v324, %v332
      %v362 = vmul.f32 %v325, %v332
      %v363 = vmul.f32 %v326, %v332
      %v364 = vmul.f32 %v327, %v332
      %v365 = vld [vmem:[%s1 + $0x1] sm:$0x1]
      %v366 = vlaneseq
      %v367 = vshrl.u32 %v366, 7
      %v368 = vsub.s32 0, %v367
      %v369 = vrot.slane %v365, %v368
      %v370 = vadd.f32 %v333, %v369
      %v371 = vadd.f32 %v334, %v369
      %v372 = vadd.f32 %v335, %v369
      %v373 = vadd.f32 %v336, %v369
      %v374 = vadd.f32 %v337, %v369
      %v375 = vadd.f32 %v338, %v369
      %v376 = vadd.f32 %v339, %v369
      %v377 = vadd.f32 %v340, %v369
      %v378 = vadd.f32 %v341, %v369
      %v379 = vadd.f32 %v342, %v369
      %v380 = vadd.f32 %v343, %v369
      %v381 = vadd.f32 %v344, %v369
      %v382 = vadd.f32 %v345, %v369
      %v383 = vadd.f32 %v346, %v369
      %v384 = vadd.f32 %v347, %v369
      %v385 = vadd.f32 %v348, %v369
      %v386 = vadd.f32 %v349, %v369
      %v387 = vadd.f32 %v350, %v369
      %v388 = vadd.f32 %v351, %v369
      %v389 = vadd.f32 %v352, %v369
      %v390 = vadd.f32 %v353, %v369
      %v391 = vadd.f32 %v354, %v369
      %v392 = vadd.f32 %v355, %v369
      %v393 = vadd.f32 %v356, %v369
      %v394 = vadd.f32 %v357, %v369
      %v395 = vadd.f32 %v358, %v369
      %v396 = vadd.f32 %v359, %v369
      %v397 = vadd.f32 %v360, %v369
      %v398 = vadd.f32 %v361, %v369
      %v399 = vadd.f32 %v362, %v369
      %v400 = vadd.f32 %v363, %v369
      %v401 = vadd.f32 %v364, %v369
      %v402 = vmax.f32 %v370, 0.0
      %v403 = vmax.f32 %v371, 0.0
      %v404 = vmax.f32 %v372, 0.0
      %v405 = vmax.f32 %v373, 0.0
      %v406 = vmax.f32 %v374, 0.0
      %v407 = vmax.f32 %v375, 0.0
      %v408 = vmax.f32 %v376, 0.0
      %v409 = vmax.f32 %v377, 0.0
      %v410 = vmax.f32 %v378, 0.0
      %v411 = vmax.f32 %v379, 0.0
      %v412 = vmax.f32 %v380, 0.0
      %v413 = vmax.f32 %v381, 0.0
      %v414 = vmax.f32 %v382, 0.0
      %v415 = vmax.f32 %v383, 0.0
      %v416 = vmax.f32 %v384, 0.0
      %v417 = vmax.f32 %v385, 0.0
      %v418 = vmax.f32 %v386, 0.0
      %v419 = vmax.f32 %v387, 0.0
      %v420 = vmax.f32 %v388, 0.0
      %v421 = vmax.f32 %v389, 0.0
      %v422 = vmax.f32 %v390, 0.0
      %v423 = vmax.f32 %v391, 0.0
      %v424 = vmax.f32 %v392, 0.0
      %v425 = vmax.f32 %v393, 0.0
      %v426 = vmax.f32 %v394, 0.0
      %v427 = vmax.f32 %v395, 0.0
      %v428 = vmax.f32 %v396, 0.0
      %v429 = vmax.f32 %v397, 0.0
      %v430 = vmax.f32 %v398, 0.0
      %v431 = vmax.f32 %v399, 0.0
      %v432 = vmax.f32 %v400, 0.0
      %v433 = vmax.f32 %v401, 0.0
      %s434 = scalar_lea.vmem [#allocation2], 24
      %435 = vst [vmem:[%s434 + $0x1] sm:$0xff] %v402
      %436 = vst [vmem:[%s434 + $0x9] sm:$0xff] %v403
      %437 = vst [vmem:[%s434 + $0x19] sm:$0xff] %v404
      %438 = vst [vmem:[%s434 + $0x21] sm:$0xff] %v405
      %439 = vst [vmem:[%s434 + $0x31] sm:$0xff] %v406
      %440 = vst [vmem:[%s434 + $0x39] sm:$0xff] %v407
      %441 = vst [vmem:[%s434 + $0x49] sm:$0xff] %v408
      %442 = vst [vmem:[%s434 + $0x51] sm:$0xff] %v409
      %443 = vst [vmem:[%s434 + $0x61] sm:$0xff] %v410
      %444 = vst [vmem:[%s434 + $0x69] sm:$0xff] %v411
      %445 = vst [vmem:[%s434 + $0x79] sm:$0xff] %v412
      %446 = vst [vmem:[%s434 + $0x81] sm:$0xff] %v413
      %447 = vst [vmem:[%s434 + $0x91] sm:$0xff] %v414
      %448 = vst [vmem:[%s434 + $0x99] sm:$0xff] %v415
      %449 = vst [vmem:[%s434 + $0xa9] sm:$0xff] %v416
      %450 = vst [vmem:[%s434 + $0xb1] sm:$0xff] %v417
      %451 = vst [vmem:[%s434 + $0xc1] sm:$0xff] %v418
      %452 = vst [vmem:[%s434 + $0xc9] sm:$0xff] %v419
      %453 = vst [vmem:[%s434 + $0xd9] sm:$0xff] %v420
      %454 = vst [vmem:[%s434 + $0xe1] sm:$0xff] %v421
      %455 = vst [vmem:[%s434 + $0xf1] sm:$0xff] %v422
      %456 = vst [vmem:[%s434 + $0xf9] sm:$0xff] %v423
      %457 = vst [vmem:[%s434 + $0x109] sm:$0xff] %v424
      %458 = vst [vmem:[%s434 + $0x111] sm:$0xff] %v425
      %459 = vst [vmem:[%s434 + $0x121] sm:$0xff] %v426
      %460 = vst [vmem:[%s434 + $0x129] sm:$0xff] %v427
      %461 = vst [vmem:[%s434 + $0x139] sm:$0xff] %v428
      %462 = vst [vmem:[%s434 + $0x141] sm:$0xff] %v429
      %463 = vst [vmem:[%s434 + $0x151] sm:$0xff] %v430
      %464 = vst [vmem:[%s434 + $0x159] sm:$0xff] %v431
      %465 = vst [vmem:[%s434 + $0x169] sm:$0xff] %v432
      %466 = vst [vmem:[%s434 + $0x171] sm:$0xff] %v433
      loop: start=0, step=1, limit=8
      $region33: #{bottleneck_block_forward.5} parent=31 // loop_pre_header
        _
      $region34: #{bottleneck_block_forward.5} parent=31 // loop_header
        %s468 = sphi 0, %s472
        %p469 = scmp.ge.s32.totalorder %s468, 8
      $region35: #{bottleneck_block_forward.5} parent=31 // loop_header_branch
        %471 = sbr.rel (%p469) target = $region39
      $region36: #{bottleneck_block_forward.5} parent=31 // loop_body
        %s473 = smul.u32 %s468, 2
        %s474 = smul.u32 %s473, 24
        %s475 = scalar_lea.vmem [#allocation2], %s474
        %v476 = vld [vmem:[%s475] ss:$2 sm:$0xff]
        %s477 = smul.u32 %s468, 8
        %s478 = sshra.s32 %s477, 3
        %s479 = sand.u32 %s477, 7
        %s480 = smul.u32 %s478, 9
        %s481 = smul.addr %s480, 8
        %s482 = scalar_lea.vmem [#allocation3], %s481
        %483 = vst [vmem:[%s482] sm:$0xff] %v476
        %s484 = scalar_lea.vmem %s475, 1 [#allocation2]
        %v485 = vld [vmem:[%s484] ss:$2 sm:$0xff]
        %486 = vst [vmem:[%s482 + $0x8] sm:$0xff] %v485
        %s487 = scalar_lea.vmem %s475, 2 [#allocation2]
        %v488 = vld [vmem:[%s487] ss:$2 sm:$0xff]
        %489 = vst [vmem:[%s482 + $0x10] sm:$0xff] %v488
        %s490 = sadd.s32 %s473, 1
        %s491 = smul.u32 %s490, 24
        %s492 = scalar_lea.vmem [#allocation2], %s491
        %v493 = vld [vmem:[%s492] ss:$2 sm:$0xff]
        %494 = vst [vmem:[%s482 + $0x18] sm:$0xff] %v493
        %s495 = scalar_lea.vmem %s492, 1 [#allocation2]
        %v496 = vld [vmem:[%s495] ss:$2 sm:$0xff]
        %497 = vst [vmem:[%s482 + $0x20] sm:$0xff] %v496
        %s498 = scalar_lea.vmem %s492, 2 [#allocation2]
        %v499 = vld [vmem:[%s498] ss:$2 sm:$0xff]
        %500 = vst [vmem:[%s482 + $0x28] sm:$0xff] %v499
        %s501 = sadd.s32 %s473, 2
        %s502 = smul.u32 %s501, 24
        %s503 = scalar_lea.vmem [#allocation2], %s502
        %v504 = vld [vmem:[%s503] ss:$2 sm:$0xff]
        %505 = vst [vmem:[%s482 + $0x30] sm:$0xff] %v504
        %s506 = scalar_lea.vmem %s503, 1 [#allocation2]
        %v507 = vld [vmem:[%s506] ss:$2 sm:$0xff]
        %508 = vst [vmem:[%s482 + $0x38] sm:$0xff] %v507
        %s509 = scalar_lea.vmem %s503, 2 [#allocation2]
        %v510 = vld [vmem:[%s509] ss:$2 sm:$0xff]
        %511 = vst [vmem:[%s482 + $0x40] sm:$0xff] %v510
      $region37: #{bottleneck_block_forward.5} parent=31 // loop_footer
        %s472 = sadd.s32 1, %s468
      $region38: #{bottleneck_block_forward.5} parent=31 // loop_footer_branch
        %467 = sbr.rel target = $region34
      $region39: #{bottleneck_block_forward.5} parent=31 // loop_exit
        _
      %v512 = vld [vmem:[#allocation3] sm:$0xff]
      %v513 = vld [vmem:[#allocation3 + $0x8] sm:$0xff]
      %v514 = vld [vmem:[#allocation3 + $0x10] sm:$0xff]
      %v515 = vld [vmem:[#allocation3 + $0x18] sm:$0xff]
      %v516 = vld [vmem:[#allocation3 + $0x20] sm:$0xff]
      %v517 = vld [vmem:[#allocation3 + $0x28] sm:$0xff]
      %v518 = vld [vmem:[#allocation3 + $0x30] sm:$0xff]
      %v519 = vld [vmem:[#allocation3 + $0x38] sm:$0xff]
      %v520 = vld [vmem:[#allocation3 + $0x40] sm:$0xff]
      %v521 = vld [vmem:[#allocation3 + $0x48] sm:$0xff]
      %v522 = vld [vmem:[#allocation3 + $0x50] sm:$0xff]
      %v523 = vld [vmem:[#allocation3 + $0x58] sm:$0xff]
      %v524 = vld [vmem:[#allocation3 + $0x60] sm:$0xff]
      %v525 = vld [vmem:[#allocation3 + $0x68] sm:$0xff]
      %v526 = vld [vmem:[#allocation3 + $0x70] sm:$0xff]
      %v527 = vld [vmem:[#allocation3 + $0x78] sm:$0xff]
      %v528 = vld [vmem:[#allocation3 + $0x80] sm:$0xff]
      %v529 = vld [vmem:[#allocation3 + $0x88] sm:$0xff]
      %v530 = vld [vmem:[#allocation3 + $0x90] sm:$0xff]
      %v531 = vld [vmem:[#allocation3 + $0x98] sm:$0xff]
      %v532 = vld [vmem:[#allocation3 + $0xa0] sm:$0xff]
      %v533 = vld [vmem:[#allocation3 + $0xa8] sm:$0xff]
      %v534 = vld [vmem:[#allocation3 + $0xb0] sm:$0xff]
      %v535 = vld [vmem:[#allocation3 + $0xb8] sm:$0xff]
      %v536 = vld [vmem:[#allocation3 + $0xc0] sm:$0xff]
      %v537 = vld [vmem:[#allocation3 + $0xc8] sm:$0xff]
      %v538 = vld [vmem:[#allocation3 + $0xd0] sm:$0xff]
      %v539 = vld [vmem:[#allocation3 + $0xd8] sm:$0xff]
      %v540 = vld [vmem:[#allocation3 + $0xe0] sm:$0xff]
      %v541 = vld [vmem:[#allocation3 + $0xe8] sm:$0xff]
      %v542 = vld [vmem:[#allocation3 + $0xf0] sm:$0xff]
      %v543 = vld [vmem:[#allocation3 + $0xf8] sm:$0xff]
      %v544 = vld [vmem:[#allocation3 + $0x100] sm:$0xff]
      %v545 = vld [vmem:[#allocation3 + $0x108] sm:$0xff]
      %v546 = vld [vmem:[#allocation3 + $0x110] sm:$0xff]
      %v547 = vld [vmem:[#allocation3 + $0x118] sm:$0xff]
      %v548 = vld [vmem:[#allocation3 + $0x120] sm:$0xff]
      %v549 = vld [vmem:[#allocation3 + $0x128] sm:$0xff]
      %v550 = vld [vmem:[#allocation3 + $0x130] sm:$0xff]
      %v551 = vld [vmem:[#allocation3 + $0x138] sm:$0xff]
      %v552 = vld [vmem:[#allocation3 + $0x140] sm:$0xff]
      %v553 = vld [vmem:[#allocation3 + $0x148] sm:$0xff]
      %v554 = vld [vmem:[#allocation3 + $0x150] sm:$0xff]
      %v555 = vld [vmem:[#allocation3 + $0x158] sm:$0xff]
      %v556 = vld [vmem:[#allocation3 + $0x160] sm:$0xff]
      %v557 = vld [vmem:[#allocation3 + $0x168] sm:$0xff]
      %v558 = vld [vmem:[#allocation3 + $0x170] sm:$0xff]
      %v559 = vld [vmem:[#allocation3 + $0x178] sm:$0xff]
      %v560 = vld [vmem:[#allocation3 + $0x180] sm:$0xff]
      %v561 = vld [vmem:[#allocation3 + $0x188] sm:$0xff]
      %v562 = vld [vmem:[#allocation3 + $0x190] sm:$0xff]
      %v563 = vld [vmem:[#allocation3 + $0x198] sm:$0xff]
      %v564 = vld [vmem:[#allocation3 + $0x1a0] sm:$0xff]
      %v565 = vld [vmem:[#allocation3 + $0x1a8] sm:$0xff]
      %v566 = vld [vmem:[#allocation3 + $0x1b0] sm:$0xff]
      %v567 = vld [vmem:[#allocation3 + $0x1b8] sm:$0xff]
      %v568 = vld [vmem:[#allocation3 + $0x1c0] sm:$0xff]
      %v569 = vld [vmem:[#allocation3 + $0x1c8] sm:$0xff]
      %v570 = vld [vmem:[#allocation3 + $0x1d0] sm:$0xff]
      %v571 = vld [vmem:[#allocation3 + $0x1d8] sm:$0xff]
      %v572 = vld [vmem:[#allocation3 + $0x1e0] sm:$0xff]
      %v573 = vld [vmem:[#allocation3 + $0x1e8] sm:$0xff]
      %v574 = vld [vmem:[#allocation3 + $0x1f0] sm:$0xff]
      %v575 = vld [vmem:[#allocation3 + $0x1f8] sm:$0xff]
      %v576 = vld [vmem:[#allocation3 + $0x200] sm:$0xff]
      %v577 = vld [vmem:[#allocation3 + $0x208] sm:$0xff]
      %v578 = vld [vmem:[#allocation3 + $0x210] sm:$0xff]
      %v579 = vld [vmem:[#allocation3 + $0x218] sm:$0xff]
      %v580 = vld [vmem:[#allocation3 + $0x220] sm:$0xff]
      %v581 = vld [vmem:[#allocation3 + $0x228] sm:$0xff]
      %v582 = vld [vmem:[#allocation3 + $0x230] sm:$0xff]
      %v583 = vld [vmem:[#allocation3 + $0x238] sm:$0xff]
      %v584 = vpack.c.bf16 %v521, %v512
      %v585 = vpack.c.bf16 %v522, %v513
      %v586 = vpack.c.bf16 %v523, %v514
      %v587 = vpack.c.bf16 %v524, %v515
      %v588 = vpack.c.bf16 %v525, %v516
      %v589 = vpack.c.bf16 %v526, %v517
      %v590 = vpack.c.bf16 %v527, %v518
      %v591 = vpack.c.bf16 %v528, %v519
      %v592 = vpack.c.bf16 %v529, %v520
      %v593 = vpack.c.bf16 %v539, %v530
      %v594 = vpack.c.bf16 %v540, %v531
      %v595 = vpack.c.bf16 %v541, %v532
      %v596 = vpack.c.bf16 %v542, %v533
      %v597 = vpack.c.bf16 %v543, %v534
      %v598 = vpack.c.bf16 %v544, %v535
      %v599 = vpack.c.bf16 %v545, %v536
      %v600 = vpack.c.bf16 %v546, %v537
      %v601 = vpack.c.bf16 %v547, %v538
      %v602 = vpack.c.bf16 %v557, %v548
      %v603 = vpack.c.bf16 %v558, %v549
      %v604 = vpack.c.bf16 %v559, %v550
      %v605 = vpack.c.bf16 %v560, %v551
      %v606 = vpack.c.bf16 %v561, %v552
      %v607 = vpack.c.bf16 %v562, %v553
      %v608 = vpack.c.bf16 %v563, %v554
      %v609 = vpack.c.bf16 %v564, %v555
      %v610 = vpack.c.bf16 %v565, %v556
      %v611 = vpack.c.bf16 %v575, %v566
      %v612 = vpack.c.bf16 %v576, %v567
      %v613 = vpack.c.bf16 %v577, %v568
      %v614 = vpack.c.bf16 %v578, %v569
      %v615 = vpack.c.bf16 %v579, %v570
      %v616 = vpack.c.bf16 %v580, %v571
      %v617 = vpack.c.bf16 %v581, %v572
      %v618 = vpack.c.bf16 %v582, %v573
      %v619 = vpack.c.bf16 %v583, %v574
      %v620 = vld [vmem:[%s2] sm:$0xf]
      %v621 = vld [vmem:[%s2 + $0x4] sm:$0xf]
      %v622 = vld [vmem:[%s2 + $0x8] sm:$0xf]
      %v623 = vld [vmem:[%s2 + $0xc] sm:$0xf]
      %v624 = vld [vmem:[%s2 + $0x10] sm:$0xf]
      %v625 = vld [vmem:[%s2 + $0x14] sm:$0xf]
      %v626 = vld [vmem:[%s2 + $0x18] sm:$0xf]
      %v627 = vld [vmem:[%s2 + $0x1c] sm:$0xf]
      %v628 = vld [vmem:[%s2 + $0x20] sm:$0xf]
      %v629 = vld [vmem:[%s2 + $0x24] sm:$0xf]
      %v630 = vld [vmem:[%s2 + $0x28] sm:$0xf]
      %v631 = vld [vmem:[%s2 + $0x2c] sm:$0xf]
      %v632 = vld [vmem:[%s2 + $0x30] sm:$0xf]
      %v633 = vld [vmem:[%s2 + $0x34] sm:$0xf]
      %v634 = vld [vmem:[%s2 + $0x38] sm:$0xf]
      %v635 = vld [vmem:[%s2 + $0x3c] sm:$0xf]
      %v636 = vld [vmem:[%s2 + $0x40] sm:$0xf]
      %v637 = vld [vmem:[%s2 + $0x44] sm:$0xf]
      %v638 = vld [vmem:[%s2 + $0x48] sm:$0xf]
      %v639 = vld [vmem:[%s2 + $0x4c] sm:$0xf]
      %v640 = vld [vmem:[%s2 + $0x50] sm:$0xf]
      %v641 = vld [vmem:[%s2 + $0x54] sm:$0xf]
      %v642 = vld [vmem:[%s2 + $0x58] sm:$0xf]
      %v643 = vld [vmem:[%s2 + $0x5c] sm:$0xf]
      %v644 = vld [vmem:[%s2 + $0x60] sm:$0xf]
      %v645 = vld [vmem:[%s2 + $0x64] sm:$0xf]
      %v646 = vld [vmem:[%s2 + $0x68] sm:$0xf]
      %v647 = vld [vmem:[%s2 + $0x6c] sm:$0xf]
      %v648 = vld [vmem:[%s2 + $0x70] sm:$0xf]
      %v649 = vld [vmem:[%s2 + $0x74] sm:$0xf]
      %v650 = vld [vmem:[%s2 + $0x78] sm:$0xf]
      %v651 = vld [vmem:[%s2 + $0x7c] sm:$0xf]
      %v652 = vld [vmem:[%s2 + $0x80] sm:$0xf]
      %v653 = vld [vmem:[%s2 + $0x84] sm:$0xf]
      %v654 = vld [vmem:[%s2 + $0x88] sm:$0xf]
      %v655 = vld [vmem:[%s2 + $0x8c] sm:$0xf]
      %v656 = vld [vmem:[%s2 + $0x90] sm:$0xf]
      %v657 = vld [vmem:[%s2 + $0x94] sm:$0xf]
      %v658 = vld [vmem:[%s2 + $0x98] sm:$0xf]
      %v659 = vld [vmem:[%s2 + $0x9c] sm:$0xf]
      %v660 = vld [vmem:[%s2 + $0xa0] sm:$0xf]
      %v661 = vld [vmem:[%s2 + $0xa4] sm:$0xf]
      %v662 = vld [vmem:[%s2 + $0xa8] sm:$0xf]
      %v663 = vld [vmem:[%s2 + $0xac] sm:$0xf]
      %v664 = vld [vmem:[%s2 + $0xb0] sm:$0xf]
      %v665 = vld [vmem:[%s2 + $0xb4] sm:$0xf]
      %v666 = vld [vmem:[%s2 + $0xb8] sm:$0xf]
      %v667 = vld [vmem:[%s2 + $0xbc] sm:$0xf]
      %v668 = vld [vmem:[%s2 + $0xc0] sm:$0xf]
      %v669 = vld [vmem:[%s2 + $0xc4] sm:$0xf]
      %v670 = vld [vmem:[%s2 + $0xc8] sm:$0xf]
      %v671 = vld [vmem:[%s2 + $0xcc] sm:$0xf]
      %v672 = vld [vmem:[%s2 + $0xd0] sm:$0xf]
      %v673 = vld [vmem:[%s2 + $0xd4] sm:$0xf]
      %v674 = vld [vmem:[%s2 + $0xd8] sm:$0xf]
      %v675 = vld [vmem:[%s2 + $0xdc] sm:$0xf]
      %v676 = vld [vmem:[%s2 + $0xe0] sm:$0xf]
      %v677 = vld [vmem:[%s2 + $0xe4] sm:$0xf]
      %v678 = vld [vmem:[%s2 + $0xe8] sm:$0xf]
      %v679 = vld [vmem:[%s2 + $0xec] sm:$0xf]
      %v680 = vld [vmem:[%s2 + $0xf0] sm:$0xf]
      %v681 = vld [vmem:[%s2 + $0xf4] sm:$0xf]
      %v682 = vld [vmem:[%s2 + $0xf8] sm:$0xf]
      %v683 = vld [vmem:[%s2 + $0xfc] sm:$0xf]
      %v684 = vld [vmem:[%s2 + $0x100] sm:$0xf]
      %v685 = vld [vmem:[%s2 + $0x104] sm:$0xf]
      %v686 = vld [vmem:[%s2 + $0x108] sm:$0xf]
      %v687 = vld [vmem:[%s2 + $0x10c] sm:$0xf]
      %v688 = vld [vmem:[%s2 + $0x110] sm:$0xf]
      %v689 = vld [vmem:[%s2 + $0x114] sm:$0xf]
      %v690 = vld [vmem:[%s2 + $0x118] sm:$0xf]
      %v691 = vld [vmem:[%s2 + $0x11c] sm:$0xf]
      %v692 = vld [vmem:[%s2 + $0x120] sm:$0xf]
      %v693 = vld [vmem:[%s2 + $0x124] sm:$0xf]
      %v694 = vld [vmem:[%s2 + $0x128] sm:$0xf]
      %v695 = vld [vmem:[%s2 + $0x12c] sm:$0xf]
      %v696 = vld [vmem:[%s2 + $0x130] sm:$0xf]
      %v697 = vld [vmem:[%s2 + $0x134] sm:$0xf]
      %v698 = vld [vmem:[%s2 + $0x138] sm:$0xf]
      %v699 = vld [vmem:[%s2 + $0x13c] sm:$0xf]
      %v700 = vld [vmem:[%s2 + $0x140] sm:$0xf]
      %v701 = vld [vmem:[%s2 + $0x144] sm:$0xf]
      %v702 = vld [vmem:[%s2 + $0x148] sm:$0xf]
      %v703 = vld [vmem:[%s2 + $0x14c] sm:$0xf]
      %v704 = vld [vmem:[%s2 + $0x150] sm:$0xf]
      %v705 = vld [vmem:[%s2 + $0x154] sm:$0xf]
      %v706 = vld [vmem:[%s2 + $0x158] sm:$0xf]
      %v707 = vld [vmem:[%s2 + $0x15c] sm:$0xf]
      %v708 = vld [vmem:[%s2 + $0x160] sm:$0xf]
      %v709 = vld [vmem:[%s2 + $0x164] sm:$0xf]
      %v710 = vld [vmem:[%s2 + $0x168] sm:$0xf]
      %v711 = vld [vmem:[%s2 + $0x16c] sm:$0xf]
      %v712 = vld [vmem:[%s2 + $0x170] sm:$0xf]
      %v713 = vld [vmem:[%s2 + $0x174] sm:$0xf]
      %v714 = vld [vmem:[%s2 + $0x178] sm:$0xf]
      %v715 = vld [vmem:[%s2 + $0x17c] sm:$0xf]
      %v716 = vld [vmem:[%s2 + $0x180] sm:$0xf]
      %v717 = vld [vmem:[%s2 + $0x184] sm:$0xf]
      %v718 = vld [vmem:[%s2 + $0x188] sm:$0xf]
      %v719 = vld [vmem:[%s2 + $0x18c] sm:$0xf]
      %v720 = vld [vmem:[%s2 + $0x190] sm:$0xf]
      %v721 = vld [vmem:[%s2 + $0x194] sm:$0xf]
      %v722 = vld [vmem:[%s2 + $0x198] sm:$0xf]
      %v723 = vld [vmem:[%s2 + $0x19c] sm:$0xf]
      %v724 = vld [vmem:[%s2 + $0x1a0] sm:$0xf]
      %v725 = vld [vmem:[%s2 + $0x1a4] sm:$0xf]
      %v726 = vld [vmem:[%s2 + $0x1a8] sm:$0xf]
      %v727 = vld [vmem:[%s2 + $0x1ac] sm:$0xf]
      %v728 = vld [vmem:[%s2 + $0x1b0] sm:$0xf]
      %v729 = vld [vmem:[%s2 + $0x1b4] sm:$0xf]
      %v730 = vld [vmem:[%s2 + $0x1b8] sm:$0xf]
      %v731 = vld [vmem:[%s2 + $0x1bc] sm:$0xf]
      %v732 = vld [vmem:[%s2 + $0x1c0] sm:$0xf]
      %v733 = vld [vmem:[%s2 + $0x1c4] sm:$0xf]
      %v734 = vld [vmem:[%s2 + $0x1c8] sm:$0xf]
      %v735 = vld [vmem:[%s2 + $0x1cc] sm:$0xf]
      %v736 = vld [vmem:[%s2 + $0x1d0] sm:$0xf]
      %v737 = vld [vmem:[%s2 + $0x1d4] sm:$0xf]
      %v738 = vld [vmem:[%s2 + $0x1d8] sm:$0xf]
      %v739 = vld [vmem:[%s2 + $0x1dc] sm:$0xf]
      %v740 = vld [vmem:[%s2 + $0x1e0] sm:$0xf]
      %v741 = vld [vmem:[%s2 + $0x1e4] sm:$0xf]
      %v742 = vld [vmem:[%s2 + $0x1e8] sm:$0xf]
      %v743 = vld [vmem:[%s2 + $0x1ec] sm:$0xf]
      %v744 = vld [vmem:[%s2 + $0x1f0] sm:$0xf]
      %v745 = vld [vmem:[%s2 + $0x1f4] sm:$0xf]
      %v746 = vld [vmem:[%s2 + $0x1f8] sm:$0xf]
      %v747 = vld [vmem:[%s2 + $0x1fc] sm:$0xf]
      %v748 = vld [vmem:[%s2 + $0x200] sm:$0xf]
      %v749 = vld [vmem:[%s2 + $0x204] sm:$0xf]
      %v750 = vld [vmem:[%s2 + $0x208] sm:$0xf]
      %v751 = vld [vmem:[%s2 + $0x20c] sm:$0xf]
      %v752 = vld [vmem:[%s2 + $0x210] sm:$0xf]
      %v753 = vld [vmem:[%s2 + $0x214] sm:$0xf]
      %v754 = vld [vmem:[%s2 + $0x218] sm:$0xf]
      %v755 = vld [vmem:[%s2 + $0x21c] sm:$0xf]
      %v756 = vld [vmem:[%s2 + $0x220] sm:$0xf]
      %v757 = vld [vmem:[%s2 + $0x224] sm:$0xf]
      %v758 = vld [vmem:[%s2 + $0x228] sm:$0xf]
      %v759 = vld [vmem:[%s2 + $0x22c] sm:$0xf]
      %v760 = vld [vmem:[%s2 + $0x230] sm:$0xf]
      %v761 = vld [vmem:[%s2 + $0x234] sm:$0xf]
      %v762 = vld [vmem:[%s2 + $0x238] sm:$0xf]
      %v763 = vld [vmem:[%s2 + $0x23c] sm:$0xf]
      %v908 = vunpack.c.l.b16 %v620
      %v909 = vunpack.c.l.b16 %v621
      %v910 = vunpack.c.l.b16 %v622
      %v911 = vunpack.c.l.b16 %v623
      %v912 = vunpack.c.l.b16 %v624
      %v913 = vunpack.c.l.b16 %v625
      %v914 = vunpack.c.l.b16 %v626
      %v915 = vunpack.c.l.b16 %v627
      %v916 = vunpack.c.l.b16 %v628
      %v917 = vunpack.c.l.b16 %v629
      %v918 = vunpack.c.l.b16 %v630
      %v919 = vunpack.c.l.b16 %v631
      %v920 = vunpack.c.l.b16 %v632
      %v921 = vunpack.c.l.b16 %v633
      %v922 = vunpack.c.l.b16 %v634
      %v923 = vunpack.c.l.b16 %v635
      %v924 = vunpack.c.l.b16 %v636
      %v925 = vunpack.c.l.b16 %v637
      %v926 = vunpack.c.l.b16 %v638
      %v927 = vunpack.c.l.b16 %v639
      %v928 = vunpack.c.l.b16 %v640
      %v929 = vunpack.c.l.b16 %v641
      %v930 = vunpack.c.l.b16 %v642
      %v931 = vunpack.c.l.b16 %v643
      %v932 = vunpack.c.l.b16 %v644
      %v933 = vunpack.c.l.b16 %v645
      %v934 = vunpack.c.l.b16 %v646
      %v935 = vunpack.c.l.b16 %v647
      %v936 = vunpack.c.l.b16 %v648
      %v937 = vunpack.c.l.b16 %v649
      %v938 = vunpack.c.l.b16 %v650
      %v939 = vunpack.c.l.b16 %v651
      %v940 = vunpack.c.l.b16 %v652
      %v941 = vunpack.c.l.b16 %v653
      %v942 = vunpack.c.l.b16 %v654
      %v943 = vunpack.c.l.b16 %v655
      %v944 = vunpack.c.l.b16 %v656
      %v945 = vunpack.c.l.b16 %v657
      %v946 = vunpack.c.l.b16 %v658
      %v947 = vunpack.c.l.b16 %v659
      %v948 = vunpack.c.l.b16 %v660
      %v949 = vunpack.c.l.b16 %v661
      %v950 = vunpack.c.l.b16 %v662
      %v951 = vunpack.c.l.b16 %v663
      %v952 = vunpack.c.l.b16 %v664
      %v953 = vunpack.c.l.b16 %v665
      %v954 = vunpack.c.l.b16 %v666
      %v955 = vunpack.c.l.b16 %v667
      %v956 = vunpack.c.l.b16 %v668
      %v957 = vunpack.c.l.b16 %v669
      %v958 = vunpack.c.l.b16 %v670
      %v959 = vunpack.c.l.b16 %v671
      %v960 = vunpack.c.l.b16 %v672
      %v961 = vunpack.c.l.b16 %v673
      %v962 = vunpack.c.l.b16 %v674
      %v963 = vunpack.c.l.b16 %v675
      %v964 = vunpack.c.l.b16 %v676
      %v965 = vunpack.c.l.b16 %v677
      %v966 = vunpack.c.l.b16 %v678
      %v967 = vunpack.c.l.b16 %v679
      %v968 = vunpack.c.l.b16 %v680
      %v969 = vunpack.c.l.b16 %v681
      %v970 = vunpack.c.l.b16 %v682
      %v971 = vunpack.c.l.b16 %v683
      %v972 = vunpack.c.l.b16 %v684
      %v973 = vunpack.c.l.b16 %v685
      %v974 = vunpack.c.l.b16 %v686
      %v975 = vunpack.c.l.b16 %v687
      %v976 = vunpack.c.l.b16 %v688
      %v977 = vunpack.c.l.b16 %v689
      %v978 = vunpack.c.l.b16 %v690
      %v979 = vunpack.c.l.b16 %v691
      %v980 = vunpack.c.l.b16 %v692
      %v981 = vunpack.c.l.b16 %v693
      %v982 = vunpack.c.l.b16 %v694
      %v983 = vunpack.c.l.b16 %v695
      %v984 = vunpack.c.l.b16 %v696
      %v985 = vunpack.c.l.b16 %v697
      %v986 = vunpack.c.l.b16 %v698
      %v987 = vunpack.c.l.b16 %v699
      %v988 = vunpack.c.l.b16 %v700
      %v989 = vunpack.c.l.b16 %v701
      %v990 = vunpack.c.l.b16 %v702
      %v991 = vunpack.c.l.b16 %v703
      %v992 = vunpack.c.l.b16 %v704
      %v993 = vunpack.c.l.b16 %v705
      %v994 = vunpack.c.l.b16 %v706
      %v995 = vunpack.c.l.b16 %v707
      %v996 = vunpack.c.l.b16 %v708
      %v997 = vunpack.c.l.b16 %v709
      %v998 = vunpack.c.l.b16 %v710
      %v999 = vunpack.c.l.b16 %v711
      %v1000 = vunpack.c.l.b16 %v712
      %v1001 = vunpack.c.l.b16 %v713
      %v1002 = vunpack.c.l.b16 %v714
      %v1003 = vunpack.c.l.b16 %v715
      %v1004 = vunpack.c.l.b16 %v716
      %v1005 = vunpack.c.l.b16 %v717
      %v1006 = vunpack.c.l.b16 %v718
      %v1007 = vunpack.c.l.b16 %v719
      %v1008 = vunpack.c.l.b16 %v720
      %v1009 = vunpack.c.l.b16 %v721
      %v1010 = vunpack.c.l.b16 %v722
      %v1011 = vunpack.c.l.b16 %v723
      %v1012 = vunpack.c.l.b16 %v724
      %v1013 = vunpack.c.l.b16 %v725
      %v1014 = vunpack.c.l.b16 %v726
      %v1015 = vunpack.c.l.b16 %v727
      %v1016 = vunpack.c.l.b16 %v728
      %v1017 = vunpack.c.l.b16 %v729
      %v1018 = vunpack.c.l.b16 %v730
      %v1019 = vunpack.c.l.b16 %v731
      %v1020 = vunpack.c.l.b16 %v732
      %v1021 = vunpack.c.l.b16 %v733
      %v1022 = vunpack.c.l.b16 %v734
      %v1023 = vunpack.c.l.b16 %v735
      %v1024 = vunpack.c.l.b16 %v736
      %v1025 = vunpack.c.l.b16 %v737
      %v1026 = vunpack.c.l.b16 %v738
      %v1027 = vunpack.c.l.b16 %v739
      %v1028 = vunpack.c.l.b16 %v740
      %v1029 = vunpack.c.l.b16 %v741
      %v1030 = vunpack.c.l.b16 %v742
      %v1031 = vunpack.c.l.b16 %v743
      %v1032 = vunpack.c.l.b16 %v744
      %v1033 = vunpack.c.l.b16 %v745
      %v1034 = vunpack.c.l.b16 %v746
      %v1035 = vunpack.c.l.b16 %v747
      %v1036 = vunpack.c.l.b16 %v748
      %v1037 = vunpack.c.l.b16 %v749
      %v1038 = vunpack.c.l.b16 %v750
      %v1039 = vunpack.c.l.b16 %v751
      %v1040 = vunpack.c.l.b16 %v752
      %v1041 = vunpack.c.l.b16 %v753
      %v1042 = vunpack.c.l.b16 %v754
      %v1043 = vunpack.c.l.b16 %v755
      %v1044 = vunpack.c.l.b16 %v756
      %v1045 = vunpack.c.l.b16 %v757
      %v1046 = vunpack.c.l.b16 %v758
      %v1047 = vunpack.c.l.b16 %v759
      %v1048 = vunpack.c.l.b16 %v760
      %v1049 = vunpack.c.l.b16 %v761
      %v1050 = vunpack.c.l.b16 %v762
      %v1051 = vunpack.c.l.b16 %v763
      %v1052 = vpack.c.b16 %v909, %v908
      %v1053 = vpack.c.b16 %v911, %v910
      %v1054 = vpack.c.b16 %v913, %v912
      %v1055 = vpack.c.b16 %v915, %v914
      %v1056 = vpack.c.b16 %v917, %v916
      %v1057 = vpack.c.b16 %v919, %v918
      %v1058 = vpack.c.b16 %v921, %v920
      %v1059 = vpack.c.b16 %v923, %v922
      %v1060 = vpack.c.b16 %v925, %v924
      %v1061 = vpack.c.b16 %v927, %v926
      %v1062 = vpack.c.b16 %v929, %v928
      %v1063 = vpack.c.b16 %v931, %v930
      %v1064 = vpack.c.b16 %v933, %v932
      %v1065 = vpack.c.b16 %v935, %v934
      %v1066 = vpack.c.b16 %v937, %v936
      %v1067 = vpack.c.b16 %v939, %v938
      %v1068 = vpack.c.b16 %v941, %v940
      %v1069 = vpack.c.b16 %v943, %v942
      %v1070 = vpack.c.b16 %v945, %v944
      %v1071 = vpack.c.b16 %v947, %v946
      %v1072 = vpack.c.b16 %v949, %v948
      %v1073 = vpack.c.b16 %v951, %v950
      %v1074 = vpack.c.b16 %v953, %v952
      %v1075 = vpack.c.b16 %v955, %v954
      %v1076 = vpack.c.b16 %v957, %v956
      %v1077 = vpack.c.b16 %v959, %v958
      %v1078 = vpack.c.b16 %v961, %v960
      %v1079 = vpack.c.b16 %v963, %v962
      %v1080 = vpack.c.b16 %v965, %v964
      %v1081 = vpack.c.b16 %v967, %v966
      %v1082 = vpack.c.b16 %v969, %v968
      %v1083 = vpack.c.b16 %v971, %v970
      %v1084 = vpack.c.b16 %v973, %v972
      %v1085 = vpack.c.b16 %v975, %v974
      %v1086 = vpack.c.b16 %v977, %v976
      %v1087 = vpack.c.b16 %v979, %v978
      %v1088 = vpack.c.b16 %v981, %v980
      %v1089 = vpack.c.b16 %v983, %v982
      %v1090 = vpack.c.b16 %v985, %v984
      %v1091 = vpack.c.b16 %v987, %v986
      %v1092 = vpack.c.b16 %v989, %v988
      %v1093 = vpack.c.b16 %v991, %v990
      %v1094 = vpack.c.b16 %v993, %v992
      %v1095 = vpack.c.b16 %v995, %v994
      %v1096 = vpack.c.b16 %v997, %v996
      %v1097 = vpack.c.b16 %v999, %v998
      %v1098 = vpack.c.b16 %v1001, %v1000
      %v1099 = vpack.c.b16 %v1003, %v1002
      %v1100 = vpack.c.b16 %v1005, %v1004
      %v1101 = vpack.c.b16 %v1007, %v1006
      %v1102 = vpack.c.b16 %v1009, %v1008
      %v1103 = vpack.c.b16 %v1011, %v1010
      %v1104 = vpack.c.b16 %v1013, %v1012
      %v1105 = vpack.c.b16 %v1015, %v1014
      %v1106 = vpack.c.b16 %v1017, %v1016
      %v1107 = vpack.c.b16 %v1019, %v1018
      %v1108 = vpack.c.b16 %v1021, %v1020
      %v1109 = vpack.c.b16 %v1023, %v1022
      %v1110 = vpack.c.b16 %v1025, %v1024
      %v1111 = vpack.c.b16 %v1027, %v1026
      %v1112 = vpack.c.b16 %v1029, %v1028
      %v1113 = vpack.c.b16 %v1031, %v1030
      %v1114 = vpack.c.b16 %v1033, %v1032
      %v1115 = vpack.c.b16 %v1035, %v1034
      %v1116 = vpack.c.b16 %v1037, %v1036
      %v1117 = vpack.c.b16 %v1039, %v1038
      %v1118 = vpack.c.b16 %v1041, %v1040
      %v1119 = vpack.c.b16 %v1043, %v1042
      %v1120 = vpack.c.b16 %v1045, %v1044
      %v1121 = vpack.c.b16 %v1047, %v1046
      %v1122 = vpack.c.b16 %v1049, %v1048
      %v1123 = vpack.c.b16 %v1051, %v1050
      %1196 = vmatprep.subr.bf16.mxu0 0
      %1197 = vmatpush1.bf16.msra.mxu0 %v1059
      %1198 = vmatprep.subr.bf16.mxu0 0
      %1199 = vmatpush1.bf16.msra.mxu0 %v1058
      %1200 = vmatprep.subr.bf16.mxu0 0
      %1201 = vmatpush1.bf16.msra.mxu0 %v1057
      %1202 = vmatprep.subr.bf16.mxu0 0
      %1203 = vmatpush1.bf16.msra.mxu0 %v1056
      %1204 = vmatprep.subr.bf16.mxu0 0
      %1205 = vmatpush1.bf16.msra.mxu0 %v1055
      %1206 = vmatprep.subr.bf16.mxu0 0
      %1207 = vmatpush1.bf16.msra.mxu0 %v1054
      %1208 = vmatprep.subr.bf16.mxu0 0
      %1209 = vmatpush1.bf16.msra.mxu0 %v1053
      %1210 = vmatprep.subr.bf16.mxu0 0
      %1211 = vmatpush1.bf16.msra.mxu0 %v1052
      %1212 = vmatprep.subr.bf16.mxu0 0
      %1213 = vmatpush2.bf16.msra.mxu0 %v1067
      %1214 = vmatprep.subr.bf16.mxu0 0
      %1215 = vmatpush2.bf16.msra.mxu0 %v1066
      %1216 = vmatprep.subr.bf16.mxu0 0
      %1217 = vmatpush2.bf16.msra.mxu0 %v1065
      %1218 = vmatprep.subr.bf16.mxu0 0
      %1219 = vmatpush2.bf16.msra.mxu0 %v1064
      %1220 = vmatprep.subr.bf16.mxu0 0
      %1221 = vmatpush2.bf16.msra.mxu0 %v1063
      %1222 = vmatprep.subr.bf16.mxu0 0
      %1223 = vmatpush2.bf16.msra.mxu0 %v1062
      %1224 = vmatprep.subr.bf16.mxu0 0
      %1225 = vmatpush2.bf16.msra.mxu0 %v1061
      %1226 = vmatprep.subr.bf16.mxu0 0
      %1227 = vmatpush2.bf16.msra.mxu0 %v1060
      %1228 = vmatprep.mubr.bf16.mxu0 %v585
      %1229 = vmatmul.mubr.bf16.gmra.mxu0 %v584
      %v1230 = vpop.f32.mrf.mxu0
      %v1231 = vadd.f32 0.0, %v1230
      %v1232 = vpop.f32.mrf.mxu0
      %v1233 = vpop.f32.mrf.mxu0
      %v1234 = vadd.f32 0.0, %v1233
      %v1235 = vpop.f32.mrf.mxu0
      %1236 = vmatprep.mubr.bf16.mxu0 %v594
      %1237 = vmatmul.mubr.bf16.gmra.mxu0 %v593
      %v1238 = vpop.f32.mrf.mxu0
      %v1239 = vadd.f32 0.0, %v1238
      %v1240 = vpop.f32.mrf.mxu0
      %v1241 = vpop.f32.mrf.mxu0
      %v1242 = vadd.f32 0.0, %v1241
      %v1243 = vpop.f32.mrf.mxu0
      %1244 = vmatprep.mubr.bf16.mxu0 %v603
      %1245 = vmatmul.mubr.bf16.gmra.mxu0 %v602
      %v1246 = vpop.f32.mrf.mxu0
      %v1247 = vadd.f32 0.0, %v1246
      %v1248 = vpop.f32.mrf.mxu0
      %v1249 = vpop.f32.mrf.mxu0
      %v1250 = vadd.f32 0.0, %v1249
      %v1251 = vpop.f32.mrf.mxu0
      %1252 = vmatprep.mubr.bf16.mxu0 %v612
      %1253 = vmatmul.mubr.bf16.gmra.mxu0 %v611
      %v1254 = vpop.f32.mrf.mxu0
      %v1255 = vadd.f32 0.0, %v1254
      %v1256 = vpop.f32.mrf.mxu0
      %v1257 = vpop.f32.mrf.mxu0
      %v1258 = vadd.f32 0.0, %v1257
      %v1259 = vpop.f32.mrf.mxu0
      %1260 = vdwg.mxu0
      %1261 = vmatprep.subr.bf16.mxu0 0
      %1262 = vmatpush1.bf16.msra.mxu0 %v1075
      %1263 = vmatprep.subr.bf16.mxu0 0
      %1264 = vmatpush1.bf16.msra.mxu0 %v1074
      %1265 = vmatprep.subr.bf16.mxu0 0
      %1266 = vmatpush1.bf16.msra.mxu0 %v1073
      %1267 = vmatprep.subr.bf16.mxu0 0
      %1268 = vmatpush1.bf16.msra.mxu0 %v1072
      %1269 = vmatprep.subr.bf16.mxu0 0
      %1270 = vmatpush1.bf16.msra.mxu0 %v1071
      %1271 = vmatprep.subr.bf16.mxu0 0
      %1272 = vmatpush1.bf16.msra.mxu0 %v1070
      %1273 = vmatprep.subr.bf16.mxu0 0
      %1274 = vmatpush1.bf16.msra.mxu0 %v1069
      %1275 = vmatprep.subr.bf16.mxu0 0
      %1276 = vmatpush1.bf16.msra.mxu0 %v1068
      %1277 = vmatprep.subr.bf16.mxu0 0
      %1278 = vmatpush2.bf16.msra.mxu0 %v1083
      %1279 = vmatprep.subr.bf16.mxu0 0
      %1280 = vmatpush2.bf16.msra.mxu0 %v1082
      %1281 = vmatprep.subr.bf16.mxu0 0
      %1282 = vmatpush2.bf16.msra.mxu0 %v1081
      %1283 = vmatprep.subr.bf16.mxu0 0
      %1284 = vmatpush2.bf16.msra.mxu0 %v1080
      %1285 = vmatprep.subr.bf16.mxu0 0
      %1286 = vmatpush2.bf16.msra.mxu0 %v1079
      %1287 = vmatprep.subr.bf16.mxu0 0
      %1288 = vmatpush2.bf16.msra.mxu0 %v1078
      %1289 = vmatprep.subr.bf16.mxu0 0
      %1290 = vmatpush2.bf16.msra.mxu0 %v1077
      %1291 = vmatprep.subr.bf16.mxu0 0
      %1292 = vmatpush2.bf16.msra.mxu0 %v1076
      %1293 = vmatprep.mubr.bf16.mxu0 %v587
      %1294 = vmatmul.mubr.bf16.gmra.mxu0 %v586
      %v1295 = vpop.f32.mrf.mxu0
      %v1296 = vadd.f32 %v1231, %v1295
      %v1297 = vpop.f32.mrf.mxu0
      %v1298 = vpop.f32.mrf.mxu0
      %v1299 = vadd.f32 %v1234, %v1298
      %v1300 = vpop.f32.mrf.mxu0
      %1301 = vmatprep.mubr.bf16.mxu0 %v596
      %1302 = vmatmul.mubr.bf16.gmra.mxu0 %v595
      %v1303 = vpop.f32.mrf.mxu0
      %v1304 = vadd.f32 %v1239, %v1303
      %v1305 = vpop.f32.mrf.mxu0
      %v1306 = vpop.f32.mrf.mxu0
      %v1307 = vadd.f32 %v1242, %v1306
      %v1308 = vpop.f32.mrf.mxu0
      %1309 = vmatprep.mubr.bf16.mxu0 %v605
      %1310 = vmatmul.mubr.bf16.gmra.mxu0 %v604
      %v1311 = vpop.f32.mrf.mxu0
      %v1312 = vadd.f32 %v1247, %v1311
      %v1313 = vpop.f32.mrf.mxu0
      %v1314 = vpop.f32.mrf.mxu0
      %v1315 = vadd.f32 %v1250, %v1314
      %v1316 = vpop.f32.mrf.mxu0
      %1317 = vmatprep.mubr.bf16.mxu0 %v614
      %1318 = vmatmul.mubr.bf16.gmra.mxu0 %v613
      %v1319 = vpop.f32.mrf.mxu0
      %v1320 = vadd.f32 %v1255, %v1319
      %v1321 = vpop.f32.mrf.mxu0
      %v1322 = vpop.f32.mrf.mxu0
      %v1323 = vadd.f32 %v1258, %v1322
      %v1324 = vpop.f32.mrf.mxu0
      %1325 = vdwg.mxu0
      %1326 = vmatprep.subr.bf16.mxu0 0
      %1327 = vmatpush1.bf16.msra.mxu0 %v1091
      %1328 = vmatprep.subr.bf16.mxu0 0
      %1329 = vmatpush1.bf16.msra.mxu0 %v1090
      %1330 = vmatprep.subr.bf16.mxu0 0
      %1331 = vmatpush1.bf16.msra.mxu0 %v1089
      %1332 = vmatprep.subr.bf16.mxu0 0
      %1333 = vmatpush1.bf16.msra.mxu0 %v1088
      %1334 = vmatprep.subr.bf16.mxu0 0
      %1335 = vmatpush1.bf16.msra.mxu0 %v1087
      %1336 = vmatprep.subr.bf16.mxu0 0
      %1337 = vmatpush1.bf16.msra.mxu0 %v1086
      %1338 = vmatprep.subr.bf16.mxu0 0
      %1339 = vmatpush1.bf16.msra.mxu0 %v1085
      %1340 = vmatprep.subr.bf16.mxu0 0
      %1341 = vmatpush1.bf16.msra.mxu0 %v1084
      %1342 = vmatprep.subr.bf16.mxu0 0
      %1343 = vmatpush2.bf16.msra.mxu0 %v1099
      %1344 = vmatprep.subr.bf16.mxu0 0
      %1345 = vmatpush2.bf16.msra.mxu0 %v1098
      %1346 = vmatprep.subr.bf16.mxu0 0
      %1347 = vmatpush2.bf16.msra.mxu0 %v1097
      %1348 = vmatprep.subr.bf16.mxu0 0
      %1349 = vmatpush2.bf16.msra.mxu0 %v1096
      %1350 = vmatprep.subr.bf16.mxu0 0
      %1351 = vmatpush2.bf16.msra.mxu0 %v1095
      %1352 = vmatprep.subr.bf16.mxu0 0
      %1353 = vmatpush2.bf16.msra.mxu0 %v1094
      %1354 = vmatprep.subr.bf16.mxu0 0
      %1355 = vmatpush2.bf16.msra.mxu0 %v1093
      %1356 = vmatprep.subr.bf16.mxu0 0
      %1357 = vmatpush2.bf16.msra.mxu0 %v1092
      %1358 = vmatprep.mubr.bf16.mxu0 %v589
      %1359 = vmatmul.mubr.bf16.gmra.mxu0 %v588
      %v1360 = vpop.f32.mrf.mxu0
      %v1361 = vadd.f32 %v1296, %v1360
      %v1362 = vpop.f32.mrf.mxu0
      %v1363 = vpop.f32.mrf.mxu0
      %v1364 = vadd.f32 %v1299, %v1363
      %v1365 = vpop.f32.mrf.mxu0
      %1366 = vmatprep.mubr.bf16.mxu0 %v598
      %1367 = vmatmul.mubr.bf16.gmra.mxu0 %v597
      %v1368 = vpop.f32.mrf.mxu0
      %v1369 = vadd.f32 %v1304, %v1368
      %v1370 = vpop.f32.mrf.mxu0
      %v1371 = vpop.f32.mrf.mxu0
      %v1372 = vadd.f32 %v1307, %v1371
      %v1373 = vpop.f32.mrf.mxu0
      %1374 = vmatprep.mubr.bf16.mxu0 %v607
      %1375 = vmatmul.mubr.bf16.gmra.mxu0 %v606
      %v1376 = vpop.f32.mrf.mxu0
      %v1377 = vadd.f32 %v1312, %v1376
      %v1378 = vpop.f32.mrf.mxu0
      %v1379 = vpop.f32.mrf.mxu0
      %v1380 = vadd.f32 %v1315, %v1379
      %v1381 = vpop.f32.mrf.mxu0
      %1382 = vmatprep.mubr.bf16.mxu0 %v616
      %1383 = vmatmul.mubr.bf16.gmra.mxu0 %v615
      %v1384 = vpop.f32.mrf.mxu0
      %v1385 = vadd.f32 %v1320, %v1384
      %v1386 = vpop.f32.mrf.mxu0
      %v1387 = vpop.f32.mrf.mxu0
      %v1388 = vadd.f32 %v1323, %v1387
      %v1389 = vpop.f32.mrf.mxu0
      %1390 = vdwg.mxu0
      %1391 = vmatprep.subr.bf16.mxu0 0
      %1392 = vmatpush1.bf16.msra.mxu0 %v1107
      %1393 = vmatprep.subr.bf16.mxu0 0
      %1394 = vmatpush1.bf16.msra.mxu0 %v1106
      %1395 = vmatprep.subr.bf16.mxu0 0
      %1396 = vmatpush1.bf16.msra.mxu0 %v1105
      %1397 = vmatprep.subr.bf16.mxu0 0
      %1398 = vmatpush1.bf16.msra.mxu0 %v1104
      %1399 = vmatprep.subr.bf16.mxu0 0
      %1400 = vmatpush1.bf16.msra.mxu0 %v1103
      %1401 = vmatprep.subr.bf16.mxu0 0
      %1402 = vmatpush1.bf16.msra.mxu0 %v1102
      %1403 = vmatprep.subr.bf16.mxu0 0
      %1404 = vmatpush1.bf16.msra.mxu0 %v1101
      %1405 = vmatprep.subr.bf16.mxu0 0
      %1406 = vmatpush1.bf16.msra.mxu0 %v1100
      %1407 = vmatprep.subr.bf16.mxu0 0
      %1408 = vmatpush2.bf16.msra.mxu0 %v1115
      %1409 = vmatprep.subr.bf16.mxu0 0
      %1410 = vmatpush2.bf16.msra.mxu0 %v1114
      %1411 = vmatprep.subr.bf16.mxu0 0
      %1412 = vmatpush2.bf16.msra.mxu0 %v1113
      %1413 = vmatprep.subr.bf16.mxu0 0
      %1414 = vmatpush2.bf16.msra.mxu0 %v1112
      %1415 = vmatprep.subr.bf16.mxu0 0
      %1416 = vmatpush2.bf16.msra.mxu0 %v1111
      %1417 = vmatprep.subr.bf16.mxu0 0
      %1418 = vmatpush2.bf16.msra.mxu0 %v1110
      %1419 = vmatprep.subr.bf16.mxu0 0
      %1420 = vmatpush2.bf16.msra.mxu0 %v1109
      %1421 = vmatprep.subr.bf16.mxu0 0
      %1422 = vmatpush2.bf16.msra.mxu0 %v1108
      %1423 = vmatprep.mubr.bf16.mxu0 %v591
      %1424 = vmatmul.mubr.bf16.gmra.mxu0 %v590
      %v1425 = vpop.f32.mrf.mxu0
      %v1426 = vadd.f32 %v1361, %v1425
      %v1427 = vpop.f32.mrf.mxu0
      %v1428 = vpop.f32.mrf.mxu0
      %v1429 = vadd.f32 %v1364, %v1428
      %v1430 = vpop.f32.mrf.mxu0
      %1431 = vmatprep.mubr.bf16.mxu0 %v600
      %1432 = vmatmul.mubr.bf16.gmra.mxu0 %v599
      %v1433 = vpop.f32.mrf.mxu0
      %v1434 = vadd.f32 %v1369, %v1433
      %v1435 = vpop.f32.mrf.mxu0
      %v1436 = vpop.f32.mrf.mxu0
      %v1437 = vadd.f32 %v1372, %v1436
      %v1438 = vpop.f32.mrf.mxu0
      %1439 = vmatprep.mubr.bf16.mxu0 %v609
      %1440 = vmatmul.mubr.bf16.gmra.mxu0 %v608
      %v1441 = vpop.f32.mrf.mxu0
      %v1442 = vadd.f32 %v1377, %v1441
      %v1443 = vpop.f32.mrf.mxu0
      %v1444 = vpop.f32.mrf.mxu0
      %v1445 = vadd.f32 %v1380, %v1444
      %v1446 = vpop.f32.mrf.mxu0
      %1447 = vmatprep.mubr.bf16.mxu0 %v618
      %1448 = vmatmul.mubr.bf16.gmra.mxu0 %v617
      %v1449 = vpop.f32.mrf.mxu0
      %v1450 = vadd.f32 %v1385, %v1449
      %v1451 = vpop.f32.mrf.mxu0
      %v1452 = vpop.f32.mrf.mxu0
      %v1453 = vadd.f32 %v1388, %v1452
      %v1454 = vpop.f32.mrf.mxu0
      %1455 = vdwg.mxu0
      %1456 = vmatprep.subr.bf16.mxu0 0
      %1457 = vmatpush1.bf16.msra.mxu0 %v1123
      %1458 = vmatprep.subr.bf16.mxu0 0
      %1459 = vmatpush1.bf16.msra.mxu0 %v1122
      %1460 = vmatprep.subr.bf16.mxu0 0
      %1461 = vmatpush1.bf16.msra.mxu0 %v1121
      %1462 = vmatprep.subr.bf16.mxu0 0
      %1463 = vmatpush1.bf16.msra.mxu0 %v1120
      %1464 = vmatprep.subr.bf16.mxu0 0
      %1465 = vmatpush1.bf16.msra.mxu0 %v1119
      %1466 = vmatprep.subr.bf16.mxu0 0
      %1467 = vmatpush1.bf16.msra.mxu0 %v1118
      %1468 = vmatprep.subr.bf16.mxu0 0
      %1469 = vmatpush1.bf16.msra.mxu0 %v1117
      %1470 = vmatprep.subr.bf16.mxu0 0
      %1471 = vmatpush1.bf16.msra.mxu0 %v1116
      %1472 = vmatprep.subr.bf16.mxu0 0
      %1473 = vmatpush2.bf16.msra.mxu0 0
      %1474 = vmatprep.subr.bf16.mxu0 0
      %1475 = vmatpush2.bf16.msra.mxu0 0
      %1476 = vmatprep.subr.bf16.mxu0 0
      %1477 = vmatpush2.bf16.msra.mxu0 0
      %1478 = vmatprep.subr.bf16.mxu0 0
      %1479 = vmatpush2.bf16.msra.mxu0 0
      %1480 = vmatprep.subr.bf16.mxu0 0
      %1481 = vmatpush2.bf16.msra.mxu0 0
      %1482 = vmatprep.subr.bf16.mxu0 0
      %1483 = vmatpush2.bf16.msra.mxu0 0
      %1484 = vmatprep.subr.bf16.mxu0 0
      %1485 = vmatpush2.bf16.msra.mxu0 0
      %1486 = vmatprep.subr.bf16.mxu0 0
      %1487 = vmatpush2.bf16.msra.mxu0 0
      %1488 = vmatprep.mubr.bf16.mxu0 0
      %1489 = vmatmul.mubr.bf16.gmra.mxu0 %v592
      %v1490 = vpop.f32.mrf.mxu0
      %v1491 = vadd.f32 %v1426, %v1490
      %v1492 = vpop.f32.mrf.mxu0
      %v1493 = vpop.f32.mrf.mxu0
      %v1494 = vadd.f32 %v1429, %v1493
      %v1495 = vpop.f32.mrf.mxu0
      %1496 = vmatprep.mubr.bf16.mxu0 0
      %1497 = vmatmul.mubr.bf16.gmra.mxu0 %v601
      %v1498 = vpop.f32.mrf.mxu0
      %v1499 = vadd.f32 %v1434, %v1498
      %v1500 = vpop.f32.mrf.mxu0
      %v1501 = vpop.f32.mrf.mxu0
      %v1502 = vadd.f32 %v1437, %v1501
      %v1503 = vpop.f32.mrf.mxu0
      %1504 = vmatprep.mubr.bf16.mxu0 0
      %1505 = vmatmul.mubr.bf16.gmra.mxu0 %v610
      %v1506 = vpop.f32.mrf.mxu0
      %v1507 = vadd.f32 %v1442, %v1506
      %v1508 = vpop.f32.mrf.mxu0
      %v1509 = vpop.f32.mrf.mxu0
      %v1510 = vadd.f32 %v1445, %v1509
      %v1511 = vpop.f32.mrf.mxu0
      %1512 = vmatprep.mubr.bf16.mxu0 0
      %1513 = vmatmul.mubr.bf16.gmra.mxu0 %v619
      %v1514 = vpop.f32.mrf.mxu0
      %v1515 = vadd.f32 %v1450, %v1514
      %v1516 = vpop.f32.mrf.mxu0
      %v1517 = vpop.f32.mrf.mxu0
      %v1518 = vadd.f32 %v1453, %v1517
      %v1519 = vpop.f32.mrf.mxu0
      %1520 = vdwg.mxu0
      %v1521 = vpack.c.bf16 %v1494, %v1491
      %v1522 = vpack.c.bf16 %v1502, %v1499
      %v1523 = vpack.c.bf16 %v1510, %v1507
      %v1524 = vpack.c.bf16 %v1518, %v1515
      %v1529 = vunpack.c.l.b16 %v1521
      %v1530 = vunpack.c.h.b16 %v1521
      %v1531 = vunpack.c.l.b16 %v1522
      %v1532 = vunpack.c.h.b16 %v1522
      %v1533 = vunpack.c.l.b16 %v1523
      %v1534 = vunpack.c.h.b16 %v1523
      %v1535 = vunpack.c.l.b16 %v1524
      %v1536 = vunpack.c.h.b16 %v1524
      %v1537 = vpack.c.b16 %v1529, %v1529
      %v1538 = vpack.c.b16 %v1530, %v1530
      %v1539 = vpack.c.b16 %v1531, %v1531
      %v1540 = vpack.c.b16 %v1532, %v1532
      %v1541 = vpack.c.b16 %v1533, %v1533
      %v1542 = vpack.c.b16 %v1534, %v1534
      %v1543 = vpack.c.b16 %v1535, %v1535
      %v1544 = vpack.c.b16 %v1536, %v1536
      %1553 = vst [vmem:[%s204] sm:$0xf] %v1537
      %1554 = vst [vmem:[%s204 + $0x4] sm:$0xf] %v1538
      %1555 = vst [vmem:[%s204 + $0x8] sm:$0xf] %v1539
      %1556 = vst [vmem:[%s204 + $0xc] sm:$0xf] %v1540
      %1557 = vst [vmem:[%s204 + $0x10] sm:$0xf] %v1541
      %1558 = vst [vmem:[%s204 + $0x14] sm:$0xf] %v1542
      %1559 = vst [vmem:[%s204 + $0x18] sm:$0xf] %v1543
      %1560 = vst [vmem:[%s204 + $0x1c] sm:$0xf] %v1544
      %v1561 = vadd.f32 %v1491, %v1494
      %v1562 = vadd.f32 %v1561, %v1499
      %v1563 = vadd.f32 %v1562, %v1502
      %v1564 = vadd.f32 %v1563, %v1507
      %v1565 = vadd.f32 %v1564, %v1510
      %v1566 = vadd.f32 %v1565, %v1515
      %v1567 = vadd.f32 %v1566, %v1518
      %v1568 = vrot.slane %v1567, 4
      %v1569 = vadd.f32 %v1567, %v1568
      %v1570 = vrot.slane %v1569, 2
      %v1571 = vadd.f32 %v1569, %v1570
      %v1572 = vrot.slane %v1571, 1
      %v1573 = vadd.f32 %v1571, %v1572
      %1574 = vst [vmem:[%s208] sm:$0x1] %v1573
      %v1575 = vmul.f32 %v1491, %v1491
      %v1576 = vmul.f32 %v1494, %v1494
      %v1577 = vmul.f32 %v1499, %v1499
      %v1578 = vmul.f32 %v1502, %v1502
      %v1579 = vmul.f32 %v1507, %v1507
      %v1580 = vmul.f32 %v1510, %v1510
      %v1581 = vmul.f32 %v1515, %v1515
      %v1582 = vmul.f32 %v1518, %v1518
      %v1583 = vadd.f32 %v1575, %v1576
      %v1584 = vadd.f32 %v1583, %v1577
      %v1585 = vadd.f32 %v1584, %v1578
      %v1586 = vadd.f32 %v1585, %v1579
      %v1587 = vadd.f32 %v1586, %v1580
      %v1588 = vadd.f32 %v1587, %v1581
      %v1589 = vadd.f32 %v1588, %v1582
      %v1590 = vrot.slane %v1589, 4
      %v1591 = vadd.f32 %v1589, %v1590
      %v1592 = vrot.slane %v1591, 2
      %v1593 = vadd.f32 %v1591, %v1592
      %v1594 = vrot.slane %v1593, 1
      %v1595 = vadd.f32 %v1593, %v1594
      %1596 = vst [vmem:[%s208 + $0x1] sm:$0x1] %v1595
      %p1597 = scmp.lt.s32.totalorder %s16, 1
      %s1598 = scalar_select %p1597, %s16, 1
      %s1599 = smul.addr %s1598, 8
      %s1600 = smul.addr %s1599, 4
      %s1601 = scalar_lea.vmem %s3, %s1600
      %p1602 = scmp.lt.s32.totalorder %s16, 1
      %s1603 = scalar_select %p1602, %s16, 1
      %s1604 = smul.addr %s1603, 8
      %s1605 = scalar_lea.vmem %s4, %s1604
      // Predicated region
      $region40: #{bottleneck_block_forward.5} parent=31 // pred_check
        %p1606 = pneg %p102
      $region41: #{bottleneck_block_forward.5} parent=31 // pred_check_branch
        %1608 = sbr.rel (%p1606) target = $region43
      $region42: #{bottleneck_block_forward.5} parent=31 // pred_region
        _
      $region43: #{bottleneck_block_forward.5} parent=31 // pred_fallthru
        _
      // Predicated region
      $region44: #{bottleneck_block_forward.5} parent=31 // pred_check
        %p1609 = pneg %p128
      $region45: #{bottleneck_block_forward.5} parent=31 // pred_check_branch
        %1611 = sbr.rel (%p1609) target = $region47
      $region46: #{bottleneck_block_forward.5} parent=31 // pred_region
        _
      $region47: #{bottleneck_block_forward.5} parent=31 // pred_fallthru
        _
    $region32: #{bottleneck_block_forward.5} parent=5 // pred_fallthru
      _
    %p1612 = scmp.le.s32.totalorder 2, %s11
    // Predicated region
    $region48: #{bottleneck_block_forward.5} parent=5 // pred_check
      %p1613 = pneg %p1612
    $region49: #{bottleneck_block_forward.5} parent=5 // pred_check_branch
      %1615 = sbr.rel (%p1613) target = $region51
    $region50: #{bottleneck_block_forward.5} parent=5 // pred_region
      %s1616 = ssub.s32 %s11, 2
      // Predicated region
      $region52: #{bottleneck_block_forward.5} parent=50 // pred_check
        %p1617 = pneg %p108
      $region53: #{bottleneck_block_forward.5} parent=50 // pred_check_branch
        %1619 = sbr.rel (%p1617) target = $region55
      $region54: #{bottleneck_block_forward.5} parent=50 // pred_region
        %p1620 = scmp.lt.s32.totalorder %s17, 1
        %s1621 = scalar_select %p1620, %s17, 1
        %s1622 = smul.addr %s1621, 8
        %s1623 = smul.addr %s1622, 4
        %s1624 = scalar_lea.vmem %s3, %s1623
      $region55: #{bottleneck_block_forward.5} parent=50 // pred_fallthru
        _
      // Predicated region
      $region56: #{bottleneck_block_forward.5} parent=50 // pred_check
        %p1625 = pneg %p134
      $region57: #{bottleneck_block_forward.5} parent=50 // pred_check_branch
        %1627 = sbr.rel (%p1625) target = $region59
      $region58: #{bottleneck_block_forward.5} parent=50 // pred_region
        %p1628 = scmp.lt.s32.totalorder %s17, 1
        %s1629 = scalar_select %p1628, %s17, 1
        %s1630 = smul.addr %s1629, 8
        %s1631 = scalar_lea.vmem %s4, %s1630
      $region59: #{bottleneck_block_forward.5} parent=50 // pred_fallthru
        _
    $region51: #{bottleneck_block_forward.5} parent=5 // pred_fallthru
      _
  $region6: #{bottleneck_block_forward.5} parent=0 // loop_footer
    %s15 = sadd.s32 1, %s11
  $region7: #{bottleneck_block_forward.5} parent=0 // loop_footer_branch
    %10 = sbr.rel target = $region3
  $region8: #{bottleneck_block_forward.5} parent=0 // loop_exit
    _

// kernel: bottleneck_block_forward.6
$region0: #{bottleneck_block_forward.6}
  #allocation0 [shape = 'u32[]', space=smem, size = 0x4, offset = 0x4, fixed_abs, tag = 'smem constant byte address 0x4 - core index']
  #allocation1 [shape = 'u32[144,128]{1,0:T(1,128)}', space=vmem, size = 0x12000, scoped, tag = 'internal scratch']
  %s0 = inlined_call_operand.vmem [shape: bf16[2,64,128], index: 0, kind: input, shape index: {}]
  %s1 = inlined_call_operand.vmem [shape: f32[2,128], index: 1, kind: input, shape index: {}]
  %s2 = inlined_call_operand.vmem [shape: bf16[2,64,128], index: 2, kind: input, shape index: {}]
  %s3 = inlined_call_operand.vmem [shape: bf16[128,128], index: 3, kind: input, shape index: {}]
  %s4 = inlined_call_operand.vmem [shape: bf16[128,128], index: 4, kind: input, shape index: {}]
  %s5 = inlined_call_operand.vmem [shape: f32[2,8,128], index: 5, kind: output, shape index: {0}]
  %s6 = inlined_call_operand.vmem [shape: f32[2,8,128], index: 6, kind: output, shape index: {1}]
  %7 = xla_tuple %s5, %s6
  %s8 = sld [smem:[#allocation0]]
  $region61: #{bottleneck_block_forward.6} parent=0
    _
  %s10 = ssub.s32 1, %s8
  %s11 = scalar_select 0, %s10, %s8
  loop: start=0, step=1, limit=4
  $region2: #{bottleneck_block_forward.6} parent=0 // loop_pre_header
    _
  $region3: #{bottleneck_block_forward.6} parent=0 // loop_header
    %s13 = sphi 0, %s17
    %p14 = scmp.ge.s32.totalorder %s13, 4
    %s23 = sphi 0, %s25
    %s26 = sphi 0, %s23
    %s27 = sphi 0, %s26
    %s43 = sphi 0, %s27
    %s47 = sphi 0, %s47
    %s49 = sphi 0, %s47
    %s50 = sphi 0, %s49
    %s64 = sphi 0, %s50
    %s70 = sphi 0, %s72
    %s73 = sphi 0, %s70
    %s74 = sphi 0, %s73
    %s90 = sphi 0, %s74
    %s94 = sphi 0, %s94
    %s96 = sphi 0, %s94
    %s97 = sphi 0, %s96
    %s111 = sphi 0, %s97
    %s115 = sphi 0, %s115
    %s117 = sphi 0, %s115
    %s118 = sphi 0, %s117
    %s132 = sphi 0, %s118
    %s138 = sphi 0, %s140
    %s141 = sphi 0, %s138
    %s142 = sphi 0, %s141
    %s158 = sphi 0, %s142
    %s164 = sphi 0, %s166
    %s167 = sphi 0, %s164
    %s168 = sphi 0, %s167
    %s184 = sphi 0, %s168
  $region4: #{bottleneck_block_forward.6} parent=0 // loop_header_branch
    %16 = sbr.rel (%p14) target = $region8
  $region5: #{bottleneck_block_forward.6} parent=0 // loop_body
    %s18 = ssub.s32 %s13, 1
    %s19 = ssub.s32 %s13, 2
    %s20 = sadd.s32 %s13, 1
    %s21 = ssub.s32 %s13, %s20
    %p22 = scmp.eq.s32.totalorder %s21, 0
    %s24 = sadd.s32 %s23, 1
    %s25 = scalar_select %p22, %s23, %s24
    %p28 = pneg %p22
    %p29 = scmp.eq.s32.totalorder %s13, 1
    %p30 = por %p28, %p29
    %p31 = scmp.ne.s32.totalorder %s23, %s26
    %p32 = scmp.eq.s32.totalorder %s13, 0
    %p33 = por %p31, %p32
    %p34 = scmp.ne.s32.totalorder %s23, %s26
    %p35 = scmp.eq.s32.totalorder %s18, 1
    %p36 = por %p34, %p35
    %p37 = scmp.ne.s32.totalorder %s26, %s27
    %p38 = scmp.eq.s32.totalorder %s18, 0
    %p39 = por %p37, %p38
    %p40 = scmp.ne.s32.totalorder %s26, %s27
    %p41 = scmp.eq.s32.totalorder %s19, 1
    %p42 = por %p40, %p41
    %p44 = scmp.ne.s32.totalorder %s27, %s43
    %p45 = scmp.eq.s32.totalorder %s19, 0
    %p46 = por %p44, %p45
    %s48 = sadd.s32 %s47, 1
    %p51 = scmp.eq.s32.totalorder %s13, 1
    %p52 = scmp.ne.s32.totalorder %s47, %s49
    %p53 = scmp.eq.s32.totalorder %s13, 0
    %p54 = por %p52, %p53
    %p55 = scmp.ne.s32.totalorder %s47, %s49
    %p56 = scmp.eq.s32.totalorder %s18, 1
    %p57 = por %p55, %p56
    %p58 = scmp.ne.s32.totalorder %s49, %s50
    %p59 = scmp.eq.s32.totalorder %s18, 0
    %p60 = por %p58, %p59
    %p61 = scmp.ne.s32.totalorder %s49, %s50
    %p62 = scmp.eq.s32.totalorder %s19, 1
    %p63 = por %p61, %p62
    %p65 = scmp.ne.s32.totalorder %s50, %s64
    %p66 = scmp.eq.s32.totalorder %s19, 0
    %p67 = por %p65, %p66
    %s68 = ssub.s32 %s13, %s20
    %p69 = scmp.eq.s32.totalorder %s68, 0
    %s71 = sadd.s32 %s70, 1
    %s72 = scalar_select %p69, %s70, %s71
    %p75 = pneg %p69
    %p76 = scmp.eq.s32.totalorder %s13, 1
    %p77 = por %p75, %p76
    %p78 = scmp.ne.s32.totalorder %s70, %s73
    %p79 = scmp.eq.s32.totalorder %s13, 0
    %p80 = por %p78, %p79
    %p81 = scmp.ne.s32.totalorder %s70, %s73
    %p82 = scmp.eq.s32.totalorder %s18, 1
    %p83 = por %p81, %p82
    %p84 = scmp.ne.s32.totalorder %s73, %s74
    %p85 = scmp.eq.s32.totalorder %s18, 0
    %p86 = por %p84, %p85
    %p87 = scmp.ne.s32.totalorder %s73, %s74
    %p88 = scmp.eq.s32.totalorder %s19, 1
    %p89 = por %p87, %p88
    %p91 = scmp.ne.s32.totalorder %s74, %s90
    %p92 = scmp.eq.s32.totalorder %s19, 0
    %p93 = por %p91, %p92
    %s95 = sadd.s32 %s94, 1
    %p98 = scmp.eq.s32.totalorder %s13, 1
    %p99 = scmp.ne.s32.totalorder %s94, %s96
    %p100 = scmp.eq.s32.totalorder %s13, 0
    %p101 = por %p99, %p100
    %p102 = scmp.ne.s32.totalorder %s94, %s96
    %p103 = scmp.eq.s32.totalorder %s18, 1
    %p104 = por %p102, %p103
    %p105 = scmp.ne.s32.totalorder %s96, %s97
    %p106 = scmp.eq.s32.totalorder %s18, 0
    %p107 = por %p105, %p106
    %p108 = scmp.ne.s32.totalorder %s96, %s97
    %p109 = scmp.eq.s32.totalorder %s19, 1
    %p110 = por %p108, %p109
    %p112 = scmp.ne.s32.totalorder %s97, %s111
    %p113 = scmp.eq.s32.totalorder %s19, 0
    %p114 = por %p112, %p113
    %s116 = sadd.s32 %s115, 1
    %p119 = scmp.eq.s32.totalorder %s13, 1
    %p120 = scmp.ne.s32.totalorder %s115, %s117
    %p121 = scmp.eq.s32.totalorder %s13, 0
    %p122 = por %p120, %p121
    %p123 = scmp.ne.s32.totalorder %s115, %s117
    %p124 = scmp.eq.s32.totalorder %s18, 1
    %p125 = por %p123, %p124
    %p126 = scmp.ne.s32.totalorder %s117, %s118
    %p127 = scmp.eq.s32.totalorder %s18, 0
    %p128 = por %p126, %p127
    %p129 = scmp.ne.s32.totalorder %s117, %s118
    %p130 = scmp.eq.s32.totalorder %s19, 1
    %p131 = por %p129, %p130
    %p133 = scmp.ne.s32.totalorder %s118, %s132
    %p134 = scmp.eq.s32.totalorder %s19, 0
    %p135 = por %p133, %p134
    %s136 = ssub.s32 %s13, %s20
    %p137 = scmp.eq.s32.totalorder %s136, 0
    %s139 = sadd.s32 %s138, 1
    %s140 = scalar_select %p137, %s138, %s139
    %p143 = pneg %p137
    %p144 = scmp.eq.s32.totalorder %s13, 1
    %p145 = por %p143, %p144
    %p146 = scmp.ne.s32.totalorder %s138, %s141
    %p147 = scmp.eq.s32.totalorder %s13, 0
    %p148 = por %p146, %p147
    %p149 = scmp.ne.s32.totalorder %s138, %s141
    %p150 = scmp.eq.s32.totalorder %s18, 1
    %p151 = por %p149, %p150
    %p152 = scmp.ne.s32.totalorder %s141, %s142
    %p153 = scmp.eq.s32.totalorder %s18, 0
    %p154 = por %p152, %p153
    %p155 = scmp.ne.s32.totalorder %s141, %s142
    %p156 = scmp.eq.s32.totalorder %s19, 1
    %p157 = por %p155, %p156
    %p159 = scmp.ne.s32.totalorder %s142, %s158
    %p160 = scmp.eq.s32.totalorder %s19, 0
    %p161 = por %p159, %p160
    %s162 = ssub.s32 %s13, %s20
    %p163 = scmp.eq.s32.totalorder %s162, 0
    %s165 = sadd.s32 %s164, 1
    %s166 = scalar_select %p163, %s164, %s165
    %p169 = pneg %p163
    %p170 = scmp.eq.s32.totalorder %s13, 1
    %p171 = por %p169, %p170
    %p172 = scmp.ne.s32.totalorder %s164, %s167
    %p173 = scmp.eq.s32.totalorder %s13, 0
    %p174 = por %p172, %p173
    %p175 = scmp.ne.s32.totalorder %s164, %s167
    %p176 = scmp.eq.s32.totalorder %s18, 1
    %p177 = por %p175, %p176
    %p178 = scmp.ne.s32.totalorder %s167, %s168
    %p179 = scmp.eq.s32.totalorder %s18, 0
    %p180 = por %p178, %p179
    %p181 = scmp.ne.s32.totalorder %s167, %s168
    %p182 = scmp.eq.s32.totalorder %s19, 1
    %p183 = por %p181, %p182
    %p185 = scmp.ne.s32.totalorder %s168, %s184
    %p186 = scmp.eq.s32.totalorder %s19, 0
    %p187 = por %p185, %p186
    %p188 = scmp.le.s32.totalorder 1, %s13
    %p189 = scmp.lt.s32.totalorder %s13, 3
    %p190 = pnand %p188, %p189
    %p191 = pneg %p190
    // Predicated region
    $region9: #{bottleneck_block_forward.6} parent=5 // pred_check
      _
    $region10: #{bottleneck_block_forward.6} parent=5 // pred_check_branch
      %193 = sbr.rel (%p190) target = $region12
    $region11: #{bottleneck_block_forward.6} parent=5 // pred_region
      %s194 = ssub.s32 %s13, 1
      // Predicated region
      $region13: #{bottleneck_block_forward.6} parent=11 // pred_check
        %p195 = pneg %p60
      $region14: #{bottleneck_block_forward.6} parent=11 // pred_check_branch
        %197 = sbr.rel (%p195) target = $region16
      $region15: #{bottleneck_block_forward.6} parent=11 // pred_region
        _
      $region16: #{bottleneck_block_forward.6} parent=11 // pred_fallthru
        _
      // Predicated region
      $region17: #{bottleneck_block_forward.6} parent=11 // pred_check
        %p198 = pneg %p107
      $region18: #{bottleneck_block_forward.6} parent=11 // pred_check_branch
        %200 = sbr.rel (%p198) target = $region20
      $region19: #{bottleneck_block_forward.6} parent=11 // pred_region
        _
      $region20: #{bottleneck_block_forward.6} parent=11 // pred_fallthru
        _
      // Predicated region
      $region21: #{bottleneck_block_forward.6} parent=11 // pred_check
        %p201 = pneg %p128
      $region22: #{bottleneck_block_forward.6} parent=11 // pred_check_branch
        %203 = sbr.rel (%p201) target = $region24
      $region23: #{bottleneck_block_forward.6} parent=11 // pred_region
        _
      $region24: #{bottleneck_block_forward.6} parent=11 // pred_fallthru
        _
    $region12: #{bottleneck_block_forward.6} parent=5 // pred_fallthru
      _
    %p204 = scmp.lt.s32.totalorder %s13, 2
    // Predicated region
    $region25: #{bottleneck_block_forward.6} parent=5 // pred_check
      %p205 = pneg %p204
    $region26: #{bottleneck_block_forward.6} parent=5 // pred_check_branch
      %207 = sbr.rel (%p205) target = $region28
    $region27: #{bottleneck_block_forward.6} parent=5 // pred_region
      // Predicated region
      $region29: #{bottleneck_block_forward.6} parent=27 // pred_check
        %p208 = pneg %p33
      $region30: #{bottleneck_block_forward.6} parent=27 // pred_check_branch
        %210 = sbr.rel (%p208) target = $region32
      $region31: #{bottleneck_block_forward.6} parent=27 // pred_region
        %p211 = scmp.lt.s32.totalorder %s13, 1
        %s212 = scalar_select %p211, %s13, 1
        %s213 = smul.addr %s212, 8
        %s214 = smul.addr %s213, 4
        %s215 = scalar_lea.vmem %s0, %s214
      $region32: #{bottleneck_block_forward.6} parent=27 // pred_fallthru
        _
      // Predicated region
      $region33: #{bottleneck_block_forward.6} parent=27 // pred_check
        %p216 = pneg %p80
      $region34: #{bottleneck_block_forward.6} parent=27 // pred_check_branch
        %218 = sbr.rel (%p216) target = $region36
      $region35: #{bottleneck_block_forward.6} parent=27 // pred_region
        %p219 = scmp.lt.s32.totalorder %s13, 1
        %s220 = scalar_select %p219, %s13, 1
        %s221 = smul.addr %s220, 8
        %s222 = smul.addr %s221, 4
        %s223 = scalar_lea.vmem %s2, %s222
      $region36: #{bottleneck_block_forward.6} parent=27 // pred_fallthru
        _
    $region28: #{bottleneck_block_forward.6} parent=5 // pred_fallthru
      _
    %p224 = scmp.le.s32.totalorder 1, %s13
    %p225 = scmp.lt.s32.totalorder %s13, 3
    %p226 = pnand %p224, %p225
    %p227 = pneg %p226
    // Predicated region
    $region37: #{bottleneck_block_forward.6} parent=5 // pred_check
      _
    $region38: #{bottleneck_block_forward.6} parent=5 // pred_check_branch
      %229 = sbr.rel (%p226) target = $region40
    $region39: #{bottleneck_block_forward.6} parent=5 // pred_region
      %s230 = ssub.s32 %s13, 1
      %p231 = scmp.lt.s32.totalorder %s18, 1
      %s232 = scalar_select %p231, %s18, 1
      %s233 = smul.addr %s232, 8
      %s234 = smul.addr %s233, 4
      %s235 = scalar_lea.vmem %s0, %s234
      %p236 = pneg %p39
      %p237 = pneg %p36
      %p238 = pneg %p60
      %p239 = pneg %p57
      %p240 = scmp.lt.s32.totalorder %s18, 1
      %s241 = scalar_select %p240, %s18, 1
      %s242 = smul.addr %s241, 8
      %s243 = smul.addr %s242, 4
      %s244 = scalar_lea.vmem %s2, %s243
      %p245 = pneg %p86
      %p246 = pneg %p83
      %p247 = pneg %p107
      %p248 = pneg %p104
      %p249 = pneg %p128
      %p250 = pneg %p125
      %p251 = pneg %p154
      %p252 = pneg %p151
      %p253 = scmp.lt.s32.totalorder %s18, 1
      %s254 = scalar_select %p253, %s18, 1
      %s255 = smul.addr %s254, 8
      %s256 = scalar_lea.vmem %s5, %s255
      %p257 = pneg %p180
      %p258 = pneg %p177
      %p259 = scmp.lt.s32.totalorder %s18, 1
      %s260 = scalar_select %p259, %s18, 1
      %s261 = smul.addr %s260, 8
      %s262 = scalar_lea.vmem %s6, %s261
      %p263 = scmp.lt.s32.totalorder %s18, 1
      %s264 = scalar_select %p263, %s18, 1
      %s265 = smul.addr %s264, 8
      %s266 = smul.addr %s265, 4
      %s267 = scalar_lea.vmem %s0, %s266
      %p268 = scmp.lt.s32.totalorder %s18, 1
      %s269 = scalar_select %p268, %s18, 1
      %s270 = smul.addr %s269, 8
      %s271 = smul.addr %s270, 4
      %s272 = scalar_lea.vmem %s2, %s271
      %p273 = scmp.lt.s32.totalorder %s18, 1
      %s274 = scalar_select %p273, %s18, 1
      %s275 = smul.addr %s274, 8
      %s276 = scalar_lea.vmem %s5, %s275
      %p277 = scmp.lt.s32.totalorder %s18, 1
      %s278 = scalar_select %p277, %s18, 1
      %s279 = smul.addr %s278, 8
      %s280 = scalar_lea.vmem %s6, %s279
      %v282 = vld [vmem:[%s267] sm:$0xf]
      %v283 = vld [vmem:[%s267 + $0x4] sm:$0xf]
      %v284 = vld [vmem:[%s267 + $0x8] sm:$0xf]
      %v285 = vld [vmem:[%s267 + $0xc] sm:$0xf]
      %v286 = vld [vmem:[%s267 + $0x10] sm:$0xf]
      %v287 = vld [vmem:[%s267 + $0x14] sm:$0xf]
      %v288 = vld [vmem:[%s267 + $0x18] sm:$0xf]
      %v289 = vld [vmem:[%s267 + $0x1c] sm:$0xf]
      %v290 = vunpack.c.l.bf16 %v282
      %v291 = vunpack.c.l.bf16 %v283
      %v292 = vunpack.c.l.bf16 %v284
      %v293 = vunpack.c.l.bf16 %v285
      %v294 = vunpack.c.l.bf16 %v286
      %v295 = vunpack.c.l.bf16 %v287
      %v296 = vunpack.c.l.bf16 %v288
      %v297 = vunpack.c.l.bf16 %v289
      %v298 = vld [vmem:[%s1] sm:$0x1]
      %v299 = vlaneseq
      %v300 = vshrl.u32 %v299, 7
      %v301 = vsub.s32 0, %v300
      %v302 = vrot.slane %v298, %v301
      %v303 = vmul.f32 %v290, %v302
      %v304 = vmul.f32 %v291, %v302
      %v305 = vmul.f32 %v292, %v302
      %v306 = vmul.f32 %v293, %v302
      %v307 = vmul.f32 %v294, %v302
      %v308 = vmul.f32 %v295, %v302
      %v309 = vmul.f32 %v296, %v302
      %v310 = vmul.f32 %v297, %v302
      %v311 = vld [vmem:[%s1 + $0x1] sm:$0x1]
      %v312 = vlaneseq
      %v313 = vshrl.u32 %v312, 7
      %v314 = vsub.s32 0, %v313
      %v315 = vrot.slane %v311, %v314
      %v316 = vadd.f32 %v303, %v315
      %v317 = vadd.f32 %v304, %v315
      %v318 = vadd.f32 %v305, %v315
      %v319 = vadd.f32 %v306, %v315
      %v320 = vadd.f32 %v307, %v315
      %v321 = vadd.f32 %v308, %v315
      %v322 = vadd.f32 %v309, %v315
      %v323 = vadd.f32 %v310, %v315
      %v324 = vmax.f32 %v316, 0.0
      %v325 = vmax.f32 %v317, 0.0
      %v326 = vmax.f32 %v318, 0.0
      %v327 = vmax.f32 %v319, 0.0
      %v328 = vmax.f32 %v320, 0.0
      %v329 = vmax.f32 %v321, 0.0
      %v330 = vmax.f32 %v322, 0.0
      %v331 = vmax.f32 %v323, 0.0
      %v332 = vpack.c.bf16 %v325, %v324
      %v333 = vpack.c.bf16 %v327, %v326
      %v334 = vpack.c.bf16 %v329, %v328
      %v335 = vpack.c.bf16 %v331, %v330
      %v336 = vld [vmem:[%s3] sm:$0xf]
      %v337 = vld [vmem:[%s3 + $0x4] sm:$0xf]
      %v338 = vld [vmem:[%s3 + $0x8] sm:$0xf]
      %v339 = vld [vmem:[%s3 + $0xc] sm:$0xf]
      %v340 = vld [vmem:[%s3 + $0x10] sm:$0xf]
      %v341 = vld [vmem:[%s3 + $0x14] sm:$0xf]
      %v342 = vld [vmem:[%s3 + $0x18] sm:$0xf]
      %v343 = vld [vmem:[%s3 + $0x1c] sm:$0xf]
      %v344 = vld [vmem:[%s3 + $0x20] sm:$0xf]
      %v345 = vld [vmem:[%s3 + $0x24] sm:$0xf]
      %v346 = vld [vmem:[%s3 + $0x28] sm:$0xf]
      %v347 = vld [vmem:[%s3 + $0x2c] sm:$0xf]
      %v348 = vld [vmem:[%s3 + $0x30] sm:$0xf]
      %v349 = vld [vmem:[%s3 + $0x34] sm:$0xf]
      %v350 = vld [vmem:[%s3 + $0x38] sm:$0xf]
      %v351 = vld [vmem:[%s3 + $0x3c] sm:$0xf]
      %v368 = vunpack.c.l.b16 %v336
      %v369 = vunpack.c.l.b16 %v337
      %v370 = vunpack.c.l.b16 %v338
      %v371 = vunpack.c.l.b16 %v339
      %v372 = vunpack.c.l.b16 %v340
      %v373 = vunpack.c.l.b16 %v341
      %v374 = vunpack.c.l.b16 %v342
      %v375 = vunpack.c.l.b16 %v343
      %v376 = vunpack.c.l.b16 %v344
      %v377 = vunpack.c.l.b16 %v345
      %v378 = vunpack.c.l.b16 %v346
      %v379 = vunpack.c.l.b16 %v347
      %v380 = vunpack.c.l.b16 %v348
      %v381 = vunpack.c.l.b16 %v349
      %v382 = vunpack.c.l.b16 %v350
      %v383 = vunpack.c.l.b16 %v351
      %v384 = vpack.c.b16 %v369, %v368
      %v385 = vpack.c.b16 %v371, %v370
      %v386 = vpack.c.b16 %v373, %v372
      %v387 = vpack.c.b16 %v375, %v374
      %v388 = vpack.c.b16 %v377, %v376
      %v389 = vpack.c.b16 %v379, %v378
      %v390 = vpack.c.b16 %v381, %v380
      %v391 = vpack.c.b16 %v383, %v382
      %400 = vmatprep.subr.bf16.mxu0 0
      %401 = vmatpush1.bf16.msra.mxu0 %v391
      %402 = vmatprep.subr.bf16.mxu0 0
      %403 = vmatpush1.bf16.msra.mxu0 %v390
      %404 = vmatprep.subr.bf16.mxu0 0
      %405 = vmatpush1.bf16.msra.mxu0 %v389
      %406 = vmatprep.subr.bf16.mxu0 0
      %407 = vmatpush1.bf16.msra.mxu0 %v388
      %408 = vmatprep.subr.bf16.mxu0 0
      %409 = vmatpush1.bf16.msra.mxu0 %v387
      %410 = vmatprep.subr.bf16.mxu0 0
      %411 = vmatpush1.bf16.msra.mxu0 %v386
      %412 = vmatprep.subr.bf16.mxu0 0
      %413 = vmatpush1.bf16.msra.mxu0 %v385
      %414 = vmatprep.subr.bf16.mxu0 0
      %415 = vmatpush1.bf16.msra.mxu0 %v384
      %416 = vmatprep.subr.bf16.mxu0 0
      %417 = vmatpush2.bf16.msra.mxu0 0
      %418 = vmatprep.subr.bf16.mxu0 0
      %419 = vmatpush2.bf16.msra.mxu0 0
      %420 = vmatprep.subr.bf16.mxu0 0
      %421 = vmatpush2.bf16.msra.mxu0 0
      %422 = vmatprep.subr.bf16.mxu0 0
      %423 = vmatpush2.bf16.msra.mxu0 0
      %424 = vmatprep.subr.bf16.mxu0 0
      %425 = vmatpush2.bf16.msra.mxu0 0
      %426 = vmatprep.subr.bf16.mxu0 0
      %427 = vmatpush2.bf16.msra.mxu0 0
      %428 = vmatprep.subr.bf16.mxu0 0
      %429 = vmatpush2.bf16.msra.mxu0 0
      %430 = vmatprep.subr.bf16.mxu0 0
      %431 = vmatpush2.bf16.msra.mxu0 0
      %432 = vmatprep.mubr.bf16.mxu0 0
      %433 = vmatmul.mubr.bf16.gmra.mxu0 %v332
      %v434 = vpop.f32.mrf.mxu0
      %v435 = vadd.f32 0.0, %v434
      %v436 = vpop.f32.mrf.mxu0
      %v437 = vpop.f32.mrf.mxu0
      %v438 = vadd.f32 0.0, %v437
      %v439 = vpop.f32.mrf.mxu0
      %440 = vmatprep.mubr.bf16.mxu0 0
      %441 = vmatmul.mubr.bf16.gmra.mxu0 %v333
      %v442 = vpop.f32.mrf.mxu0
      %v443 = vadd.f32 0.0, %v442
      %v444 = vpop.f32.mrf.mxu0
      %v445 = vpop.f32.mrf.mxu0
      %v446 = vadd.f32 0.0, %v445
      %v447 = vpop.f32.mrf.mxu0
      %448 = vmatprep.mubr.bf16.mxu0 0
      %449 = vmatmul.mubr.bf16.gmra.mxu0 %v334
      %v450 = vpop.f32.mrf.mxu0
      %v451 = vadd.f32 0.0, %v450
      %v452 = vpop.f32.mrf.mxu0
      %v453 = vpop.f32.mrf.mxu0
      %v454 = vadd.f32 0.0, %v453
      %v455 = vpop.f32.mrf.mxu0
      %456 = vmatprep.mubr.bf16.mxu0 0
      %457 = vmatmul.mubr.bf16.gmra.mxu0 %v335
      %v458 = vpop.f32.mrf.mxu0
      %v459 = vadd.f32 0.0, %v458
      %v460 = vpop.f32.mrf.mxu0
      %v461 = vpop.f32.mrf.mxu0
      %v462 = vadd.f32 0.0, %v461
      %v463 = vpop.f32.mrf.mxu0
      %464 = vdwg.mxu0
      %v465 = vld [vmem:[%s272] sm:$0xf]
      %v466 = vld [vmem:[%s272 + $0x4] sm:$0xf]
      %v467 = vld [vmem:[%s272 + $0x8] sm:$0xf]
      %v468 = vld [vmem:[%s272 + $0xc] sm:$0xf]
      %v469 = vld [vmem:[%s272 + $0x10] sm:$0xf]
      %v470 = vld [vmem:[%s272 + $0x14] sm:$0xf]
      %v471 = vld [vmem:[%s272 + $0x18] sm:$0xf]
      %v472 = vld [vmem:[%s272 + $0x1c] sm:$0xf]
      %v473 = vld [vmem:[%s4] sm:$0xf]
      %v474 = vld [vmem:[%s4 + $0x4] sm:$0xf]
      %v475 = vld [vmem:[%s4 + $0x8] sm:$0xf]
      %v476 = vld [vmem:[%s4 + $0xc] sm:$0xf]
      %v477 = vld [vmem:[%s4 + $0x10] sm:$0xf]
      %v478 = vld [vmem:[%s4 + $0x14] sm:$0xf]
      %v479 = vld [vmem:[%s4 + $0x18] sm:$0xf]
      %v480 = vld [vmem:[%s4 + $0x1c] sm:$0xf]
      %v481 = vld [vmem:[%s4 + $0x20] sm:$0xf]
      %v482 = vld [vmem:[%s4 + $0x24] sm:$0xf]
      %v483 = vld [vmem:[%s4 + $0x28] sm:$0xf]
      %v484 = vld [vmem:[%s4 + $0x2c] sm:$0xf]
      %v485 = vld [vmem:[%s4 + $0x30] sm:$0xf]
      %v486 = vld [vmem:[%s4 + $0x34] sm:$0xf]
      %v487 = vld [vmem:[%s4 + $0x38] sm:$0xf]
      %v488 = vld [vmem:[%s4 + $0x3c] sm:$0xf]
      %v497 = vunpack.c.l.b16 %v465
      %v498 = vunpack.c.l.b16 %v466
      %v499 = vunpack.c.l.b16 %v467
      %v500 = vunpack.c.l.b16 %v468
      %v501 = vunpack.c.l.b16 %v469
      %v502 = vunpack.c.l.b16 %v470
      %v503 = vunpack.c.l.b16 %v471
      %v504 = vunpack.c.l.b16 %v472
      %v505 = vpack.c.b16 %v498, %v497
      %v506 = vpack.c.b16 %v500, %v499
      %v507 = vpack.c.b16 %v502, %v501
      %v508 = vpack.c.b16 %v504, %v503
      %v529 = vunpack.c.l.b16 %v473
      %v530 = vunpack.c.l.b16 %v474
      %v531 = vunpack.c.l.b16 %v475
      %v532 = vunpack.c.l.b16 %v476
      %v533 = vunpack.c.l.b16 %v477
      %v534 = vunpack.c.l.b16 %v478
      %v535 = vunpack.c.l.b16 %v479
      %v536 = vunpack.c.l.b16 %v480
      %v537 = vunpack.c.l.b16 %v481
      %v538 = vunpack.c.l.b16 %v482
      %v539 = vunpack.c.l.b16 %v483
      %v540 = vunpack.c.l.b16 %v484
      %v541 = vunpack.c.l.b16 %v485
      %v542 = vunpack.c.l.b16 %v486
      %v543 = vunpack.c.l.b16 %v487
      %v544 = vunpack.c.l.b16 %v488
      %v545 = vpack.c.b16 %v530, %v529
      %v546 = vpack.c.b16 %v532, %v531
      %v547 = vpack.c.b16 %v534, %v533
      %v548 = vpack.c.b16 %v536, %v535
      %v549 = vpack.c.b16 %v538, %v537
      %v550 = vpack.c.b16 %v540, %v539
      %v551 = vpack.c.b16 %v542, %v541
      %v552 = vpack.c.b16 %v544, %v543
      %561 = vmatprep.subr.bf16.mxu0 0
      %562 = vmatpush1.bf16.msra.mxu0 %v552
      %563 = vmatprep.subr.bf16.mxu0 0
      %564 = vmatpush1.bf16.msra.mxu0 %v551
      %565 = vmatprep.subr.bf16.mxu0 0
      %566 = vmatpush1.bf16.msra.mxu0 %v550
      %567 = vmatprep.subr.bf16.mxu0 0
      %568 = vmatpush1.bf16.msra.mxu0 %v549
      %569 = vmatprep.subr.bf16.mxu0 0
      %570 = vmatpush1.bf16.msra.mxu0 %v548
      %571 = vmatprep.subr.bf16.mxu0 0
      %572 = vmatpush1.bf16.msra.mxu0 %v547
      %573 = vmatprep.subr.bf16.mxu0 0
      %574 = vmatpush1.bf16.msra.mxu0 %v546
      %575 = vmatprep.subr.bf16.mxu0 0
      %576 = vmatpush1.bf16.msra.mxu0 %v545
      %577 = vmatprep.subr.bf16.mxu0 0
      %578 = vmatpush2.bf16.msra.mxu0 0
      %579 = vmatprep.subr.bf16.mxu0 0
      %580 = vmatpush2.bf16.msra.mxu0 0
      %581 = vmatprep.subr.bf16.mxu0 0
      %582 = vmatpush2.bf16.msra.mxu0 0
      %583 = vmatprep.subr.bf16.mxu0 0
      %584 = vmatpush2.bf16.msra.mxu0 0
      %585 = vmatprep.subr.bf16.mxu0 0
      %586 = vmatpush2.bf16.msra.mxu0 0
      %587 = vmatprep.subr.bf16.mxu0 0
      %588 = vmatpush2.bf16.msra.mxu0 0
      %589 = vmatprep.subr.bf16.mxu0 0
      %590 = vmatpush2.bf16.msra.mxu0 0
      %591 = vmatprep.subr.bf16.mxu0 0
      %592 = vmatpush2.bf16.msra.mxu0 0
      %593 = vmatprep.mubr.bf16.mxu0 0
      %594 = vmatmul.mubr.bf16.gmra.mxu0 %v505
      %v595 = vpop.f32.mrf.mxu0
      %v596 = vadd.f32 0.0, %v595
      %v597 = vpop.f32.mrf.mxu0
      %v598 = vpop.f32.mrf.mxu0
      %v599 = vadd.f32 0.0, %v598
      %v600 = vpop.f32.mrf.mxu0
      %601 = vmatprep.mubr.bf16.mxu0 0
      %602 = vmatmul.mubr.bf16.gmra.mxu0 %v506
      %v603 = vpop.f32.mrf.mxu0
      %v604 = vadd.f32 0.0, %v603
      %v605 = vpop.f32.mrf.mxu0
      %v606 = vpop.f32.mrf.mxu0
      %v607 = vadd.f32 0.0, %v606
      %v608 = vpop.f32.mrf.mxu0
      %609 = vmatprep.mubr.bf16.mxu0 0
      %610 = vmatmul.mubr.bf16.gmra.mxu0 %v507
      %v611 = vpop.f32.mrf.mxu0
      %v612 = vadd.f32 0.0, %v611
      %v613 = vpop.f32.mrf.mxu0
      %v614 = vpop.f32.mrf.mxu0
      %v615 = vadd.f32 0.0, %v614
      %v616 = vpop.f32.mrf.mxu0
      %617 = vmatprep.mubr.bf16.mxu0 0
      %618 = vmatmul.mubr.bf16.gmra.mxu0 %v508
      %v619 = vpop.f32.mrf.mxu0
      %v620 = vadd.f32 0.0, %v619
      %v621 = vpop.f32.mrf.mxu0
      %v622 = vpop.f32.mrf.mxu0
      %v623 = vadd.f32 0.0, %v622
      %v624 = vpop.f32.mrf.mxu0
      %625 = vdwg.mxu0
      %v626 = vadd.f32 %v435, %v438
      %v627 = vadd.f32 %v626, %v443
      %v628 = vadd.f32 %v627, %v446
      %v629 = vadd.f32 %v628, %v451
      %v630 = vadd.f32 %v629, %v454
      %v631 = vadd.f32 %v630, %v459
      %v632 = vadd.f32 %v631, %v462
      %v633 = vrot.slane %v632, 4
      %v634 = vadd.f32 %v632, %v633
      %v635 = vrot.slane %v634, 2
      %v636 = vadd.f32 %v634, %v635
      %v637 = vrot.slane %v636, 1
      %v638 = vadd.f32 %v636, %v637
      %639 = vst [vmem:[%s276] sm:$0x1] %v638
      %v640 = vmul.f32 %v435, %v435
      %v641 = vmul.f32 %v438, %v438
      %v642 = vmul.f32 %v443, %v443
      %v643 = vmul.f32 %v446, %v446
      %v644 = vmul.f32 %v451, %v451
      %v645 = vmul.f32 %v454, %v454
      %v646 = vmul.f32 %v459, %v459
      %v647 = vmul.f32 %v462, %v462
      %v648 = vadd.f32 %v640, %v641
      %v649 = vadd.f32 %v648, %v642
      %v650 = vadd.f32 %v649, %v643
      %v651 = vadd.f32 %v650, %v644
      %v652 = vadd.f32 %v651, %v645
      %v653 = vadd.f32 %v652, %v646
      %v654 = vadd.f32 %v653, %v647
      %v655 = vrot.slane %v654, 4
      %v656 = vadd.f32 %v654, %v655
      %v657 = vrot.slane %v656, 2
      %v658 = vadd.f32 %v656, %v657
      %v659 = vrot.slane %v658, 1
      %v660 = vadd.f32 %v658, %v659
      %661 = vst [vmem:[%s276 + $0x1] sm:$0x1] %v660
      %v662 = vadd.f32 %v596, %v599
      %v663 = vadd.f32 %v662, %v604
      %v664 = vadd.f32 %v663, %v607
      %v665 = vadd.f32 %v664, %v612
      %v666 = vadd.f32 %v665, %v615
      %v667 = vadd.f32 %v666, %v620
      %v668 = vadd.f32 %v667, %v623
      %v669 = vrot.slane %v668, 4
      %v670 = vadd.f32 %v668, %v669
      %v671 = vrot.slane %v670, 2
      %v672 = vadd.f32 %v670, %v671
      %v673 = vrot.slane %v672, 1
      %v674 = vadd.f32 %v672, %v673
      %675 = vst [vmem:[%s280] sm:$0x1] %v674
      %v676 = vmul.f32 %v596, %v596
      %v677 = vmul.f32 %v599, %v599
      %v678 = vmul.f32 %v604, %v604
      %v679 = vmul.f32 %v607, %v607
      %v680 = vmul.f32 %v612, %v612
      %v681 = vmul.f32 %v615, %v615
      %v682 = vmul.f32 %v620, %v620
      %v683 = vmul.f32 %v623, %v623
      %v684 = vadd.f32 %v676, %v677
      %v685 = vadd.f32 %v684, %v678
      %v686 = vadd.f32 %v685, %v679
      %v687 = vadd.f32 %v686, %v680
      %v688 = vadd.f32 %v687, %v681
      %v689 = vadd.f32 %v688, %v682
      %v690 = vadd.f32 %v689, %v683
      %v691 = vrot.slane %v690, 4
      %v692 = vadd.f32 %v690, %v691
      %v693 = vrot.slane %v692, 2
      %v694 = vadd.f32 %v692, %v693
      %v695 = vrot.slane %v694, 1
      %v696 = vadd.f32 %v694, %v695
      %697 = vst [vmem:[%s280 + $0x1] sm:$0x1] %v696
      %p698 = scmp.lt.s32.totalorder %s18, 1
      %s699 = scalar_select %p698, %s18, 1
      %s700 = smul.addr %s699, 8
      %s701 = scalar_lea.vmem %s5, %s700
      %p702 = scmp.lt.s32.totalorder %s18, 1
      %s703 = scalar_select %p702, %s18, 1
      %s704 = smul.addr %s703, 8
      %s705 = scalar_lea.vmem %s6, %s704
      // Predicated region
      $region41: #{bottleneck_block_forward.6} parent=39 // pred_check
        %p706 = pneg %p151
      $region42: #{bottleneck_block_forward.6} parent=39 // pred_check_branch
        %708 = sbr.rel (%p706) target = $region44
      $region43: #{bottleneck_block_forward.6} parent=39 // pred_region
        _
      $region44: #{bottleneck_block_forward.6} parent=39 // pred_fallthru
        _
      // Predicated region
      $region45: #{bottleneck_block_forward.6} parent=39 // pred_check
        %p709 = pneg %p177
      $region46: #{bottleneck_block_forward.6} parent=39 // pred_check_branch
        %711 = sbr.rel (%p709) target = $region48
      $region47: #{bottleneck_block_forward.6} parent=39 // pred_region
        _
      $region48: #{bottleneck_block_forward.6} parent=39 // pred_fallthru
        _
    $region40: #{bottleneck_block_forward.6} parent=5 // pred_fallthru
      _
    %p712 = scmp.le.s32.totalorder 2, %s13
    // Predicated region
    $region49: #{bottleneck_block_forward.6} parent=5 // pred_check
      %p713 = pneg %p712
    $region50: #{bottleneck_block_forward.6} parent=5 // pred_check_branch
      %715 = sbr.rel (%p713) target = $region52
    $region51: #{bottleneck_block_forward.6} parent=5 // pred_region
      %s716 = ssub.s32 %s13, 2
      // Predicated region
      $region53: #{bottleneck_block_forward.6} parent=51 // pred_check
        %p717 = pneg %p157
      $region54: #{bottleneck_block_forward.6} parent=51 // pred_check_branch
        %719 = sbr.rel (%p717) target = $region56
      $region55: #{bottleneck_block_forward.6} parent=51 // pred_region
        %p720 = scmp.lt.s32.totalorder %s19, 1
        %s721 = scalar_select %p720, %s19, 1
        %s722 = smul.addr %s721, 8
        %s723 = scalar_lea.vmem %s5, %s722
      $region56: #{bottleneck_block_forward.6} parent=51 // pred_fallthru
        _
      // Predicated region
      $region57: #{bottleneck_block_forward.6} parent=51 // pred_check
        %p724 = pneg %p183
      $region58: #{bottleneck_block_forward.6} parent=51 // pred_check_branch
        %726 = sbr.rel (%p724) target = $region60
      $region59: #{bottleneck_block_forward.6} parent=51 // pred_region
        %p727 = scmp.lt.s32.totalorder %s19, 1
        %s728 = scalar_select %p727, %s19, 1
        %s729 = smul.addr %s728, 8
        %s730 = scalar_lea.vmem %s6, %s729
      $region60: #{bottleneck_block_forward.6} parent=51 // pred_fallthru
        _
    $region52: #{bottleneck_block_forward.6} parent=5 // pred_fallthru
      _
  $region6: #{bottleneck_block_forward.6} parent=0 // loop_footer
    %s17 = sadd.s32 1, %s13
  $region7: #{bottleneck_block_forward.6} parent=0 // loop_footer_branch
    %12 = sbr.rel target = $region3
  $region8: #{bottleneck_block_forward.6} parent=0 // loop_exit
    _

// kernel: bottleneck_block_forward.7
$region0: #{bottleneck_block_forward.7}
  #allocation0 [shape = 'u32[]', space=smem, size = 0x4, offset = 0x4, fixed_abs, tag = 'smem constant byte address 0x4 - core index']
  #allocation1 [shape = 'u32[144,128]{1,0:T(1,128)}', space=vmem, size = 0x12000, scoped, tag = 'internal scratch']
  %s0 = inlined_call_operand.vmem [shape: bf16[2,64,128], index: 0, kind: input, shape index: {}]
  %s1 = inlined_call_operand.vmem [shape: f32[2,128], index: 1, kind: input, shape index: {}]
  %s2 = inlined_call_operand.vmem [shape: bf16[2,64,128], index: 2, kind: input, shape index: {}]
  %s3 = inlined_call_operand.vmem [shape: bf16[128,128], index: 3, kind: input, shape index: {}]
  %s4 = inlined_call_operand.vmem [shape: bf16[128,128], index: 4, kind: input, shape index: {}]
  %s5 = inlined_call_operand.vmem [shape: f32[2,128], index: 5, kind: input, shape index: {}]
  %s6 = inlined_call_operand.vmem [shape: f32[2,128], index: 6, kind: input, shape index: {}]
  %s7 = inlined_call_operand.vmem [shape: f32[2,64,128], index: 7, kind: output, shape index: {}]
  %s8 = sld [smem:[#allocation0]]
  $region61: #{bottleneck_block_forward.7} parent=0
    _
  %s10 = ssub.s32 1, %s8
  %s11 = scalar_select 0, %s10, %s8
  loop: start=0, step=1, limit=4
  $region2: #{bottleneck_block_forward.7} parent=0 // loop_pre_header
    _
  $region3: #{bottleneck_block_forward.7} parent=0 // loop_header
    %s13 = sphi 0, %s17
    %p14 = scmp.ge.s32.totalorder %s13, 4
    %s23 = sphi 0, %s25
    %s26 = sphi 0, %s23
    %s27 = sphi 0, %s26
    %s43 = sphi 0, %s27
    %s47 = sphi 0, %s47
    %s49 = sphi 0, %s47
    %s50 = sphi 0, %s49
    %s64 = sphi 0, %s50
    %s70 = sphi 0, %s72
    %s73 = sphi 0, %s70
    %s74 = sphi 0, %s73
    %s90 = sphi 0, %s74
    %s94 = sphi 0, %s94
    %s96 = sphi 0, %s94
    %s97 = sphi 0, %s96
    %s111 = sphi 0, %s97
    %s115 = sphi 0, %s115
    %s117 = sphi 0, %s115
    %s118 = sphi 0, %s117
    %s132 = sphi 0, %s118
    %s136 = sphi 0, %s136
    %s138 = sphi 0, %s136
    %s139 = sphi 0, %s138
    %s153 = sphi 0, %s139
    %s157 = sphi 0, %s157
    %s159 = sphi 0, %s157
    %s160 = sphi 0, %s159
    %s174 = sphi 0, %s160
    %s180 = sphi 0, %s182
    %s183 = sphi 0, %s180
    %s184 = sphi 0, %s183
    %s200 = sphi 0, %s184
  $region4: #{bottleneck_block_forward.7} parent=0 // loop_header_branch
    %16 = sbr.rel (%p14) target = $region8
  $region5: #{bottleneck_block_forward.7} parent=0 // loop_body
    %s18 = ssub.s32 %s13, 1
    %s19 = ssub.s32 %s13, 2
    %s20 = sadd.s32 %s13, 1
    %s21 = ssub.s32 %s13, %s20
    %p22 = scmp.eq.s32.totalorder %s21, 0
    %s24 = sadd.s32 %s23, 1
    %s25 = scalar_select %p22, %s23, %s24
    %p28 = pneg %p22
    %p29 = scmp.eq.s32.totalorder %s13, 1
    %p30 = por %p28, %p29
    %p31 = scmp.ne.s32.totalorder %s23, %s26
    %p32 = scmp.eq.s32.totalorder %s13, 0
    %p33 = por %p31, %p32
    %p34 = scmp.ne.s32.totalorder %s23, %s26
    %p35 = scmp.eq.s32.totalorder %s18, 1
    %p36 = por %p34, %p35
    %p37 = scmp.ne.s32.totalorder %s26, %s27
    %p38 = scmp.eq.s32.totalorder %s18, 0
    %p39 = por %p37, %p38
    %p40 = scmp.ne.s32.totalorder %s26, %s27
    %p41 = scmp.eq.s32.totalorder %s19, 1
    %p42 = por %p40, %p41
    %p44 = scmp.ne.s32.totalorder %s27, %s43
    %p45 = scmp.eq.s32.totalorder %s19, 0
    %p46 = por %p44, %p45
    %s48 = sadd.s32 %s47, 1
    %p51 = scmp.eq.s32.totalorder %s13, 1
    %p52 = scmp.ne.s32.totalorder %s47, %s49
    %p53 = scmp.eq.s32.totalorder %s13, 0
    %p54 = por %p52, %p53
    %p55 = scmp.ne.s32.totalorder %s47, %s49
    %p56 = scmp.eq.s32.totalorder %s18, 1
    %p57 = por %p55, %p56
    %p58 = scmp.ne.s32.totalorder %s49, %s50
    %p59 = scmp.eq.s32.totalorder %s18, 0
    %p60 = por %p58, %p59
    %p61 = scmp.ne.s32.totalorder %s49, %s50
    %p62 = scmp.eq.s32.totalorder %s19, 1
    %p63 = por %p61, %p62
    %p65 = scmp.ne.s32.totalorder %s50, %s64
    %p66 = scmp.eq.s32.totalorder %s19, 0
    %p67 = por %p65, %p66
    %s68 = ssub.s32 %s13, %s20
    %p69 = scmp.eq.s32.totalorder %s68, 0
    %s71 = sadd.s32 %s70, 1
    %s72 = scalar_select %p69, %s70, %s71
    %p75 = pneg %p69
    %p76 = scmp.eq.s32.totalorder %s13, 1
    %p77 = por %p75, %p76
    %p78 = scmp.ne.s32.totalorder %s70, %s73
    %p79 = scmp.eq.s32.totalorder %s13, 0
    %p80 = por %p78, %p79
    %p81 = scmp.ne.s32.totalorder %s70, %s73
    %p82 = scmp.eq.s32.totalorder %s18, 1
    %p83 = por %p81, %p82
    %p84 = scmp.ne.s32.totalorder %s73, %s74
    %p85 = scmp.eq.s32.totalorder %s18, 0
    %p86 = por %p84, %p85
    %p87 = scmp.ne.s32.totalorder %s73, %s74
    %p88 = scmp.eq.s32.totalorder %s19, 1
    %p89 = por %p87, %p88
    %p91 = scmp.ne.s32.totalorder %s74, %s90
    %p92 = scmp.eq.s32.totalorder %s19, 0
    %p93 = por %p91, %p92
    %s95 = sadd.s32 %s94, 1
    %p98 = scmp.eq.s32.totalorder %s13, 1
    %p99 = scmp.ne.s32.totalorder %s94, %s96
    %p100 = scmp.eq.s32.totalorder %s13, 0
    %p101 = por %p99, %p100
    %p102 = scmp.ne.s32.totalorder %s94, %s96
    %p103 = scmp.eq.s32.totalorder %s18, 1
    %p104 = por %p102, %p103
    %p105 = scmp.ne.s32.totalorder %s96, %s97
    %p106 = scmp.eq.s32.totalorder %s18, 0
    %p107 = por %p105, %p106
    %p108 = scmp.ne.s32.totalorder %s96, %s97
    %p109 = scmp.eq.s32.totalorder %s19, 1
    %p110 = por %p108, %p109
    %p112 = scmp.ne.s32.totalorder %s97, %s111
    %p113 = scmp.eq.s32.totalorder %s19, 0
    %p114 = por %p112, %p113
    %s116 = sadd.s32 %s115, 1
    %p119 = scmp.eq.s32.totalorder %s13, 1
    %p120 = scmp.ne.s32.totalorder %s115, %s117
    %p121 = scmp.eq.s32.totalorder %s13, 0
    %p122 = por %p120, %p121
    %p123 = scmp.ne.s32.totalorder %s115, %s117
    %p124 = scmp.eq.s32.totalorder %s18, 1
    %p125 = por %p123, %p124
    %p126 = scmp.ne.s32.totalorder %s117, %s118
    %p127 = scmp.eq.s32.totalorder %s18, 0
    %p128 = por %p126, %p127
    %p129 = scmp.ne.s32.totalorder %s117, %s118
    %p130 = scmp.eq.s32.totalorder %s19, 1
    %p131 = por %p129, %p130
    %p133 = scmp.ne.s32.totalorder %s118, %s132
    %p134 = scmp.eq.s32.totalorder %s19, 0
    %p135 = por %p133, %p134
    %s137 = sadd.s32 %s136, 1
    %p140 = scmp.eq.s32.totalorder %s13, 1
    %p141 = scmp.ne.s32.totalorder %s136, %s138
    %p142 = scmp.eq.s32.totalorder %s13, 0
    %p143 = por %p141, %p142
    %p144 = scmp.ne.s32.totalorder %s136, %s138
    %p145 = scmp.eq.s32.totalorder %s18, 1
    %p146 = por %p144, %p145
    %p147 = scmp.ne.s32.totalorder %s138, %s139
    %p148 = scmp.eq.s32.totalorder %s18, 0
    %p149 = por %p147, %p148
    %p150 = scmp.ne.s32.totalorder %s138, %s139
    %p151 = scmp.eq.s32.totalorder %s19, 1
    %p152 = por %p150, %p151
    %p154 = scmp.ne.s32.totalorder %s139, %s153
    %p155 = scmp.eq.s32.totalorder %s19, 0
    %p156 = por %p154, %p155
    %s158 = sadd.s32 %s157, 1
    %p161 = scmp.eq.s32.totalorder %s13, 1
    %p162 = scmp.ne.s32.totalorder %s157, %s159
    %p163 = scmp.eq.s32.totalorder %s13, 0
    %p164 = por %p162, %p163
    %p165 = scmp.ne.s32.totalorder %s157, %s159
    %p166 = scmp.eq.s32.totalorder %s18, 1
    %p167 = por %p165, %p166
    %p168 = scmp.ne.s32.totalorder %s159, %s160
    %p169 = scmp.eq.s32.totalorder %s18, 0
    %p170 = por %p168, %p169
    %p171 = scmp.ne.s32.totalorder %s159, %s160
    %p172 = scmp.eq.s32.totalorder %s19, 1
    %p173 = por %p171, %p172
    %p175 = scmp.ne.s32.totalorder %s160, %s174
    %p176 = scmp.eq.s32.totalorder %s19, 0
    %p177 = por %p175, %p176
    %s178 = ssub.s32 %s13, %s20
    %p179 = scmp.eq.s32.totalorder %s178, 0
    %s181 = sadd.s32 %s180, 1
    %s182 = scalar_select %p179, %s180, %s181
    %p185 = pneg %p179
    %p186 = scmp.eq.s32.totalorder %s13, 1
    %p187 = por %p185, %p186
    %p188 = scmp.ne.s32.totalorder %s180, %s183
    %p189 = scmp.eq.s32.totalorder %s13, 0
    %p190 = por %p188, %p189
    %p191 = scmp.ne.s32.totalorder %s180, %s183
    %p192 = scmp.eq.s32.totalorder %s18, 1
    %p193 = por %p191, %p192
    %p194 = scmp.ne.s32.totalorder %s183, %s184
    %p195 = scmp.eq.s32.totalorder %s18, 0
    %p196 = por %p194, %p195
    %p197 = scmp.ne.s32.totalorder %s183, %s184
    %p198 = scmp.eq.s32.totalorder %s19, 1
    %p199 = por %p197, %p198
    %p201 = scmp.ne.s32.totalorder %s184, %s200
    %p202 = scmp.eq.s32.totalorder %s19, 0
    %p203 = por %p201, %p202
    %p204 = scmp.le.s32.totalorder 1, %s13
    %p205 = scmp.lt.s32.totalorder %s13, 3
    %p206 = pnand %p204, %p205
    %p207 = pneg %p206
    // Predicated region
    $region9: #{bottleneck_block_forward.7} parent=5 // pred_check
      _
    $region10: #{bottleneck_block_forward.7} parent=5 // pred_check_branch
      %209 = sbr.rel (%p206) target = $region12
    $region11: #{bottleneck_block_forward.7} parent=5 // pred_region
      %s210 = ssub.s32 %s13, 1
      // Predicated region
      $region13: #{bottleneck_block_forward.7} parent=11 // pred_check
        %p211 = pneg %p60
      $region14: #{bottleneck_block_forward.7} parent=11 // pred_check_branch
        %213 = sbr.rel (%p211) target = $region16
      $region15: #{bottleneck_block_forward.7} parent=11 // pred_region
        _
      $region16: #{bottleneck_block_forward.7} parent=11 // pred_fallthru
        _
      // Predicated region
      $region17: #{bottleneck_block_forward.7} parent=11 // pred_check
        %p214 = pneg %p107
      $region18: #{bottleneck_block_forward.7} parent=11 // pred_check_branch
        %216 = sbr.rel (%p214) target = $region20
      $region19: #{bottleneck_block_forward.7} parent=11 // pred_region
        _
      $region20: #{bottleneck_block_forward.7} parent=11 // pred_fallthru
        _
      // Predicated region
      $region21: #{bottleneck_block_forward.7} parent=11 // pred_check
        %p217 = pneg %p128
      $region22: #{bottleneck_block_forward.7} parent=11 // pred_check_branch
        %219 = sbr.rel (%p217) target = $region24
      $region23: #{bottleneck_block_forward.7} parent=11 // pred_region
        _
      $region24: #{bottleneck_block_forward.7} parent=11 // pred_fallthru
        _
      // Predicated region
      $region25: #{bottleneck_block_forward.7} parent=11 // pred_check
        %p220 = pneg %p149
      $region26: #{bottleneck_block_forward.7} parent=11 // pred_check_branch
        %222 = sbr.rel (%p220) target = $region28
      $region27: #{bottleneck_block_forward.7} parent=11 // pred_region
        _
      $region28: #{bottleneck_block_forward.7} parent=11 // pred_fallthru
        _
      // Predicated region
      $region29: #{bottleneck_block_forward.7} parent=11 // pred_check
        %p223 = pneg %p170
      $region30: #{bottleneck_block_forward.7} parent=11 // pred_check_branch
        %225 = sbr.rel (%p223) target = $region32
      $region31: #{bottleneck_block_forward.7} parent=11 // pred_region
        _
      $region32: #{bottleneck_block_forward.7} parent=11 // pred_fallthru
        _
    $region12: #{bottleneck_block_forward.7} parent=5 // pred_fallthru
      _
    %p226 = scmp.lt.s32.totalorder %s13, 2
    // Predicated region
    $region33: #{bottleneck_block_forward.7} parent=5 // pred_check
      %p227 = pneg %p226
    $region34: #{bottleneck_block_forward.7} parent=5 // pred_check_branch
      %229 = sbr.rel (%p227) target = $region36
    $region35: #{bottleneck_block_forward.7} parent=5 // pred_region
      // Predicated region
      $region37: #{bottleneck_block_forward.7} parent=35 // pred_check
        %p230 = pneg %p33
      $region38: #{bottleneck_block_forward.7} parent=35 // pred_check_branch
        %232 = sbr.rel (%p230) target = $region40
      $region39: #{bottleneck_block_forward.7} parent=35 // pred_region
        %p233 = scmp.lt.s32.totalorder %s13, 1
        %s234 = scalar_select %p233, %s13, 1
        %s235 = smul.addr %s234, 8
        %s236 = smul.addr %s235, 4
        %s237 = scalar_lea.vmem %s0, %s236
      $region40: #{bottleneck_block_forward.7} parent=35 // pred_fallthru
        _
      // Predicated region
      $region41: #{bottleneck_block_forward.7} parent=35 // pred_check
        %p238 = pneg %p80
      $region42: #{bottleneck_block_forward.7} parent=35 // pred_check_branch
        %240 = sbr.rel (%p238) target = $region44
      $region43: #{bottleneck_block_forward.7} parent=35 // pred_region
        %p241 = scmp.lt.s32.totalorder %s13, 1
        %s242 = scalar_select %p241, %s13, 1
        %s243 = smul.addr %s242, 8
        %s244 = smul.addr %s243, 4
        %s245 = scalar_lea.vmem %s2, %s244
      $region44: #{bottleneck_block_forward.7} parent=35 // pred_fallthru
        _
    $region36: #{bottleneck_block_forward.7} parent=5 // pred_fallthru
      _
    %p246 = scmp.le.s32.totalorder 1, %s13
    %p247 = scmp.lt.s32.totalorder %s13, 3
    %p248 = pnand %p246, %p247
    %p249 = pneg %p248
    // Predicated region
    $region45: #{bottleneck_block_forward.7} parent=5 // pred_check
      _
    $region46: #{bottleneck_block_forward.7} parent=5 // pred_check_branch
      %251 = sbr.rel (%p248) target = $region48
    $region47: #{bottleneck_block_forward.7} parent=5 // pred_region
      %s252 = ssub.s32 %s13, 1
      %p253 = scmp.lt.s32.totalorder %s18, 1
      %s254 = scalar_select %p253, %s18, 1
      %s255 = smul.addr %s254, 8
      %s256 = smul.addr %s255, 4
      %s257 = scalar_lea.vmem %s0, %s256
      %p258 = pneg %p39
      %p259 = pneg %p36
      %p260 = pneg %p60
      %p261 = pneg %p57
      %p262 = scmp.lt.s32.totalorder %s18, 1
      %s263 = scalar_select %p262, %s18, 1
      %s264 = smul.addr %s263, 8
      %s265 = smul.addr %s264, 4
      %s266 = scalar_lea.vmem %s2, %s265
      %p267 = pneg %p86
      %p268 = pneg %p83
      %p269 = pneg %p107
      %p270 = pneg %p104
      %p271 = pneg %p128
      %p272 = pneg %p125
      %p273 = pneg %p149
      %p274 = pneg %p146
      %p275 = pneg %p170
      %p276 = pneg %p167
      %p277 = pneg %p196
      %p278 = pneg %p193
      %p279 = scmp.lt.s32.totalorder %s18, 1
      %s280 = scalar_select %p279, %s18, 1
      %s281 = smul.addr %s280, 8
      %s282 = smul.addr %s281, 8
      %s283 = scalar_lea.vmem %s7, %s282
      %p284 = scmp.lt.s32.totalorder %s18, 1
      %s285 = scalar_select %p284, %s18, 1
      %s286 = smul.addr %s285, 8
      %s287 = smul.addr %s286, 4
      %s288 = scalar_lea.vmem %s0, %s287
      %p289 = scmp.lt.s32.totalorder %s18, 1
      %s290 = scalar_select %p289, %s18, 1
      %s291 = smul.addr %s290, 8
      %s292 = smul.addr %s291, 4
      %s293 = scalar_lea.vmem %s2, %s292
      %p294 = scmp.lt.s32.totalorder %s18, 1
      %s295 = scalar_select %p294, %s18, 1
      %s296 = smul.addr %s295, 8
      %s297 = smul.addr %s296, 8
      %s298 = scalar_lea.vmem %s7, %s297
      %v300 = vld [vmem:[%s288] sm:$0xf]
      %v301 = vld [vmem:[%s288 + $0x4] sm:$0xf]
      %v302 = vld [vmem:[%s288 + $0x8] sm:$0xf]
      %v303 = vld [vmem:[%s288 + $0xc] sm:$0xf]
      %v304 = vld [vmem:[%s288 + $0x10] sm:$0xf]
      %v305 = vld [vmem:[%s288 + $0x14] sm:$0xf]
      %v306 = vld [vmem:[%s288 + $0x18] sm:$0xf]
      %v307 = vld [vmem:[%s288 + $0x1c] sm:$0xf]
      %v308 = vunpack.c.l.bf16 %v300
      %v309 = vunpack.c.l.bf16 %v301
      %v310 = vunpack.c.l.bf16 %v302
      %v311 = vunpack.c.l.bf16 %v303
      %v312 = vunpack.c.l.bf16 %v304
      %v313 = vunpack.c.l.bf16 %v305
      %v314 = vunpack.c.l.bf16 %v306
      %v315 = vunpack.c.l.bf16 %v307
      %v316 = vld [vmem:[%s1] sm:$0x1]
      %v317 = vlaneseq
      %v318 = vshrl.u32 %v317, 7
      %v319 = vsub.s32 0, %v318
      %v320 = vrot.slane %v316, %v319
      %v321 = vmul.f32 %v308, %v320
      %v322 = vmul.f32 %v309, %v320
      %v323 = vmul.f32 %v310, %v320
      %v324 = vmul.f32 %v311, %v320
      %v325 = vmul.f32 %v312, %v320
      %v326 = vmul.f32 %v313, %v320
      %v327 = vmul.f32 %v314, %v320
      %v328 = vmul.f32 %v315, %v320
      %v329 = vld [vmem:[%s1 + $0x1] sm:$0x1]
      %v330 = vlaneseq
      %v331 = vshrl.u32 %v330, 7
      %v332 = vsub.s32 0, %v331
      %v333 = vrot.slane %v329, %v332
      %v334 = vadd.f32 %v321, %v333
      %v335 = vadd.f32 %v322, %v333
      %v336 = vadd.f32 %v323, %v333
      %v337 = vadd.f32 %v324, %v333
      %v338 = vadd.f32 %v325, %v333
      %v339 = vadd.f32 %v326, %v333
      %v340 = vadd.f32 %v327, %v333
      %v341 = vadd.f32 %v328, %v333
      %v342 = vmax.f32 %v334, 0.0
      %v343 = vmax.f32 %v335, 0.0
      %v344 = vmax.f32 %v336, 0.0
      %v345 = vmax.f32 %v337, 0.0
      %v346 = vmax.f32 %v338, 0.0
      %v347 = vmax.f32 %v339, 0.0
      %v348 = vmax.f32 %v340, 0.0
      %v349 = vmax.f32 %v341, 0.0
      %v350 = vpack.c.bf16 %v343, %v342
      %v351 = vpack.c.bf16 %v345, %v344
      %v352 = vpack.c.bf16 %v347, %v346
      %v353 = vpack.c.bf16 %v349, %v348
      %v354 = vld [vmem:[%s3] sm:$0xf]
      %v355 = vld [vmem:[%s3 + $0x4] sm:$0xf]
      %v356 = vld [vmem:[%s3 + $0x8] sm:$0xf]
      %v357 = vld [vmem:[%s3 + $0xc] sm:$0xf]
      %v358 = vld [vmem:[%s3 + $0x10] sm:$0xf]
      %v359 = vld [vmem:[%s3 + $0x14] sm:$0xf]
      %v360 = vld [vmem:[%s3 + $0x18] sm:$0xf]
      %v361 = vld [vmem:[%s3 + $0x1c] sm:$0xf]
      %v362 = vld [vmem:[%s3 + $0x20] sm:$0xf]
      %v363 = vld [vmem:[%s3 + $0x24] sm:$0xf]
      %v364 = vld [vmem:[%s3 + $0x28] sm:$0xf]
      %v365 = vld [vmem:[%s3 + $0x2c] sm:$0xf]
      %v366 = vld [vmem:[%s3 + $0x30] sm:$0xf]
      %v367 = vld [vmem:[%s3 + $0x34] sm:$0xf]
      %v368 = vld [vmem:[%s3 + $0x38] sm:$0xf]
      %v369 = vld [vmem:[%s3 + $0x3c] sm:$0xf]
      %v386 = vunpack.c.l.b16 %v354
      %v387 = vunpack.c.l.b16 %v355
      %v388 = vunpack.c.l.b16 %v356
      %v389 = vunpack.c.l.b16 %v357
      %v390 = vunpack.c.l.b16 %v358
      %v391 = vunpack.c.l.b16 %v359
      %v392 = vunpack.c.l.b16 %v360
      %v393 = vunpack.c.l.b16 %v361
      %v394 = vunpack.c.l.b16 %v362
      %v395 = vunpack.c.l.b16 %v363
      %v396 = vunpack.c.l.b16 %v364
      %v397 = vunpack.c.l.b16 %v365
      %v398 = vunpack.c.l.b16 %v366
      %v399 = vunpack.c.l.b16 %v367
      %v400 = vunpack.c.l.b16 %v368
      %v401 = vunpack.c.l.b16 %v369
      %v402 = vpack.c.b16 %v387, %v386
      %v403 = vpack.c.b16 %v389, %v388
      %v404 = vpack.c.b16 %v391, %v390
      %v405 = vpack.c.b16 %v393, %v392
      %v406 = vpack.c.b16 %v395, %v394
      %v407 = vpack.c.b16 %v397, %v396
      %v408 = vpack.c.b16 %v399, %v398
      %v409 = vpack.c.b16 %v401, %v400
      %418 = vmatprep.subr.bf16.mxu0 0
      %419 = vmatpush1.bf16.msra.mxu0 %v409
      %420 = vmatprep.subr.bf16.mxu0 0
      %421 = vmatpush1.bf16.msra.mxu0 %v408
      %422 = vmatprep.subr.bf16.mxu0 0
      %423 = vmatpush1.bf16.msra.mxu0 %v407
      %424 = vmatprep.subr.bf16.mxu0 0
      %425 = vmatpush1.bf16.msra.mxu0 %v406
      %426 = vmatprep.subr.bf16.mxu0 0
      %427 = vmatpush1.bf16.msra.mxu0 %v405
      %428 = vmatprep.subr.bf16.mxu0 0
      %429 = vmatpush1.bf16.msra.mxu0 %v404
      %430 = vmatprep.subr.bf16.mxu0 0
      %431 = vmatpush1.bf16.msra.mxu0 %v403
      %432 = vmatprep.subr.bf16.mxu0 0
      %433 = vmatpush1.bf16.msra.mxu0 %v402
      %434 = vmatprep.subr.bf16.mxu0 0
      %435 = vmatpush2.bf16.msra.mxu0 0
      %436 = vmatprep.subr.bf16.mxu0 0
      %437 = vmatpush2.bf16.msra.mxu0 0
      %438 = vmatprep.subr.bf16.mxu0 0
      %439 = vmatpush2.bf16.msra.mxu0 0
      %440 = vmatprep.subr.bf16.mxu0 0
      %441 = vmatpush2.bf16.msra.mxu0 0
      %442 = vmatprep.subr.bf16.mxu0 0
      %443 = vmatpush2.bf16.msra.mxu0 0
      %444 = vmatprep.subr.bf16.mxu0 0
      %445 = vmatpush2.bf16.msra.mxu0 0
      %446 = vmatprep.subr.bf16.mxu0 0
      %447 = vmatpush2.bf16.msra.mxu0 0
      %448 = vmatprep.subr.bf16.mxu0 0
      %449 = vmatpush2.bf16.msra.mxu0 0
      %450 = vmatprep.mubr.bf16.mxu0 0
      %451 = vmatmul.mubr.bf16.gmra.mxu0 %v350
      %v452 = vpop.f32.mrf.mxu0
      %v453 = vadd.f32 0.0, %v452
      %v454 = vpop.f32.mrf.mxu0
      %v455 = vpop.f32.mrf.mxu0
      %v456 = vadd.f32 0.0, %v455
      %v457 = vpop.f32.mrf.mxu0
      %458 = vmatprep.mubr.bf16.mxu0 0
      %459 = vmatmul.mubr.bf16.gmra.mxu0 %v351
      %v460 = vpop.f32.mrf.mxu0
      %v461 = vadd.f32 0.0, %v460
      %v462 = vpop.f32.mrf.mxu0
      %v463 = vpop.f32.mrf.mxu0
      %v464 = vadd.f32 0.0, %v463
      %v465 = vpop.f32.mrf.mxu0
      %466 = vmatprep.mubr.bf16.mxu0 0
      %467 = vmatmul.mubr.bf16.gmra.mxu0 %v352
      %v468 = vpop.f32.mrf.mxu0
      %v469 = vadd.f32 0.0, %v468
      %v470 = vpop.f32.mrf.mxu0
      %v471 = vpop.f32.mrf.mxu0
      %v472 = vadd.f32 0.0, %v471
      %v473 = vpop.f32.mrf.mxu0
      %474 = vmatprep.mubr.bf16.mxu0 0
      %475 = vmatmul.mubr.bf16.gmra.mxu0 %v353
      %v476 = vpop.f32.mrf.mxu0
      %v477 = vadd.f32 0.0, %v476
      %v478 = vpop.f32.mrf.mxu0
      %v479 = vpop.f32.mrf.mxu0
      %v480 = vadd.f32 0.0, %v479
      %v481 = vpop.f32.mrf.mxu0
      %482 = vdwg.mxu0
      %v483 = vld [vmem:[%s293] sm:$0xf]
      %v484 = vld [vmem:[%s293 + $0x4] sm:$0xf]
      %v485 = vld [vmem:[%s293 + $0x8] sm:$0xf]
      %v486 = vld [vmem:[%s293 + $0xc] sm:$0xf]
      %v487 = vld [vmem:[%s293 + $0x10] sm:$0xf]
      %v488 = vld [vmem:[%s293 + $0x14] sm:$0xf]
      %v489 = vld [vmem:[%s293 + $0x18] sm:$0xf]
      %v490 = vld [vmem:[%s293 + $0x1c] sm:$0xf]
      %v491 = vld [vmem:[%s4] sm:$0xf]
      %v492 = vld [vmem:[%s4 + $0x4] sm:$0xf]
      %v493 = vld [vmem:[%s4 + $0x8] sm:$0xf]
      %v494 = vld [vmem:[%s4 + $0xc] sm:$0xf]
      %v495 = vld [vmem:[%s4 + $0x10] sm:$0xf]
      %v496 = vld [vmem:[%s4 + $0x14] sm:$0xf]
      %v497 = vld [vmem:[%s4 + $0x18] sm:$0xf]
      %v498 = vld [vmem:[%s4 + $0x1c] sm:$0xf]
      %v499 = vld [vmem:[%s4 + $0x20] sm:$0xf]
      %v500 = vld [vmem:[%s4 + $0x24] sm:$0xf]
      %v501 = vld [vmem:[%s4 + $0x28] sm:$0xf]
      %v502 = vld [vmem:[%s4 + $0x2c] sm:$0xf]
      %v503 = vld [vmem:[%s4 + $0x30] sm:$0xf]
      %v504 = vld [vmem:[%s4 + $0x34] sm:$0xf]
      %v505 = vld [vmem:[%s4 + $0x38] sm:$0xf]
      %v506 = vld [vmem:[%s4 + $0x3c] sm:$0xf]
      %v515 = vunpack.c.l.b16 %v483
      %v516 = vunpack.c.l.b16 %v484
      %v517 = vunpack.c.l.b16 %v485
      %v518 = vunpack.c.l.b16 %v486
      %v519 = vunpack.c.l.b16 %v487
      %v520 = vunpack.c.l.b16 %v488
      %v521 = vunpack.c.l.b16 %v489
      %v522 = vunpack.c.l.b16 %v490
      %v523 = vpack.c.b16 %v516, %v515
      %v524 = vpack.c.b16 %v518, %v517
      %v525 = vpack.c.b16 %v520, %v519
      %v526 = vpack.c.b16 %v522, %v521
      %v547 = vunpack.c.l.b16 %v491
      %v548 = vunpack.c.l.b16 %v492
      %v549 = vunpack.c.l.b16 %v493
      %v550 = vunpack.c.l.b16 %v494
      %v551 = vunpack.c.l.b16 %v495
      %v552 = vunpack.c.l.b16 %v496
      %v553 = vunpack.c.l.b16 %v497
      %v554 = vunpack.c.l.b16 %v498
      %v555 = vunpack.c.l.b16 %v499
      %v556 = vunpack.c.l.b16 %v500
      %v557 = vunpack.c.l.b16 %v501
      %v558 = vunpack.c.l.b16 %v502
      %v559 = vunpack.c.l.b16 %v503
      %v560 = vunpack.c.l.b16 %v504
      %v561 = vunpack.c.l.b16 %v505
      %v562 = vunpack.c.l.b16 %v506
      %v563 = vpack.c.b16 %v548, %v547
      %v564 = vpack.c.b16 %v550, %v549
      %v565 = vpack.c.b16 %v552, %v551
      %v566 = vpack.c.b16 %v554, %v553
      %v567 = vpack.c.b16 %v556, %v555
      %v568 = vpack.c.b16 %v558, %v557
      %v569 = vpack.c.b16 %v560, %v559
      %v570 = vpack.c.b16 %v562, %v561
      %579 = vmatprep.subr.bf16.mxu0 0
      %580 = vmatpush1.bf16.msra.mxu0 %v570
      %581 = vmatprep.subr.bf16.mxu0 0
      %582 = vmatpush1.bf16.msra.mxu0 %v569
      %583 = vmatprep.subr.bf16.mxu0 0
      %584 = vmatpush1.bf16.msra.mxu0 %v568
      %585 = vmatprep.subr.bf16.mxu0 0
      %586 = vmatpush1.bf16.msra.mxu0 %v567
      %587 = vmatprep.subr.bf16.mxu0 0
      %588 = vmatpush1.bf16.msra.mxu0 %v566
      %589 = vmatprep.subr.bf16.mxu0 0
      %590 = vmatpush1.bf16.msra.mxu0 %v565
      %591 = vmatprep.subr.bf16.mxu0 0
      %592 = vmatpush1.bf16.msra.mxu0 %v564
      %593 = vmatprep.subr.bf16.mxu0 0
      %594 = vmatpush1.bf16.msra.mxu0 %v563
      %595 = vmatprep.subr.bf16.mxu0 0
      %596 = vmatpush2.bf16.msra.mxu0 0
      %597 = vmatprep.subr.bf16.mxu0 0
      %598 = vmatpush2.bf16.msra.mxu0 0
      %599 = vmatprep.subr.bf16.mxu0 0
      %600 = vmatpush2.bf16.msra.mxu0 0
      %601 = vmatprep.subr.bf16.mxu0 0
      %602 = vmatpush2.bf16.msra.mxu0 0
      %603 = vmatprep.subr.bf16.mxu0 0
      %604 = vmatpush2.bf16.msra.mxu0 0
      %605 = vmatprep.subr.bf16.mxu0 0
      %606 = vmatpush2.bf16.msra.mxu0 0
      %607 = vmatprep.subr.bf16.mxu0 0
      %608 = vmatpush2.bf16.msra.mxu0 0
      %609 = vmatprep.subr.bf16.mxu0 0
      %610 = vmatpush2.bf16.msra.mxu0 0
      %611 = vmatprep.mubr.bf16.mxu0 0
      %612 = vmatmul.mubr.bf16.gmra.mxu0 %v523
      %v613 = vpop.f32.mrf.mxu0
      %v614 = vadd.f32 0.0, %v613
      %v615 = vpop.f32.mrf.mxu0
      %v616 = vpop.f32.mrf.mxu0
      %v617 = vadd.f32 0.0, %v616
      %v618 = vpop.f32.mrf.mxu0
      %619 = vmatprep.mubr.bf16.mxu0 0
      %620 = vmatmul.mubr.bf16.gmra.mxu0 %v524
      %v621 = vpop.f32.mrf.mxu0
      %v622 = vadd.f32 0.0, %v621
      %v623 = vpop.f32.mrf.mxu0
      %v624 = vpop.f32.mrf.mxu0
      %v625 = vadd.f32 0.0, %v624
      %v626 = vpop.f32.mrf.mxu0
      %627 = vmatprep.mubr.bf16.mxu0 0
      %628 = vmatmul.mubr.bf16.gmra.mxu0 %v525
      %v629 = vpop.f32.mrf.mxu0
      %v630 = vadd.f32 0.0, %v629
      %v631 = vpop.f32.mrf.mxu0
      %v632 = vpop.f32.mrf.mxu0
      %v633 = vadd.f32 0.0, %v632
      %v634 = vpop.f32.mrf.mxu0
      %635 = vmatprep.mubr.bf16.mxu0 0
      %636 = vmatmul.mubr.bf16.gmra.mxu0 %v526
      %v637 = vpop.f32.mrf.mxu0
      %v638 = vadd.f32 0.0, %v637
      %v639 = vpop.f32.mrf.mxu0
      %v640 = vpop.f32.mrf.mxu0
      %v641 = vadd.f32 0.0, %v640
      %v642 = vpop.f32.mrf.mxu0
      %643 = vdwg.mxu0
      %v644 = vld [vmem:[%s5] sm:$0x1]
      %v645 = vlaneseq
      %v646 = vshrl.u32 %v645, 7
      %v647 = vsub.s32 0, %v646
      %v648 = vrot.slane %v644, %v647
      %v649 = vmul.f32 %v453, %v648
      %v650 = vmul.f32 %v456, %v648
      %v651 = vmul.f32 %v461, %v648
      %v652 = vmul.f32 %v464, %v648
      %v653 = vmul.f32 %v469, %v648
      %v654 = vmul.f32 %v472, %v648
      %v655 = vmul.f32 %v477, %v648
      %v656 = vmul.f32 %v480, %v648
      %v657 = vld [vmem:[%s5 + $0x1] sm:$0x1]
      %v658 = vlaneseq
      %v659 = vshrl.u32 %v658, 7
      %v660 = vsub.s32 0, %v659
      %v661 = vrot.slane %v657, %v660
      %v662 = vadd.f32 %v649, %v661
      %v663 = vadd.f32 %v650, %v661
      %v664 = vadd.f32 %v651, %v661
      %v665 = vadd.f32 %v652, %v661
      %v666 = vadd.f32 %v653, %v661
      %v667 = vadd.f32 %v654, %v661
      %v668 = vadd.f32 %v655, %v661
      %v669 = vadd.f32 %v656, %v661
      %v670 = vmax.f32 %v662, 0.0
      %v671 = vmax.f32 %v663, 0.0
      %v672 = vmax.f32 %v664, 0.0
      %v673 = vmax.f32 %v665, 0.0
      %v674 = vmax.f32 %v666, 0.0
      %v675 = vmax.f32 %v667, 0.0
      %v676 = vmax.f32 %v668, 0.0
      %v677 = vmax.f32 %v669, 0.0
      %v678 = vld [vmem:[%s6] sm:$0x1]
      %v679 = vlaneseq
      %v680 = vshrl.u32 %v679, 7
      %v681 = vsub.s32 0, %v680
      %v682 = vrot.slane %v678, %v681
      %v683 = vmul.f32 %v614, %v682
      %v684 = vmul.f32 %v617, %v682
      %v685 = vmul.f32 %v622, %v682
      %v686 = vmul.f32 %v625, %v682
      %v687 = vmul.f32 %v630, %v682
      %v688 = vmul.f32 %v633, %v682
      %v689 = vmul.f32 %v638, %v682
      %v690 = vmul.f32 %v641, %v682
      %v691 = vld [vmem:[%s6 + $0x1] sm:$0x1]
      %v692 = vlaneseq
      %v693 = vshrl.u32 %v692, 7
      %v694 = vsub.s32 0, %v693
      %v695 = vrot.slane %v691, %v694
      %v696 = vadd.f32 %v683, %v695
      %v697 = vadd.f32 %v684, %v695
      %v698 = vadd.f32 %v685, %v695
      %v699 = vadd.f32 %v686, %v695
      %v700 = vadd.f32 %v687, %v695
      %v701 = vadd.f32 %v688, %v695
      %v702 = vadd.f32 %v689, %v695
      %v703 = vadd.f32 %v690, %v695
      %v704 = vmax.f32 %v696, 0.0
      %v705 = vmax.f32 %v697, 0.0
      %v706 = vmax.f32 %v698, 0.0
      %v707 = vmax.f32 %v699, 0.0
      %v708 = vmax.f32 %v700, 0.0
      %v709 = vmax.f32 %v701, 0.0
      %v710 = vmax.f32 %v702, 0.0
      %v711 = vmax.f32 %v703, 0.0
      %v712 = vadd.f32 %v670, %v704
      %v713 = vadd.f32 %v671, %v705
      %v714 = vadd.f32 %v672, %v706
      %v715 = vadd.f32 %v673, %v707
      %v716 = vadd.f32 %v674, %v708
      %v717 = vadd.f32 %v675, %v709
      %v718 = vadd.f32 %v676, %v710
      %v719 = vadd.f32 %v677, %v711
      %720 = vst [vmem:[%s298] sm:$0xff] %v712
      %721 = vst [vmem:[%s298 + $0x8] sm:$0xff] %v713
      %722 = vst [vmem:[%s298 + $0x10] sm:$0xff] %v714
      %723 = vst [vmem:[%s298 + $0x18] sm:$0xff] %v715
      %724 = vst [vmem:[%s298 + $0x20] sm:$0xff] %v716
      %725 = vst [vmem:[%s298 + $0x28] sm:$0xff] %v717
      %726 = vst [vmem:[%s298 + $0x30] sm:$0xff] %v718
      %727 = vst [vmem:[%s298 + $0x38] sm:$0xff] %v719
      %p728 = scmp.lt.s32.totalorder %s18, 1
      %s729 = scalar_select %p728, %s18, 1
      %s730 = smul.addr %s729, 8
      %s731 = smul.addr %s730, 8
      %s732 = scalar_lea.vmem %s7, %s731
      // Predicated region
      $region49: #{bottleneck_block_forward.7} parent=47 // pred_check
        %p733 = pneg %p193
      $region50: #{bottleneck_block_forward.7} parent=47 // pred_check_branch
        %735 = sbr.rel (%p733) target = $region52
      $region51: #{bottleneck_block_forward.7} parent=47 // pred_region
        _
      $region52: #{bottleneck_block_forward.7} parent=47 // pred_fallthru
        _
    $region48: #{bottleneck_block_forward.7} parent=5 // pred_fallthru
      _
    %p736 = scmp.le.s32.totalorder 2, %s13
    // Predicated region
    $region53: #{bottleneck_block_forward.7} parent=5 // pred_check
      %p737 = pneg %p736
    $region54: #{bottleneck_block_forward.7} parent=5 // pred_check_branch
      %739 = sbr.rel (%p737) target = $region56
    $region55: #{bottleneck_block_forward.7} parent=5 // pred_region
      %s740 = ssub.s32 %s13, 2
      // Predicated region
      $region57: #{bottleneck_block_forward.7} parent=55 // pred_check
        %p741 = pneg %p199
      $region58: #{bottleneck_block_forward.7} parent=55 // pred_check_branch
        %743 = sbr.rel (%p741) target = $region60
      $region59: #{bottleneck_block_forward.7} parent=55 // pred_region
        %p744 = scmp.lt.s32.totalorder %s19, 1
        %s745 = scalar_select %p744, %s19, 1
        %s746 = smul.addr %s745, 8
        %s747 = smul.addr %s746, 8
        %s748 = scalar_lea.vmem %s7, %s747
      $region60: #{bottleneck_block_forward.7} parent=55 // pred_fallthru
        _
    $region56: #{bottleneck_block_forward.7} parent=5 // pred_fallthru
      _
  $region6: #{bottleneck_block_forward.7} parent=0 // loop_footer
    %s17 = sadd.s32 1, %s13
  $region7: #{bottleneck_block_forward.7} parent=0 // loop_footer_branch
    %12 = sbr.rel target = $region3
  $region8: #{bottleneck_block_forward.7} parent=0 // loop_exit
    _

</llo_original>
